<compile_context>
chip_gen: v5e
topology: v5e:2x2
jax: 0.10.0
libtpu: 0.0.40
codegen_flags: <defaults>
</compile_context>

<pallas_src>
import functools

import jax
import jax.numpy as jnp
from jax.experimental import pallas as pl
from jax.experimental.pallas import tpu as pltpu


def _round_up(a, m):
    return ((a + m - 1) // m) * m


# ------------------------- conv + max-pool Pallas kernel ----------------------

def _stn_conv_kernel(x_ref, w1_ref, b1_ref, w2_ref, b2_ref, w3_ref, gmax_ref,
                     *, n_points, point_tile):
    """Channel-first conv1..conv3 on one (K, TN) point tile + running max-pool.

    conv3's bias/ReLU are deferred to the head (they commute with the max), so
    the (1024, TN) activation only sees the matmul and the max-reduce.
    """
    t = pl.program_id(1)

    @pl.when(t == 0)
    def _init():
        gmax_ref[...] = jnp.full(gmax_ref.shape, -jnp.inf, dtype=gmax_ref.dtype)

    x = x_ref[0]                                                       # (K, TN) bf16
    h = jnp.dot(w1_ref[...], x, preferred_element_type=jnp.float32)    # (64, TN)
    h = jnp.maximum(h + b1_ref[...], 0.0).astype(jnp.bfloat16)
    h = jnp.dot(w2_ref[...], h, preferred_element_type=jnp.float32)    # (128, TN)
    h = jnp.maximum(h + b2_ref[...], 0.0).astype(jnp.bfloat16)
    h = jnp.dot(w3_ref[...], h, preferred_element_type=jnp.float32)    # (1024, TN)

    def _update(vals):
        gmax_ref[0] = jnp.maximum(gmax_ref[0],
                                  jnp.max(vals, axis=1, keepdims=True))

    if n_points % point_tile != 0:
        # Padded tail exists: mask it to -inf, but only on the last tile; all
        # other tiles take the cheap unmasked reduce.  The last tile always
        # contains >= 1 valid point by construction, so gmax stays finite.
        last = pl.num_programs(1) - 1

        @pl.when(t != last)
        def _plain():
            _update(h)

        @pl.when(t == last)
        def _masked():
            col = (jax.lax.broadcasted_iota(jnp.int32, (1, point_tile), 1)
                   + t * point_tile)
            _update(jnp.where(col < n_points, h, -jnp.inf))
    else:
        _update(h)


# ------------------------------ FC head Pallas kernel -------------------------

def _stn_head_kernel(g_ref, b3_ref, wf1_ref, bf1_ref, wf2_ref, bf2_ref,
                     wf3_ref, bf3_ref, eye_ref, o_ref):
    """Batched (M = B) fc1->fc2->fc3 head; applies the deferred conv3 bias/ReLU."""
    g = jnp.maximum(g_ref[...] + b3_ref[...], 0.0).astype(jnp.bfloat16)   # (B, 1024)
    f = jnp.dot(g, wf1_ref[...], preferred_element_type=jnp.float32) + bf1_ref[...]
    f = jnp.maximum(f, 0.0).astype(jnp.bfloat16)
    f = jnp.dot(f, wf2_ref[...], preferred_element_type=jnp.float32) + bf2_ref[...]
    f = jnp.maximum(f, 0.0).astype(jnp.bfloat16)
    out = jnp.dot(f, wf3_ref[...], preferred_element_type=jnp.float32)
    o_ref[...] = out + bf3_ref[...] + eye_ref[...]


# ---------------------------------- JAX wrapper --------------------------------

def stnkd_forward(x_ncw, params, *, point_tile=1024):
    """x_ncw: (B, k, N) float32, the NCW layout PyTorch's Conv1d expects.

    point_tile: points per grid step (multiple of 128).  1024 is a good default
    on v5e / v6e / v7x: the (1024, TN) f32 conv3 activation is ~4 MB, well
    inside the 32 MB VMEM limit even on v7x's 64 MiB physical VMEM.  Don't copy
    a TN=4096 v6e config to v7x.
    """
    B, K, N = x_ncw.shape
    kk = params["wf3"].shape[1]
    assert N > 0
    assert point_tile % 128 == 0

    tn = min(point_tile, _round_up(N, 128))
    n_pad = _round_up(N, tn)
    nt = n_pad // tn

    # bf16 x streamed in native NCW layout (no transpose pass; the point axis
    # stays on the lane axis -> lane-dense x DMA).
    x = x_ncw.astype(jnp.bfloat16)
    if n_pad != N:
        x = jnp.pad(x, ((0, 0), (0, 0), (0, n_pad - N)))

    bf16 = lambda w: w.astype(jnp.bfloat16)
    # Channel-first weights / (C, 1) biases for the conv stage.
    conv_args = (x,
                 bf16(params["w1"].T), params["b1"].reshape(-1, 1),
                 bf16(params["w2"].T), params["b2"].reshape(-1, 1),
                 bf16(params["w3"].T))

    def const_spec(a):
        # Full-array block with a constant block index -> DMA'd once, stays
        # VMEM-resident while only x tiles stream.
        return pl.BlockSpec(a.shape, lambda b, t, nd=a.ndim: (0,) * nd)

    in_specs = ([pl.BlockSpec((1, K, tn), lambda b, t: (b, 0, t))]
                + [const_spec(a) for a in conv_args[1:]])
    # Output block is the running-max accumulator (constant index over t).
    out_specs = pl.BlockSpec((1, 1024, 1), lambda b, t: (b, 0, 0))

    conv_flops = 2 * B * n_pad * (K * 64 + 64 * 128 + 128 * 1024)
    conv_bytes = (sum(int(a.size) * a.dtype.itemsize for a in conv_args)
                  + B * 1024 * 4)

    gmax = pl.pallas_call(
        functools.partial(_stn_conv_kernel, n_points=N, point_tile=tn),
        out_shape=jax.ShapeDtypeStruct((B, 1024, 1), jnp.float32),
        grid_spec=pltpu.PrefetchScalarGridSpec(
            num_scalar_prefetch=0,
            grid=(B, nt),
            in_specs=in_specs,
            out_specs=out_specs),
        compiler_params=pltpu.CompilerParams(
            # TODO(synk): for B == 1 on v7x both TensorCores only engage if the
            # point axis is split across cores; batch-parallel is fine for B >= 2.
            dimension_semantics=("parallel", "arbitrary"),
            vmem_limit_bytes=32 * 1024 * 1024),
        cost_estimate=pl.CostEstimate(
            flops=conv_flops, transcendentals=0, bytes_accessed=conv_bytes),
    )(*conv_args)

    # Tiny batched FC head: one M=B matmul chain instead of B serialized M=1
    # heads inside the streaming loop; keeps wf1/wf2/wf3 out of its VMEM.
    head_args = (gmax.reshape(B, 1024), params["b3"],
                 bf16(params["wf1"]), params["bf1"],
                 bf16(params["wf2"]), params["bf2"],
                 bf16(params["wf3"]), params["bf3"],
                 params["eye"])
    head_flops = 2 * B * (1024 * 512 + 512 * 256 + 256 * kk)
    head_bytes = (sum(int(a.size) * a.dtype.itemsize for a in head_args)
                  + B * kk * 4)
    out = pl.pallas_call(
        _stn_head_kernel,
        out_shape=jax.ShapeDtypeStruct((B, kk), jnp.float32),
        cost_estimate=pl.CostEstimate(
            flops=head_flops, transcendentals=0, bytes_accessed=head_bytes),
    )(*head_args)

    k = int(round(kk ** 0.5))
    return out.reshape(B, k, k)


# ---------------------------- deterministic parameters -------------------------

def _linear_init(key, fan_in, fan_out):
    # PyTorch default: U(-1/sqrt(fan_in), 1/sqrt(fan_in)) for both w and b.
    kw, kb = jax.random.split(key)
    bound = 1.0 / float(fan_in) ** 0.5
    w = jax.random.uniform(kw, (fan_in, fan_out), jnp.float32, -bound, bound)
    b = jax.random.uniform(kb, (fan_out,), jnp.float32, -bound, bound)
    return w, b


def _bn_init(key, c):
    kg, kb, km, kv = jax.random.split(key, 4)
    gamma = jax.random.uniform(kg, (c,), jnp.float32, 0.5, 1.5)
    beta = jax.random.uniform(kb, (c,), jnp.float32, -0.1, 0.1)
    mean = jax.random.uniform(km, (c,), jnp.float32, -0.1, 0.1)
    var = jax.random.uniform(kv, (c,), jnp.float32, 0.5, 1.5)
    return gamma, beta, mean, var


def _fold_bn(w, b, bn, eps=1e-5):
    gamma, beta, mean, var = bn
    scale = gamma / jnp.sqrt(var + eps)
    w_eff = w * scale[None, :]
    b_eff = (b - mean) * scale + beta
    return w_eff, b_eff.reshape(1, -1)


def init_params(key, k):
    keys = jax.random.split(key, 11)
    w1, b1 = _linear_init(keys[0], k, 64)
    w2, b2 = _linear_init(keys[1], 64, 128)
    w3, b3 = _linear_init(keys[2], 128, 1024)
    wf1, bf1 = _linear_init(keys[3], 1024, 512)
    wf2, bf2 = _linear_init(keys[4], 512, 256)
    wf3, bf3 = _linear_init(keys[5], 256, k * k)
    bn1 = _bn_init(keys[6], 64)
    bn2 = _bn_init(keys[7], 128)
    bn3 = _bn_init(keys[8], 1024)
    bn4 = _bn_init(keys[9], 512)
    bn5 = _bn_init(keys[10], 256)

    w1, b1 = _fold_bn(w1, b1, bn1)
    w2, b2 = _fold_bn(w2, b2, bn2)
    w3, b3 = _fold_bn(w3, b3, bn3)
    wf1, bf1 = _fold_bn(wf1, bf1, bn4)
    wf2, bf2 = _fold_bn(wf2, bf2, bn5)
    bf3 = bf3.reshape(1, -1)

    eye = jnp.eye(k, dtype=jnp.float32).reshape(1, k * k)
    return dict(w1=w1, b1=b1, w2=w2, b2=b2, w3=w3, b3=b3,
                wf1=wf1, bf1=bf1, wf2=wf2, bf2=bf2, wf3=wf3, bf3=bf3,
                eye=eye)


# ------------------------------- pure-JAX reference ----------------------------

def stnkd_reference(x_ncw, params):
    """Same mixed precision as the kernels: bf16 matmul operands, f32 accum."""
    B, K, N = x_ncw.shape
    bf = lambda a: a.astype(jnp.bfloat16)
    dot = lambda a, b: jnp.dot(bf(a), bf(b), preferred_element_type=jnp.float32)
    x = jnp.transpose(x_ncw, (0, 2, 1)).reshape(B * N, K)
    h = jnp.maximum(dot(x, params["w1"]) + params["b1"], 0.0)
    h = jnp.maximum(dot(h, params["w2"]) + params["b2"], 0.0)
    h = jnp.maximum(dot(h, params["w3"]) + params["b3"], 0.0)
    g = jnp.max(h.reshape(B, N, -1), axis=1)
    f = jnp.maximum(dot(g, params["wf1"]) + params["bf1"], 0.0)
    f = jnp.maximum(dot(f, params["wf2"]) + params["bf2"], 0.0)
    out = dot(f, params["wf3"]) + params["bf3"] + params["eye"]
    k = int(round(params["eye"].shape[1] ** 0.5))
    return out.reshape(B, k, k)


# --------------------------------------- main ----------------------------------

if __name__ == "__main__":
    # small STNkd: k=16 channels, 384 points -> 2 point tiles of 256 with a
    # 128-point padded tail, exercising the running max and the tail mask.
    k, B, N = 16, 2, 384
    key = jax.random.PRNGKey(0)
    kp, kx = jax.random.split(key)
    params = init_params(kp, k)
    x = jax.random.normal(kx, (B, k, N), jnp.float32)   # PyTorch NCW layout

    out = jax.block_until_ready(stnkd_forward(x, params, point_tile=256))
    ref = stnkd_reference(x, params)

    assert out.shape == (B, k, k), out.shape
    max_err = float(jnp.max(jnp.abs(out - ref)))
    assert jnp.allclose(out, ref, rtol=1e-2, atol=1e-2), max_err
    print("KERNEL_OK")
</pallas_src>

<mosaic_0001>
module attributes {stable_mosaic.version = 11 : i64} {
  func.func @_stn_conv_kernel(%arg0: i32, %arg1: i32, %arg2: memref<1x16x256xbf16, #tpu.memory_space<vmem>>, %arg3: memref<64x16xbf16, #tpu.memory_space<vmem>>, %arg4: memref<64x1xf32, #tpu.memory_space<vmem>>, %arg5: memref<128x64xbf16, #tpu.memory_space<vmem>>, %arg6: memref<128x1xf32, #tpu.memory_space<vmem>>, %arg7: memref<1024x128xbf16, #tpu.memory_space<vmem>>, %arg8: memref<1x1024x1xf32, #tpu.memory_space<vmem>>) attributes {dimension_semantics = [#tpu.dimension_semantics<parallel>, #tpu.dimension_semantics<arbitrary>], iteration_bounds = array<i64: 2, 2>, scalar_prefetch = 0 : i64, scratch_operands = 0 : i64, tpu.core_type = #tpu.core_type<tc>, window_params = [{transform_indices = @transform_0, window_bounds = array<i64: 1, 16, 256>}, {pipeline_mode = #tpu.pipeline_mode<synchronous>, transform_indices = @transform_1, window_bounds = array<i64: 64, 16>}, {pipeline_mode = #tpu.pipeline_mode<synchronous>, transform_indices = @transform_2, window_bounds = array<i64: 64, 1>}, {pipeline_mode = #tpu.pipeline_mode<synchronous>, transform_indices = @transform_3, window_bounds = array<i64: 128, 64>}, {pipeline_mode = #tpu.pipeline_mode<synchronous>, transform_indices = @transform_4, window_bounds = array<i64: 128, 1>}, {pipeline_mode = #tpu.pipeline_mode<synchronous>, transform_indices = @transform_5, window_bounds = array<i64: 1024, 128>}, {transform_indices = @transform_6, window_bounds = array<i64: 1, 1024, 1>}]} {
    %c0_i32 = arith.constant 0 : i32
    %0 = arith.cmpi eq, %arg1, %c0_i32 : i32
    %1 = arith.extui %0 : i1 to i32
    %c0_i32_0 = arith.constant 0 : i32
    %2 = arith.cmpi ne, %1, %c0_i32_0 : i32
    scf.if %2 {
      %cst_20 = arith.constant 0xFF800000 : f32
      %29 = vector.broadcast %cst_20 : f32 to vector<1x1024x1xf32>
      %c0_21 = arith.constant 0 : index
      %c0_22 = arith.constant 0 : index
      %c0_23 = arith.constant 0 : index
      %30 = vector.load %arg8[%c0_21, %c0_22, %c0_23] : memref<1x1024x1xf32, #tpu.memory_space<vmem>>, vector<1x1024x1xf32>
      tpu.vector_store %arg8[%c0_21, %c0_22, %c0_23], %29 {strides = array<i32>} : memref<1x1024x1xf32, #tpu.memory_space<vmem>>, vector<1x1024x1xf32>,
    } else {
    }
    %c0 = arith.constant 0 : index
    %c0_1 = arith.constant 0 : index
    %c0_2 = arith.constant 0 : index
    %3 = vector.load %arg2[%c0, %c0_1, %c0_2] : memref<1x16x256xbf16, #tpu.memory_space<vmem>>, vector<1x16x256xbf16>
    %4 = vector.shape_cast %3 : vector<1x16x256xbf16> to vector<16x256xbf16>
    %c0_3 = arith.constant 0 : index
    %c0_4 = arith.constant 0 : index
    %5 = vector.load %arg3[%c0_3, %c0_4] : memref<64x16xbf16, #tpu.memory_space<vmem>>, vector<64x16xbf16>
    %cst = arith.constant dense<0.000000e+00> : vector<64x256xf32>
    %6 = tpu.matmul %5, %4, %cst {dimension_numbers = #tpu.dot_dimension_numbers<[1], [0], [0], [1], [0, 0, 1, 1], [], []>} : vector<64x16xbf16>, vector<16x256xbf16>, vector<64x256xf32> -> vector<64x256xf32>
    %c0_5 = arith.constant 0 : index
    %c0_6 = arith.constant 0 : index
    %7 = vector.load %arg4[%c0_5, %c0_6] : memref<64x1xf32, #tpu.memory_space<vmem>>, vector<64x1xf32>
    %8 = vector.broadcast %7 : vector<64x1xf32> to vector<64x256xf32>
    %9 = arith.addf %6, %8 : vector<64x256xf32>
    %cst_7 = arith.constant 0.000000e+00 : f32
    %10 = vector.broadcast %cst_7 : f32 to vector<64x256xf32>
    %11 = arith.maximumf %9, %10 : vector<64x256xf32>
    %12 = arith.truncf %11 : vector<64x256xf32> to vector<64x256xbf16>
    %c0_8 = arith.constant 0 : index
    %c0_9 = arith.constant 0 : index
    %13 = vector.load %arg5[%c0_8, %c0_9] : memref<128x64xbf16, #tpu.memory_space<vmem>>, vector<128x64xbf16>
    %cst_10 = arith.constant dense<0.000000e+00> : vector<128x256xf32>
    %14 = tpu.matmul %13, %12, %cst_10 {dimension_numbers = #tpu.dot_dimension_numbers<[1], [0], [0], [1], [0, 0, 1, 1], [], []>} : vector<128x64xbf16>, vector<64x256xbf16>, vector<128x256xf32> -> vector<128x256xf32>
    %c0_11 = arith.constant 0 : index
    %c0_12 = arith.constant 0 : index
    %15 = vector.load %arg6[%c0_11, %c0_12] : memref<128x1xf32, #tpu.memory_space<vmem>>, vector<128x1xf32>
    %16 = vector.broadcast %15 : vector<128x1xf32> to vector<128x256xf32>
    %17 = arith.addf %14, %16 : vector<128x256xf32>
    %cst_13 = arith.constant 0.000000e+00 : f32
    %18 = vector.broadcast %cst_13 : f32 to vector<128x256xf32>
    %19 = arith.maximumf %17, %18 : vector<128x256xf32>
    %20 = arith.truncf %19 : vector<128x256xf32> to vector<128x256xbf16>
    %c0_14 = arith.constant 0 : index
    %c0_15 = arith.constant 0 : index
    %21 = vector.load %arg7[%c0_14, %c0_15] : memref<1024x128xbf16, #tpu.memory_space<vmem>>, vector<1024x128xbf16>
    %cst_16 = arith.constant dense<0.000000e+00> : vector<1024x256xf32>
    %22 = tpu.matmul %21, %20, %cst_16 {dimension_numbers = #tpu.dot_dimension_numbers<[1], [0], [0], [1], [0, 0, 1, 1], [], []>} : vector<1024x128xbf16>, vector<128x256xbf16>, vector<1024x256xf32> -> vector<1024x256xf32>
    %c1_i32 = arith.constant 1 : i32
    %23 = arith.cmpi ne, %arg1, %c1_i32 : i32
    %24 = arith.extui %23 : i1 to i32
    %c0_i32_17 = arith.constant 0 : i32
    %25 = arith.cmpi ne, %24, %c0_i32_17 : i32
    scf.if %25 {
      %c0_20 = arith.constant 0 : index
      %c0_21 = arith.constant 0 : index
      %c0_22 = arith.constant 0 : index
      %29 = vector.load %arg8[%c0_20, %c0_21, %c0_22] : memref<1x1024x1xf32, #tpu.memory_space<vmem>>, vector<1x1024x1xf32>
      %30 = vector.shape_cast %29 : vector<1x1024x1xf32> to vector<1024x1xf32>
      %cst_23 = arith.constant dense<0xFF800000> : vector<1024xf32>
      %31 = vector.multi_reduction <maximumf>, %22, %cst_23 [1] : vector<1024x256xf32> to vector<1024xf32>
      %32 = vector.shape_cast %31 : vector<1024xf32> to vector<1024x1xf32>
      %33 = arith.maximumf %30, %32 : vector<1024x1xf32>
      %c0_24 = arith.constant 0 : index
      %c0_25 = arith.constant 0 : index
      %c0_26 = arith.constant 0 : index
      %34 = vector.load %arg8[%c0_24, %c0_25, %c0_26] : memref<1x1024x1xf32, #tpu.memory_space<vmem>>, vector<1x1024x1xf32>
      %35 = vector.shape_cast %34 : vector<1x1024x1xf32> to vector<1024x1xf32>
      %36 = vector.shape_cast %33 : vector<1024x1xf32> to vector<1x1024x1xf32>
      tpu.vector_store %arg8[%c0_24, %c0_25, %c0_26], %36 {strides = array<i32>} : memref<1x1024x1xf32, #tpu.memory_space<vmem>>, vector<1x1024x1xf32>,
    } else {
    }
    %c1_i32_18 = arith.constant 1 : i32
    %26 = arith.cmpi eq, %arg1, %c1_i32_18 : i32
    %27 = arith.extui %26 : i1 to i32
    %c0_i32_19 = arith.constant 0 : i32
    %28 = arith.cmpi ne, %27, %c0_i32_19 : i32
    scf.if %28 {
      %29 = tpu.iota {dimensions = array<i32: 1>} : vector<1x256xi32>
      %c256_i32 = arith.constant 256 : i32
      %30 = arith.muli %arg1, %c256_i32 : i32
      %31 = vector.broadcast %30 : i32 to vector<1x256xi32>
      %32 = arith.addi %29, %31 : vector<1x256xi32>
      %c384_i32 = arith.constant 384 : i32
      %33 = vector.broadcast %c384_i32 : i32 to vector<1x256xi32>
      %34 = arith.cmpi slt, %32, %33 : vector<1x256xi32>
      %cst_20 = arith.constant 0xFF800000 : f32
      %35 = vector.shape_cast %34 : vector<1x256xi1> to vector<1x256xi1>
      %36 = vector.broadcast %35 : vector<1x256xi1> to vector<1024x256xi1>
      %37 = vector.broadcast %cst_20 : f32 to vector<1024x256xf32>
      %38 = arith.select %36, %22, %37 : vector<1024x256xi1>, vector<1024x256xf32>
      %c0_21 = arith.constant 0 : index
      %c0_22 = arith.constant 0 : index
      %c0_23 = arith.constant 0 : index
      %39 = vector.load %arg8[%c0_21, %c0_22, %c0_23] : memref<1x1024x1xf32, #tpu.memory_space<vmem>>, vector<1x1024x1xf32>
      %40 = vector.shape_cast %39 : vector<1x1024x1xf32> to vector<1024x1xf32>
      %cst_24 = arith.constant dense<0xFF800000> : vector<1024xf32>
      %41 = vector.multi_reduction <maximumf>, %38, %cst_24 [1] : vector<1024x256xf32> to vector<1024xf32>
      %42 = vector.shape_cast %41 : vector<1024xf32> to vector<1024x1xf32>
      %43 = arith.maximumf %40, %42 : vector<1024x1xf32>
      %c0_25 = arith.constant 0 : index
      %c0_26 = arith.constant 0 : index
      %c0_27 = arith.constant 0 : index
      %44 = vector.load %arg8[%c0_25, %c0_26, %c0_27] : memref<1x1024x1xf32, #tpu.memory_space<vmem>>, vector<1x1024x1xf32>
      %45 = vector.shape_cast %44 : vector<1x1024x1xf32> to vector<1024x1xf32>
      %46 = vector.shape_cast %43 : vector<1024x1xf32> to vector<1x1024x1xf32>
      tpu.vector_store %arg8[%c0_25, %c0_26, %c0_27], %46 {strides = array<i32>} : memref<1x1024x1xf32, #tpu.memory_space<vmem>>, vector<1x1024x1xf32>,
    } else {
    }
    return
  }
  func.func @transform_0(%arg0: i32, %arg1: i32) -> (i32, i32, i32) {
    %c0_i32 = arith.constant 0 : i32
    %c0_i32_0 = arith.constant 0 : i32
    return %arg0, %c0_i32, %arg1 : i32, i32, i32
  }
  func.func @transform_1(%arg0: i32, %arg1: i32) -> (i32, i32) {
    %c0_i32 = arith.constant 0 : i32
    %c0_i32_0 = arith.constant 0 : i32
    %c0_i32_1 = arith.constant 0 : i32
    return %c0_i32, %c0_i32_0 : i32, i32
  }
  func.func @transform_2(%arg0: i32, %arg1: i32) -> (i32, i32) {
    %c0_i32 = arith.constant 0 : i32
    %c0_i32_0 = arith.constant 0 : i32
    %c0_i32_1 = arith.constant 0 : i32
    return %c0_i32, %c0_i32_0 : i32, i32
  }
  func.func @transform_3(%arg0: i32, %arg1: i32) -> (i32, i32) {
    %c0_i32 = arith.constant 0 : i32
    %c0_i32_0 = arith.constant 0 : i32
    %c0_i32_1 = arith.constant 0 : i32
    return %c0_i32, %c0_i32_0 : i32, i32
  }
  func.func @transform_4(%arg0: i32, %arg1: i32) -> (i32, i32) {
    %c0_i32 = arith.constant 0 : i32
    %c0_i32_0 = arith.constant 0 : i32
    %c0_i32_1 = arith.constant 0 : i32
    return %c0_i32, %c0_i32_0 : i32, i32
  }
  func.func @transform_5(%arg0: i32, %arg1: i32) -> (i32, i32) {
    %c0_i32 = arith.constant 0 : i32
    %c0_i32_0 = arith.constant 0 : i32
    %c0_i32_1 = arith.constant 0 : i32
    return %c0_i32, %c0_i32_0 : i32, i32
  }
  func.func @transform_6(%arg0: i32, %arg1: i32) -> (i32, i32, i32) {
    %c0_i32 = arith.constant 0 : i32
    %c0_i32_0 = arith.constant 0 : i32
    %c0_i32_1 = arith.constant 0 : i32
    return %arg0, %c0_i32, %c0_i32_0 : i32, i32, i32
  }
}

</mosaic_0001>

<llo_original>
// kernel: tpu_custom_call.1
$region0: #{tpu_custom_call.1}
  #allocation0 [shape = 'u32[]', space=smem, size = 0x4, offset = 0x4, fixed_abs, tag = 'smem constant byte address 0x4 - core index']
  #allocation1 [shape = 'u32[72,128]{1,0:T(1,128)}', space=vmem, size = 0x9000, scoped, tag = 'internal scratch']
  %s0 = inlined_call_operand.vmem [shape: bf16[2,16,512], index: 0, kind: input, shape index: {}]
  %s1 = inlined_call_operand.vmem [shape: bf16[64,16], index: 1, kind: input, shape index: {}]
  %s2 = inlined_call_operand.vmem [shape: f32[64,1], index: 2, kind: input, shape index: {}]
  %s3 = inlined_call_operand.vmem [shape: bf16[128,64], index: 3, kind: input, shape index: {}]
  %s4 = inlined_call_operand.vmem [shape: f32[128,1], index: 4, kind: input, shape index: {}]
  %s5 = inlined_call_operand.hbm [shape: bf16[1024,128], index: 5, kind: input, shape index: {}]
  %s6 = inlined_call_operand.vmem [shape: f32[2,1024,1], index: 6, kind: output, shape index: {}]
  %s7 = sld [smem:[#allocation0]]
  $region111: #{tpu_custom_call.1} parent=0
    _
  %s9 = ssub.s32 1, %s7
  %s10 = scalar_select 0, %s9, %s7
  $region1: #{tpu_custom_call.1} parent=0
    #allocation2 [shape = 'u8[16384]{0}', space=vmem, size = 0x4000, scoped, tag = 'input window, operand 0']
    #allocation3 [shape = 'u8[262144]{0}', space=vmem, size = 0x40000, scoped, tag = 'input window, operand 5, single buffered']
    #allocation4 [shape = 's32[2]{0}', space=sflag, size = 0x8, scoped, tag = 'scoped memory for tpu_custom_call.1']
    %11 = vsyncpa [#allocation4], 0
    loop: start=0, step=1, limit=6
    $region2: #{tpu_custom_call.1} parent=1 // loop_pre_header
      _
    $region3: #{tpu_custom_call.1} parent=1 // loop_header
      %s13 = sphi 0, %s17
      %p14 = scmp.ge.s32.totalorder %s13, 6
      %s20 = sphi 0, %s32
      %s21 = sphi 0, %s28
      %s22 = sphi 0, %s20
      %s23 = sphi 0, %s21
      %s24 = sphi 0, %s22
      %s25 = sphi 0, %s23
      %s37 = sphi 0, %s39
      %s40 = sphi 0, %s37
      %s41 = sphi 0, %s40
      %s57 = sphi 0, %s41
      %s61 = sphi 0, %s61
      %s63 = sphi 0, %s61
      %s64 = sphi 0, %s63
      %s78 = sphi 0, %s64
      %s82 = sphi 0, %s82
      %s84 = sphi 0, %s82
      %s85 = sphi 0, %s84
      %s99 = sphi 0, %s85
      %s103 = sphi 0, %s103
      %s105 = sphi 0, %s103
      %s106 = sphi 0, %s105
      %s120 = sphi 0, %s106
      %s124 = sphi 0, %s124
      %s126 = sphi 0, %s124
      %s127 = sphi 0, %s126
      %s141 = sphi 0, %s127
      %s145 = sphi 0, %s145
      %s147 = sphi 0, %s145
      %s148 = sphi 0, %s147
      %s162 = sphi 0, %s148
      %s168 = sphi 0, %s170
      %s171 = sphi 0, %s168
      %s172 = sphi 0, %s171
      %s188 = sphi 0, %s172
    $region4: #{tpu_custom_call.1} parent=1 // loop_header_branch
      %16 = sbr.rel (%p14) target = $region8
    $region5: #{tpu_custom_call.1} parent=1 // loop_body
      %s18 = ssub.s32 %s13, 1
      %s19 = ssub.s32 %s13, 2
      %s26 = sadd.s32 1, %s21
      %p27 = scmp.ge.s32.totalorder %s26, 2
      %s28 = scalar_select %p27, 0, %s26
      %s29 = sadd.s32 1, %s20
      %s30 = scalar_select %p27, %s29, %s20
      %p31 = scmp.ge.s32.totalorder %s30, 2
      %s32 = scalar_select %p31, 0, %s30
      %s33 = ssub.s32 %s20, %s32
      %s34 = ssub.s32 %s21, %s28
      %s35 = sor.u32 %s33, %s34
      %p36 = scmp.eq.s32.totalorder %s35, 0
      %s38 = sadd.s32 %s37, 1
      %s39 = scalar_select %p36, %s37, %s38
      %p42 = pneg %p36
      %p43 = scmp.eq.s32.totalorder %s13, 3
      %p44 = por %p42, %p43
      %p45 = scmp.ne.s32.totalorder %s37, %s40
      %p46 = scmp.eq.s32.totalorder %s13, 0
      %p47 = por %p45, %p46
      %p48 = scmp.ne.s32.totalorder %s37, %s40
      %p49 = scmp.eq.s32.totalorder %s18, 3
      %p50 = por %p48, %p49
      %p51 = scmp.ne.s32.totalorder %s40, %s41
      %p52 = scmp.eq.s32.totalorder %s18, 0
      %p53 = por %p51, %p52
      %p54 = scmp.ne.s32.totalorder %s40, %s41
      %p55 = scmp.eq.s32.totalorder %s19, 3
      %p56 = por %p54, %p55
      %p58 = scmp.ne.s32.totalorder %s41, %s57
      %p59 = scmp.eq.s32.totalorder %s19, 0
      %p60 = por %p58, %p59
      %s62 = sadd.s32 %s61, 1
      %p65 = scmp.eq.s32.totalorder %s13, 3
      %p66 = scmp.ne.s32.totalorder %s61, %s63
      %p67 = scmp.eq.s32.totalorder %s13, 0
      %p68 = por %p66, %p67
      %p69 = scmp.ne.s32.totalorder %s61, %s63
      %p70 = scmp.eq.s32.totalorder %s18, 3
      %p71 = por %p69, %p70
      %p72 = scmp.ne.s32.totalorder %s63, %s64
      %p73 = scmp.eq.s32.totalorder %s18, 0
      %p74 = por %p72, %p73
      %p75 = scmp.ne.s32.totalorder %s63, %s64
      %p76 = scmp.eq.s32.totalorder %s19, 3
      %p77 = por %p75, %p76
      %p79 = scmp.ne.s32.totalorder %s64, %s78
      %p80 = scmp.eq.s32.totalorder %s19, 0
      %p81 = por %p79, %p80
      %s83 = sadd.s32 %s82, 1
      %p86 = scmp.eq.s32.totalorder %s13, 3
      %p87 = scmp.ne.s32.totalorder %s82, %s84
      %p88 = scmp.eq.s32.totalorder %s13, 0
      %p89 = por %p87, %p88
      %p90 = scmp.ne.s32.totalorder %s82, %s84
      %p91 = scmp.eq.s32.totalorder %s18, 3
      %p92 = por %p90, %p91
      %p93 = scmp.ne.s32.totalorder %s84, %s85
      %p94 = scmp.eq.s32.totalorder %s18, 0
      %p95 = por %p93, %p94
      %p96 = scmp.ne.s32.totalorder %s84, %s85
      %p97 = scmp.eq.s32.totalorder %s19, 3
      %p98 = por %p96, %p97
      %p100 = scmp.ne.s32.totalorder %s85, %s99
      %p101 = scmp.eq.s32.totalorder %s19, 0
      %p102 = por %p100, %p101
      %s104 = sadd.s32 %s103, 1
      %p107 = scmp.eq.s32.totalorder %s13, 3
      %p108 = scmp.ne.s32.totalorder %s103, %s105
      %p109 = scmp.eq.s32.totalorder %s13, 0
      %p110 = por %p108, %p109
      %p111 = scmp.ne.s32.totalorder %s103, %s105
      %p112 = scmp.eq.s32.totalorder %s18, 3
      %p113 = por %p111, %p112
      %p114 = scmp.ne.s32.totalorder %s105, %s106
      %p115 = scmp.eq.s32.totalorder %s18, 0
      %p116 = por %p114, %p115
      %p117 = scmp.ne.s32.totalorder %s105, %s106
      %p118 = scmp.eq.s32.totalorder %s19, 3
      %p119 = por %p117, %p118
      %p121 = scmp.ne.s32.totalorder %s106, %s120
      %p122 = scmp.eq.s32.totalorder %s19, 0
      %p123 = por %p121, %p122
      %s125 = sadd.s32 %s124, 1
      %p128 = scmp.eq.s32.totalorder %s13, 3
      %p129 = scmp.ne.s32.totalorder %s124, %s126
      %p130 = scmp.eq.s32.totalorder %s13, 0
      %p131 = por %p129, %p130
      %p132 = scmp.ne.s32.totalorder %s124, %s126
      %p133 = scmp.eq.s32.totalorder %s18, 3
      %p134 = por %p132, %p133
      %p135 = scmp.ne.s32.totalorder %s126, %s127
      %p136 = scmp.eq.s32.totalorder %s18, 0
      %p137 = por %p135, %p136
      %p138 = scmp.ne.s32.totalorder %s126, %s127
      %p139 = scmp.eq.s32.totalorder %s19, 3
      %p140 = por %p138, %p139
      %p142 = scmp.ne.s32.totalorder %s127, %s141
      %p143 = scmp.eq.s32.totalorder %s19, 0
      %p144 = por %p142, %p143
      %s146 = sadd.s32 %s145, 1
      %p149 = scmp.eq.s32.totalorder %s13, 3
      %p150 = scmp.ne.s32.totalorder %s145, %s147
      %p151 = scmp.eq.s32.totalorder %s13, 0
      %p152 = por %p150, %p151
      %p153 = scmp.ne.s32.totalorder %s145, %s147
      %p154 = scmp.eq.s32.totalorder %s18, 3
      %p155 = por %p153, %p154
      %p156 = scmp.ne.s32.totalorder %s147, %s148
      %p157 = scmp.eq.s32.totalorder %s18, 0
      %p158 = por %p156, %p157
      %p159 = scmp.ne.s32.totalorder %s147, %s148
      %p160 = scmp.eq.s32.totalorder %s19, 3
      %p161 = por %p159, %p160
      %p163 = scmp.ne.s32.totalorder %s148, %s162
      %p164 = scmp.eq.s32.totalorder %s19, 0
      %p165 = por %p163, %p164
      %s166 = ssub.s32 %s20, %s32
      %p167 = scmp.eq.s32.totalorder %s166, 0
      %s169 = sadd.s32 %s168, 1
      %s170 = scalar_select %p167, %s168, %s169
      %p173 = pneg %p167
      %p174 = scmp.eq.s32.totalorder %s13, 3
      %p175 = por %p173, %p174
      %p176 = scmp.ne.s32.totalorder %s168, %s171
      %p177 = scmp.eq.s32.totalorder %s13, 0
      %p178 = por %p176, %p177
      %p179 = scmp.ne.s32.totalorder %s168, %s171
      %p180 = scmp.eq.s32.totalorder %s18, 3
      %p181 = por %p179, %p180
      %p182 = scmp.ne.s32.totalorder %s171, %s172
      %p183 = scmp.eq.s32.totalorder %s18, 0
      %p184 = por %p182, %p183
      %p185 = scmp.ne.s32.totalorder %s171, %s172
      %p186 = scmp.eq.s32.totalorder %s19, 3
      %p187 = por %p185, %p186
      %p189 = scmp.ne.s32.totalorder %s172, %s188
      %p190 = scmp.eq.s32.totalorder %s19, 0
      %p191 = por %p189, %p190
      %p192 = scmp.le.s32.totalorder 1, %s13
      %p193 = scmp.lt.s32.totalorder %s13, 5
      %p194 = pnand %p192, %p193
      %p195 = pneg %p194
      // Predicated region
      $region9: #{tpu_custom_call.1} parent=5 // pred_check
        _
      $region10: #{tpu_custom_call.1} parent=5 // pred_check_branch
        %197 = sbr.rel (%p194) target = $region12
      $region11: #{tpu_custom_call.1} parent=5 // pred_region
        %s198 = ssub.s32 %s13, 1
        // Predicated region
        $region13: #{tpu_custom_call.1} parent=11 // pred_check
          %p199 = pneg %p74
        $region14: #{tpu_custom_call.1} parent=11 // pred_check_branch
          %201 = sbr.rel (%p199) target = $region16
        $region15: #{tpu_custom_call.1} parent=11 // pred_region
          _
        $region16: #{tpu_custom_call.1} parent=11 // pred_fallthru
          _
        // Predicated region
        $region17: #{tpu_custom_call.1} parent=11 // pred_check
          %p202 = pneg %p95
        $region18: #{tpu_custom_call.1} parent=11 // pred_check_branch
          %204 = sbr.rel (%p202) target = $region20
        $region19: #{tpu_custom_call.1} parent=11 // pred_region
          _
        $region20: #{tpu_custom_call.1} parent=11 // pred_fallthru
          _
        // Predicated region
        $region21: #{tpu_custom_call.1} parent=11 // pred_check
          %p205 = pneg %p116
        $region22: #{tpu_custom_call.1} parent=11 // pred_check_branch
          %207 = sbr.rel (%p205) target = $region24
        $region23: #{tpu_custom_call.1} parent=11 // pred_region
          _
        $region24: #{tpu_custom_call.1} parent=11 // pred_fallthru
          _
        // Predicated region
        $region25: #{tpu_custom_call.1} parent=11 // pred_check
          %p208 = pneg %p137
        $region26: #{tpu_custom_call.1} parent=11 // pred_check_branch
          %210 = sbr.rel (%p208) target = $region28
        $region27: #{tpu_custom_call.1} parent=11 // pred_region
          _
        $region28: #{tpu_custom_call.1} parent=11 // pred_fallthru
          _
        // Predicated region
        $region29: #{tpu_custom_call.1} parent=11 // pred_check
          %p211 = pneg %p158
        $region30: #{tpu_custom_call.1} parent=11 // pred_check_branch
          %213 = sbr.rel (%p211) target = $region32
        $region31: #{tpu_custom_call.1} parent=11 // pred_region
          %215 = vsyncadd [#allocation4], 0
          %s216 = sshll.u32 %s5, 4
          %s217 = int_to_ptr.hbm [resolvable:$true] %s216
          %s218 = sshll.u32 [#allocation3], 4
          %s219 = int_to_ptr.vmem [resolvable:$true] %s218
          %224 = dma.hbm_to_vmem [thread:$0]  %s217, 8192, %s219, [#allocation4], 64, 64, 4
        $region32: #{tpu_custom_call.1} parent=11 // pred_fallthru
          _
      $region12: #{tpu_custom_call.1} parent=5 // pred_fallthru
        _
      %p225 = scmp.lt.s32.totalorder %s13, 4
      // Predicated region
      $region33: #{tpu_custom_call.1} parent=5 // pred_check
        %p226 = pneg %p225
      $region34: #{tpu_custom_call.1} parent=5 // pred_check_branch
        %228 = sbr.rel (%p226) target = $region36
      $region35: #{tpu_custom_call.1} parent=5 // pred_region
        // Predicated region
        $region37: #{tpu_custom_call.1} parent=35 // pred_check
          %p229 = pneg %p47
        $region38: #{tpu_custom_call.1} parent=35 // pred_check_branch
          %231 = sbr.rel (%p229) target = $region40
        $region39: #{tpu_custom_call.1} parent=35 // pred_region
          %s232 = sand.u32 %s37, 1
          %s233 = sand.u32 %s37, 1
          %s234 = smul.addr %s233, 16
          %s235 = scalar_lea.vmem [#allocation2], %s234
          %s236 = smul.u32 2, %s21
          %s237 = smul.addr %s20, 8
          %s238 = sadd.s32 %s236, %s237
          %s239 = smul.addr %s238, 4
          %s240 = scalar_lea.vmem %s0, %s239
          // Predicated region
          $region41: #{tpu_custom_call.1} parent=39 // pred_check
            _
          $region42: #{tpu_custom_call.1} parent=39 // pred_check_branch
            %242 = sbr.rel (0) target = $region44
          $region43: #{tpu_custom_call.1} parent=39 // pred_region
            // Predicated region
            $region45: #{tpu_custom_call.1} parent=43 // pred_check
              _
            $region46: #{tpu_custom_call.1} parent=43 // pred_check_branch
              %244 = sbr.rel (0) target = $region48
            $region47: #{tpu_custom_call.1} parent=43 // pred_region
              // Predicated region
              $region60: #{tpu_custom_call.1} parent=47 // pred_check
                _
              $region61: #{tpu_custom_call.1} parent=47 // pred_check_branch
                %262 = sbr.rel (0) target = $region63
              $region62: #{tpu_custom_call.1} parent=47 // pred_region
                loop: start=0, step=1, limit=1
                $region64: #{tpu_custom_call.1} parent=62 // loop_pre_header
                  _
                $region65: #{tpu_custom_call.1} parent=62 // loop_header
                  %s264 = sphi 0, %s268
                  %p265 = scmp.ge.s32.totalorder %s264, 1
                  %s269 = sphi %s240, %s240
                  %s270 = sphi %s235, %s235
                $region66: #{tpu_custom_call.1} parent=62 // loop_header_branch
                  %267 = sbr.rel (%p265) target = $region70
                $region67: #{tpu_custom_call.1} parent=62 // loop_body
                  %v271 = vld [vmem:[%s269] sm:$0xff]
                  %272 = vst [vmem:[%s270] sm:$0xff] %v271
                  %v273 = vld [vmem:[%s269 + $0x10] sm:$0xff]
                  %274 = vst [vmem:[%s270 + $0x8] sm:$0xff] %v273
                $region68: #{tpu_custom_call.1} parent=62 // loop_footer
                  %s268 = sadd.s32 1, %s264
                $region69: #{tpu_custom_call.1} parent=62 // loop_footer_branch
                  %263 = sbr.rel target = $region65
                $region70: #{tpu_custom_call.1} parent=62 // loop_exit
                  _
              $region63: #{tpu_custom_call.1} parent=47 // pred_fallthru
                _
              // Predicated region
              $region71: #{tpu_custom_call.1} parent=47 // pred_check
                _
              $region72: #{tpu_custom_call.1} parent=47 // pred_check_branch
                %276 = sbr.rel target = $region74
              $region73: #{tpu_custom_call.1} parent=47 // pred_region
                _
              $region74: #{tpu_custom_call.1} parent=47 // pred_fallthru
                _
            $region48: #{tpu_custom_call.1} parent=43 // pred_fallthru
              _
            // Predicated region
            $region49: #{tpu_custom_call.1} parent=43 // pred_check
              _
            $region50: #{tpu_custom_call.1} parent=43 // pred_check_branch
              %246 = sbr.rel target = $region52
            $region51: #{tpu_custom_call.1} parent=43 // pred_region
              %s248 = ssub.s32 256, 1
              loop: start=0, step=1, limit=1
              $region53: #{tpu_custom_call.1} parent=51 // loop_pre_header
                _
              $region54: #{tpu_custom_call.1} parent=51 // loop_header
                %s250 = sphi 0, %s254
                %p251 = scmp.ge.s32.totalorder %s250, 1
                %s255 = sphi %s240, %s240
                %s256 = sphi %s235, %s235
              $region55: #{tpu_custom_call.1} parent=51 // loop_header_branch
                %253 = sbr.rel (%p251) target = $region59
              $region56: #{tpu_custom_call.1} parent=51 // loop_body
                %v257 = vld [vmem:[%s255] sm:%s248]
                %258 = vst [vmem:[%s256] sm:%s248] %v257
                %v259 = vld [vmem:[%s255 + $0x10] sm:%s248]
                %260 = vst [vmem:[%s256 + $0x8] sm:%s248] %v259
              $region57: #{tpu_custom_call.1} parent=51 // loop_footer
                %s254 = sadd.s32 1, %s250
              $region58: #{tpu_custom_call.1} parent=51 // loop_footer_branch
                %249 = sbr.rel target = $region54
              $region59: #{tpu_custom_call.1} parent=51 // loop_exit
                _
            $region52: #{tpu_custom_call.1} parent=43 // pred_fallthru
              _
          $region44: #{tpu_custom_call.1} parent=39 // pred_fallthru
            _
          %277 = vnop
        $region40: #{tpu_custom_call.1} parent=35 // pred_fallthru
          _
      $region36: #{tpu_custom_call.1} parent=5 // pred_fallthru
        _
      %p278 = scmp.le.s32.totalorder 1, %s13
      %p279 = scmp.lt.s32.totalorder %s13, 5
      %p280 = pnand %p278, %p279
      %p281 = pneg %p280
      // Predicated region
      $region75: #{tpu_custom_call.1} parent=5 // pred_check
        _
      $region76: #{tpu_custom_call.1} parent=5 // pred_check_branch
        %283 = sbr.rel (%p280) target = $region78
      $region77: #{tpu_custom_call.1} parent=5 // pred_region
        %s284 = ssub.s32 %s13, 1
        %s285 = sand.u32 %s40, 1
        %s286 = sand.u32 %s40, 1
        %s287 = smul.addr %s286, 16
        %s288 = scalar_lea.vmem [#allocation2], %s287
        // Predicated region
        $region79: #{tpu_custom_call.1} parent=77 // pred_check
          %p289 = pneg %p53
        $region80: #{tpu_custom_call.1} parent=77 // pred_check_branch
          %291 = sbr.rel (%p289) target = $region82
        $region81: #{tpu_custom_call.1} parent=77 // pred_region
          _
        $region82: #{tpu_custom_call.1} parent=77 // pred_fallthru
          _
        // Predicated region
        $region83: #{tpu_custom_call.1} parent=77 // pred_check
          %p292 = pneg %p158
        $region84: #{tpu_custom_call.1} parent=77 // pred_check_branch
          %294 = sbr.rel (%p292) target = $region86
        $region85: #{tpu_custom_call.1} parent=77 // pred_region
          %296 = dma.done [#allocation4], 8192
        $region86: #{tpu_custom_call.1} parent=77 // pred_fallthru
          _
        %s297 = sand.u32 %s40, 1
        %s298 = sand.u32 %s40, 1
        %s299 = smul.addr %s298, 16
        %s300 = scalar_lea.vmem [#allocation2], %s299
        %p301 = pneg %p53
        %p302 = pneg %p50
        %p303 = pneg %p74
        %p304 = pneg %p71
        %p305 = pneg %p95
        %p306 = pneg %p92
        %p307 = pneg %p116
        %p308 = pneg %p113
        %p309 = pneg %p137
        %p310 = pneg %p134
        %p311 = pneg %p158
        %p312 = pneg %p155
        %p313 = pneg %p184
        %p314 = pneg %p181
        %p315 = scmp.lt.s32.totalorder %s22, 1
        %s316 = scalar_select %p315, %s22, 1
        %s317 = smul.addr %s316, 128
        %s318 = smul.addr %s317, 8
        %s319 = scalar_lea.vmem %s6, %s318
        %s320 = smul.u32 2, %s23
        %p321 = scmp.lt.s32.totalorder %s22, 1
        %s322 = scalar_select %p321, %s22, 1
        %s323 = smul.addr %s322, 128
        %s324 = smul.addr %s323, 8
        %s325 = scalar_lea.vmem %s6, %s324
        %p327 = scmp.eq.s32.totalorder %s23, 0
        // Predicated region
        $region87: #{tpu_custom_call.1} parent=77 // pred_check
          %p328 = pneg %p327
        $region88: #{tpu_custom_call.1} parent=77 // pred_check_branch
          %330 = sbr.rel (%p328) target = $region90
        $region89: #{tpu_custom_call.1} parent=77 // pred_region
          %vm331 = vcmask 7168
          %332 = vst.msk [vmem:[%s325] sm:$0xff] %vm331, -inf
          %333 = vst.msk [vmem:[%s325 + $0x8] sm:$0xff] %vm331, -inf
          %334 = vst.msk [vmem:[%s325 + $0x10] sm:$0xff] %vm331, -inf
          %335 = vst.msk [vmem:[%s325 + $0x18] sm:$0xff] %vm331, -inf
          %336 = vst.msk [vmem:[%s325 + $0x20] sm:$0xff] %vm331, -inf
          %337 = vst.msk [vmem:[%s325 + $0x28] sm:$0xff] %vm331, -inf
          %338 = vst.msk [vmem:[%s325 + $0x30] sm:$0xff] %vm331, -inf
          %339 = vst.msk [vmem:[%s325 + $0x38] sm:$0xff] %vm331, -inf
          %340 = vst.msk [vmem:[%s325 + $0x40] sm:$0xff] %vm331, -inf
          %341 = vst.msk [vmem:[%s325 + $0x48] sm:$0xff] %vm331, -inf
          %342 = vst.msk [vmem:[%s325 + $0x50] sm:$0xff] %vm331, -inf
          %343 = vst.msk [vmem:[%s325 + $0x58] sm:$0xff] %vm331, -inf
          %344 = vst.msk [vmem:[%s325 + $0x60] sm:$0xff] %vm331, -inf
          %345 = vst.msk [vmem:[%s325 + $0x68] sm:$0xff] %vm331, -inf
          %346 = vst.msk [vmem:[%s325 + $0x70] sm:$0xff] %vm331, -inf
          %347 = vst.msk [vmem:[%s325 + $0x78] sm:$0xff] %vm331, -inf
          %348 = vst.msk [vmem:[%s325 + $0x80] sm:$0xff] %vm331, -inf
          %349 = vst.msk [vmem:[%s325 + $0x88] sm:$0xff] %vm331, -inf
          %350 = vst.msk [vmem:[%s325 + $0x90] sm:$0xff] %vm331, -inf
          %351 = vst.msk [vmem:[%s325 + $0x98] sm:$0xff] %vm331, -inf
          %352 = vst.msk [vmem:[%s325 + $0xa0] sm:$0xff] %vm331, -inf
          %353 = vst.msk [vmem:[%s325 + $0xa8] sm:$0xff] %vm331, -inf
          %354 = vst.msk [vmem:[%s325 + $0xb0] sm:$0xff] %vm331, -inf
          %355 = vst.msk [vmem:[%s325 + $0xb8] sm:$0xff] %vm331, -inf
          %356 = vst.msk [vmem:[%s325 + $0xc0] sm:$0xff] %vm331, -inf
          %357 = vst.msk [vmem:[%s325 + $0xc8] sm:$0xff] %vm331, -inf
          %358 = vst.msk [vmem:[%s325 + $0xd0] sm:$0xff] %vm331, -inf
          %359 = vst.msk [vmem:[%s325 + $0xd8] sm:$0xff] %vm331, -inf
          %360 = vst.msk [vmem:[%s325 + $0xe0] sm:$0xff] %vm331, -inf
          %361 = vst.msk [vmem:[%s325 + $0xe8] sm:$0xff] %vm331, -inf
          %362 = vst.msk [vmem:[%s325 + $0xf0] sm:$0xff] %vm331, -inf
          %363 = vst.msk [vmem:[%s325 + $0xf8] sm:$0xff] %vm331, -inf
          %364 = vst.msk [vmem:[%s325 + $0x100] sm:$0xff] %vm331, -inf
          %365 = vst.msk [vmem:[%s325 + $0x108] sm:$0xff] %vm331, -inf
          %366 = vst.msk [vmem:[%s325 + $0x110] sm:$0xff] %vm331, -inf
          %367 = vst.msk [vmem:[%s325 + $0x118] sm:$0xff] %vm331, -inf
          %368 = vst.msk [vmem:[%s325 + $0x120] sm:$0xff] %vm331, -inf
          %369 = vst.msk [vmem:[%s325 + $0x128] sm:$0xff] %vm331, -inf
          %370 = vst.msk [vmem:[%s325 + $0x130] sm:$0xff] %vm331, -inf
          %371 = vst.msk [vmem:[%s325 + $0x138] sm:$0xff] %vm331, -inf
          %372 = vst.msk [vmem:[%s325 + $0x140] sm:$0xff] %vm331, -inf
          %373 = vst.msk [vmem:[%s325 + $0x148] sm:$0xff] %vm331, -inf
          %374 = vst.msk [vmem:[%s325 + $0x150] sm:$0xff] %vm331, -inf
          %375 = vst.msk [vmem:[%s325 + $0x158] sm:$0xff] %vm331, -inf
          %376 = vst.msk [vmem:[%s325 + $0x160] sm:$0xff] %vm331, -inf
          %377 = vst.msk [vmem:[%s325 + $0x168] sm:$0xff] %vm331, -inf
          %378 = vst.msk [vmem:[%s325 + $0x170] sm:$0xff] %vm331, -inf
          %379 = vst.msk [vmem:[%s325 + $0x178] sm:$0xff] %vm331, -inf
          %380 = vst.msk [vmem:[%s325 + $0x180] sm:$0xff] %vm331, -inf
          %381 = vst.msk [vmem:[%s325 + $0x188] sm:$0xff] %vm331, -inf
          %382 = vst.msk [vmem:[%s325 + $0x190] sm:$0xff] %vm331, -inf
          %383 = vst.msk [vmem:[%s325 + $0x198] sm:$0xff] %vm331, -inf
          %384 = vst.msk [vmem:[%s325 + $0x1a0] sm:$0xff] %vm331, -inf
          %385 = vst.msk [vmem:[%s325 + $0x1a8] sm:$0xff] %vm331, -inf
          %386 = vst.msk [vmem:[%s325 + $0x1b0] sm:$0xff] %vm331, -inf
          %387 = vst.msk [vmem:[%s325 + $0x1b8] sm:$0xff] %vm331, -inf
          %388 = vst.msk [vmem:[%s325 + $0x1c0] sm:$0xff] %vm331, -inf
          %389 = vst.msk [vmem:[%s325 + $0x1c8] sm:$0xff] %vm331, -inf
          %390 = vst.msk [vmem:[%s325 + $0x1d0] sm:$0xff] %vm331, -inf
          %391 = vst.msk [vmem:[%s325 + $0x1d8] sm:$0xff] %vm331, -inf
          %392 = vst.msk [vmem:[%s325 + $0x1e0] sm:$0xff] %vm331, -inf
          %393 = vst.msk [vmem:[%s325 + $0x1e8] sm:$0xff] %vm331, -inf
          %394 = vst.msk [vmem:[%s325 + $0x1f0] sm:$0xff] %vm331, -inf
          %395 = vst.msk [vmem:[%s325 + $0x1f8] sm:$0xff] %vm331, -inf
          %396 = vst.msk [vmem:[%s325 + $0x200] sm:$0xff] %vm331, -inf
          %397 = vst.msk [vmem:[%s325 + $0x208] sm:$0xff] %vm331, -inf
          %398 = vst.msk [vmem:[%s325 + $0x210] sm:$0xff] %vm331, -inf
          %399 = vst.msk [vmem:[%s325 + $0x218] sm:$0xff] %vm331, -inf
          %400 = vst.msk [vmem:[%s325 + $0x220] sm:$0xff] %vm331, -inf
          %401 = vst.msk [vmem:[%s325 + $0x228] sm:$0xff] %vm331, -inf
          %402 = vst.msk [vmem:[%s325 + $0x230] sm:$0xff] %vm331, -inf
          %403 = vst.msk [vmem:[%s325 + $0x238] sm:$0xff] %vm331, -inf
          %404 = vst.msk [vmem:[%s325 + $0x240] sm:$0xff] %vm331, -inf
          %405 = vst.msk [vmem:[%s325 + $0x248] sm:$0xff] %vm331, -inf
          %406 = vst.msk [vmem:[%s325 + $0x250] sm:$0xff] %vm331, -inf
          %407 = vst.msk [vmem:[%s325 + $0x258] sm:$0xff] %vm331, -inf
          %408 = vst.msk [vmem:[%s325 + $0x260] sm:$0xff] %vm331, -inf
          %409 = vst.msk [vmem:[%s325 + $0x268] sm:$0xff] %vm331, -inf
          %410 = vst.msk [vmem:[%s325 + $0x270] sm:$0xff] %vm331, -inf
          %411 = vst.msk [vmem:[%s325 + $0x278] sm:$0xff] %vm331, -inf
          %412 = vst.msk [vmem:[%s325 + $0x280] sm:$0xff] %vm331, -inf
          %413 = vst.msk [vmem:[%s325 + $0x288] sm:$0xff] %vm331, -inf
          %414 = vst.msk [vmem:[%s325 + $0x290] sm:$0xff] %vm331, -inf
          %415 = vst.msk [vmem:[%s325 + $0x298] sm:$0xff] %vm331, -inf
          %416 = vst.msk [vmem:[%s325 + $0x2a0] sm:$0xff] %vm331, -inf
          %417 = vst.msk [vmem:[%s325 + $0x2a8] sm:$0xff] %vm331, -inf
          %418 = vst.msk [vmem:[%s325 + $0x2b0] sm:$0xff] %vm331, -inf
          %419 = vst.msk [vmem:[%s325 + $0x2b8] sm:$0xff] %vm331, -inf
          %420 = vst.msk [vmem:[%s325 + $0x2c0] sm:$0xff] %vm331, -inf
          %421 = vst.msk [vmem:[%s325 + $0x2c8] sm:$0xff] %vm331, -inf
          %422 = vst.msk [vmem:[%s325 + $0x2d0] sm:$0xff] %vm331, -inf
          %423 = vst.msk [vmem:[%s325 + $0x2d8] sm:$0xff] %vm331, -inf
          %424 = vst.msk [vmem:[%s325 + $0x2e0] sm:$0xff] %vm331, -inf
          %425 = vst.msk [vmem:[%s325 + $0x2e8] sm:$0xff] %vm331, -inf
          %426 = vst.msk [vmem:[%s325 + $0x2f0] sm:$0xff] %vm331, -inf
          %427 = vst.msk [vmem:[%s325 + $0x2f8] sm:$0xff] %vm331, -inf
          %428 = vst.msk [vmem:[%s325 + $0x300] sm:$0xff] %vm331, -inf
          %429 = vst.msk [vmem:[%s325 + $0x308] sm:$0xff] %vm331, -inf
          %430 = vst.msk [vmem:[%s325 + $0x310] sm:$0xff] %vm331, -inf
          %431 = vst.msk [vmem:[%s325 + $0x318] sm:$0xff] %vm331, -inf
          %432 = vst.msk [vmem:[%s325 + $0x320] sm:$0xff] %vm331, -inf
          %433 = vst.msk [vmem:[%s325 + $0x328] sm:$0xff] %vm331, -inf
          %434 = vst.msk [vmem:[%s325 + $0x330] sm:$0xff] %vm331, -inf
          %435 = vst.msk [vmem:[%s325 + $0x338] sm:$0xff] %vm331, -inf
          %436 = vst.msk [vmem:[%s325 + $0x340] sm:$0xff] %vm331, -inf
          %437 = vst.msk [vmem:[%s325 + $0x348] sm:$0xff] %vm331, -inf
          %438 = vst.msk [vmem:[%s325 + $0x350] sm:$0xff] %vm331, -inf
          %439 = vst.msk [vmem:[%s325 + $0x358] sm:$0xff] %vm331, -inf
          %440 = vst.msk [vmem:[%s325 + $0x360] sm:$0xff] %vm331, -inf
          %441 = vst.msk [vmem:[%s325 + $0x368] sm:$0xff] %vm331, -inf
          %442 = vst.msk [vmem:[%s325 + $0x370] sm:$0xff] %vm331, -inf
          %443 = vst.msk [vmem:[%s325 + $0x378] sm:$0xff] %vm331, -inf
          %444 = vst.msk [vmem:[%s325 + $0x380] sm:$0xff] %vm331, -inf
          %445 = vst.msk [vmem:[%s325 + $0x388] sm:$0xff] %vm331, -inf
          %446 = vst.msk [vmem:[%s325 + $0x390] sm:$0xff] %vm331, -inf
          %447 = vst.msk [vmem:[%s325 + $0x398] sm:$0xff] %vm331, -inf
          %448 = vst.msk [vmem:[%s325 + $0x3a0] sm:$0xff] %vm331, -inf
          %449 = vst.msk [vmem:[%s325 + $0x3a8] sm:$0xff] %vm331, -inf
          %450 = vst.msk [vmem:[%s325 + $0x3b0] sm:$0xff] %vm331, -inf
          %451 = vst.msk [vmem:[%s325 + $0x3b8] sm:$0xff] %vm331, -inf
          %452 = vst.msk [vmem:[%s325 + $0x3c0] sm:$0xff] %vm331, -inf
          %453 = vst.msk [vmem:[%s325 + $0x3c8] sm:$0xff] %vm331, -inf
          %454 = vst.msk [vmem:[%s325 + $0x3d0] sm:$0xff] %vm331, -inf
          %455 = vst.msk [vmem:[%s325 + $0x3d8] sm:$0xff] %vm331, -inf
          %456 = vst.msk [vmem:[%s325 + $0x3e0] sm:$0xff] %vm331, -inf
          %457 = vst.msk [vmem:[%s325 + $0x3e8] sm:$0xff] %vm331, -inf
          %458 = vst.msk [vmem:[%s325 + $0x3f0] sm:$0xff] %vm331, -inf
          %459 = vst.msk [vmem:[%s325 + $0x3f8] sm:$0xff] %vm331, -inf
        $region90: #{tpu_custom_call.1} parent=77 // pred_fallthru
          _
        %v460 = vld [vmem:[%s288] sm:$0xff]
        %v461 = vld [vmem:[%s288 + $0x8] sm:$0xff]
        %v462 = vld [vmem:[%s1] sm:$0xf]
        %v463 = vld [vmem:[%s1 + $0x4] sm:$0xf]
        %v464 = vld [vmem:[%s1 + $0x8] sm:$0xf]
        %v465 = vld [vmem:[%s1 + $0xc] sm:$0xf]
        %v466 = vld [vmem:[%s1 + $0x10] sm:$0xf]
        %v467 = vld [vmem:[%s1 + $0x14] sm:$0xf]
        %v468 = vld [vmem:[%s1 + $0x18] sm:$0xf]
        %v469 = vld [vmem:[%s1 + $0x1c] sm:$0xf]
        %v470 = vld [vmem:[%s2] sm:$0xff]
        %v471 = vld [vmem:[%s2 + $0x8] sm:$0xff]
        %v472 = vld [vmem:[%s2 + $0x10] sm:$0xff]
        %v473 = vld [vmem:[%s2 + $0x18] sm:$0xff]
        %v474 = vld [vmem:[%s2 + $0x20] sm:$0xff]
        %v475 = vld [vmem:[%s2 + $0x28] sm:$0xff]
        %v476 = vld [vmem:[%s2 + $0x30] sm:$0xff]
        %v477 = vld [vmem:[%s2 + $0x38] sm:$0xff]
        %479 = vset.pattern.permute.xlu0 0
        %480 = vperm.xlu0 %479, %v470
        %v481 = vpop.permute.xlu0 %480
        %484 = vset.pattern.permute.xlu0 0
        %485 = vperm.xlu0 %484, %v471
        %v486 = vpop.permute.xlu0 %485
        %489 = vset.pattern.permute.xlu0 0
        %490 = vperm.xlu0 %489, %v472
        %v491 = vpop.permute.xlu0 %490
        %494 = vset.pattern.permute.xlu0 0
        %495 = vperm.xlu0 %494, %v473
        %v496 = vpop.permute.xlu0 %495
        %499 = vset.pattern.permute.xlu0 0
        %500 = vperm.xlu0 %499, %v474
        %v501 = vpop.permute.xlu0 %500
        %504 = vset.pattern.permute.xlu0 0
        %505 = vperm.xlu0 %504, %v475
        %v506 = vpop.permute.xlu0 %505
        %509 = vset.pattern.permute.xlu0 0
        %510 = vperm.xlu0 %509, %v476
        %v511 = vpop.permute.xlu0 %510
        %514 = vset.pattern.permute.xlu0 0
        %515 = vperm.xlu0 %514, %v477
        %v516 = vpop.permute.xlu0 %515
        %v526 = vunpack.c.l.b16 %v462
        %v527 = vunpack.c.l.b16 %v463
        %v528 = vunpack.c.l.b16 %v464
        %v529 = vunpack.c.l.b16 %v465
        %v530 = vunpack.c.l.b16 %v466
        %v531 = vunpack.c.l.b16 %v467
        %v532 = vunpack.c.l.b16 %v468
        %v533 = vunpack.c.l.b16 %v469
        %v534 = vpack.c.b16 %v527, %v526
        %v535 = vpack.c.b16 %v529, %v528
        %v536 = vpack.c.b16 %v531, %v530
        %v537 = vpack.c.b16 %v533, %v532
        %v540 = vunpack.c.l.b16 %v460
        %v541 = vunpack.c.h.b16 %v460
        %v542 = vunpack.c.l.b16 %v461
        %v543 = vunpack.c.h.b16 %v461
        %v544 = vpack.c.b16 %v542, %v540
        %v545 = vpack.c.b16 %v543, %v541
        %vm548 = vcmask 130048
        %v550 = vsel %vm548, %v534, 0
        %v553 = vsel %vm548, %v535, 0
        %v556 = vsel %vm548, %v536, 0
        %v559 = vsel %vm548, %v537, 0
        %561 = vmatpush.bf16.msra.mxu0 0
        %562 = vmatpush.bf16.msra.mxu0 0
        %563 = vmatpush.bf16.msra.mxu0 0
        %564 = vmatpush.bf16.msra.mxu0 0
        %565 = vmatpush.bf16.msra.mxu0 0
        %566 = vmatpush.bf16.msra.mxu0 0
        %567 = vmatpush.bf16.msra.mxu0 0
        %568 = vmatpush.bf16.msra.mxu0 %v544
        %569 = vmatmul.bf16.gmra.mxu0 %v550
        %v570 = vpop.f32.mrf.mxu0
        %v571 = vadd.f32 %v481, %v570
        %v572 = vpop.f32.mrf.mxu0
        %v573 = vadd.f32 %v486, %v572
        %574 = vmatmul.bf16.gmra.mxu0 %v553
        %v575 = vpop.f32.mrf.mxu0
        %v576 = vadd.f32 %v491, %v575
        %v577 = vpop.f32.mrf.mxu0
        %v578 = vadd.f32 %v496, %v577
        %579 = vmatmul.bf16.gmra.mxu0 %v556
        %v580 = vpop.f32.mrf.mxu0
        %v581 = vadd.f32 %v501, %v580
        %v582 = vpop.f32.mrf.mxu0
        %v583 = vadd.f32 %v506, %v582
        %584 = vmatmul.bf16.gmra.mxu0 %v559
        %v585 = vpop.f32.mrf.mxu0
        %v586 = vadd.f32 %v511, %v585
        %v587 = vpop.f32.mrf.mxu0
        %v588 = vadd.f32 %v516, %v587
        %589 = vdwg.mxu0
        %590 = vmatpush.bf16.msra.mxu0 0
        %591 = vmatpush.bf16.msra.mxu0 0
        %592 = vmatpush.bf16.msra.mxu0 0
        %593 = vmatpush.bf16.msra.mxu0 0
        %594 = vmatpush.bf16.msra.mxu0 0
        %595 = vmatpush.bf16.msra.mxu0 0
        %596 = vmatpush.bf16.msra.mxu0 0
        %597 = vmatpush.bf16.msra.mxu0 %v545
        %598 = vmatmul.bf16.gmra.mxu0 %v550
        %v599 = vpop.f32.mrf.mxu0
        %v600 = vadd.f32 %v481, %v599
        %v601 = vpop.f32.mrf.mxu0
        %v602 = vadd.f32 %v486, %v601
        %603 = vmatmul.bf16.gmra.mxu0 %v553
        %v604 = vpop.f32.mrf.mxu0
        %v605 = vadd.f32 %v491, %v604
        %v606 = vpop.f32.mrf.mxu0
        %v607 = vadd.f32 %v496, %v606
        %608 = vmatmul.bf16.gmra.mxu0 %v556
        %v609 = vpop.f32.mrf.mxu0
        %v610 = vadd.f32 %v501, %v609
        %v611 = vpop.f32.mrf.mxu0
        %v612 = vadd.f32 %v506, %v611
        %613 = vmatmul.bf16.gmra.mxu0 %v559
        %v614 = vpop.f32.mrf.mxu0
        %v615 = vadd.f32 %v511, %v614
        %v616 = vpop.f32.mrf.mxu0
        %v617 = vadd.f32 %v516, %v616
        %618 = vdwg.mxu0
        %v619 = vmax.f32 %v571, 0.0
        %v620 = vmax.f32 %v600, 0.0
        %v621 = vmax.f32 %v573, 0.0
        %v622 = vmax.f32 %v602, 0.0
        %v623 = vmax.f32 %v576, 0.0
        %v624 = vmax.f32 %v605, 0.0
        %v625 = vmax.f32 %v578, 0.0
        %v626 = vmax.f32 %v607, 0.0
        %v627 = vmax.f32 %v581, 0.0
        %v628 = vmax.f32 %v610, 0.0
        %v629 = vmax.f32 %v583, 0.0
        %v630 = vmax.f32 %v612, 0.0
        %v631 = vmax.f32 %v586, 0.0
        %v632 = vmax.f32 %v615, 0.0
        %v633 = vmax.f32 %v588, 0.0
        %v634 = vmax.f32 %v617, 0.0
        %v635 = vpack.c.bf16 %v621, %v619
        %v636 = vpack.c.bf16 %v622, %v620
        %v637 = vpack.c.bf16 %v625, %v623
        %v638 = vpack.c.bf16 %v626, %v624
        %v639 = vpack.c.bf16 %v629, %v627
        %v640 = vpack.c.bf16 %v630, %v628
        %v641 = vpack.c.bf16 %v633, %v631
        %v642 = vpack.c.bf16 %v634, %v632
        %v643 = vld [vmem:[%s3] sm:$0xf]
        %v644 = vld [vmem:[%s3 + $0x4] sm:$0xf]
        %v645 = vld [vmem:[%s3 + $0x8] sm:$0xf]
        %v646 = vld [vmem:[%s3 + $0xc] sm:$0xf]
        %v647 = vld [vmem:[%s3 + $0x10] sm:$0xf]
        %v648 = vld [vmem:[%s3 + $0x14] sm:$0xf]
        %v649 = vld [vmem:[%s3 + $0x18] sm:$0xf]
        %v650 = vld [vmem:[%s3 + $0x1c] sm:$0xf]
        %v651 = vld [vmem:[%s3 + $0x20] sm:$0xf]
        %v652 = vld [vmem:[%s3 + $0x24] sm:$0xf]
        %v653 = vld [vmem:[%s3 + $0x28] sm:$0xf]
        %v654 = vld [vmem:[%s3 + $0x2c] sm:$0xf]
        %v655 = vld [vmem:[%s3 + $0x30] sm:$0xf]
        %v656 = vld [vmem:[%s3 + $0x34] sm:$0xf]
        %v657 = vld [vmem:[%s3 + $0x38] sm:$0xf]
        %v658 = vld [vmem:[%s3 + $0x3c] sm:$0xf]
        %v659 = vld [vmem:[%s4] sm:$0xff]
        %v660 = vld [vmem:[%s4 + $0x8] sm:$0xff]
        %v661 = vld [vmem:[%s4 + $0x10] sm:$0xff]
        %v662 = vld [vmem:[%s4 + $0x18] sm:$0xff]
        %v663 = vld [vmem:[%s4 + $0x20] sm:$0xff]
        %v664 = vld [vmem:[%s4 + $0x28] sm:$0xff]
        %v665 = vld [vmem:[%s4 + $0x30] sm:$0xff]
        %v666 = vld [vmem:[%s4 + $0x38] sm:$0xff]
        %v667 = vld [vmem:[%s4 + $0x40] sm:$0xff]
        %v668 = vld [vmem:[%s4 + $0x48] sm:$0xff]
        %v669 = vld [vmem:[%s4 + $0x50] sm:$0xff]
        %v670 = vld [vmem:[%s4 + $0x58] sm:$0xff]
        %v671 = vld [vmem:[%s4 + $0x60] sm:$0xff]
        %v672 = vld [vmem:[%s4 + $0x68] sm:$0xff]
        %v673 = vld [vmem:[%s4 + $0x70] sm:$0xff]
        %v674 = vld [vmem:[%s4 + $0x78] sm:$0xff]
        %676 = vset.pattern.permute.xlu0 0
        %677 = vperm.xlu0 %676, %v659
        %v678 = vpop.permute.xlu0 %677
        %681 = vset.pattern.permute.xlu0 0
        %682 = vperm.xlu0 %681, %v660
        %v683 = vpop.permute.xlu0 %682
        %686 = vset.pattern.permute.xlu0 0
        %687 = vperm.xlu0 %686, %v661
        %v688 = vpop.permute.xlu0 %687
        %691 = vset.pattern.permute.xlu0 0
        %692 = vperm.xlu0 %691, %v662
        %v693 = vpop.permute.xlu0 %692
        %696 = vset.pattern.permute.xlu0 0
        %697 = vperm.xlu0 %696, %v663
        %v698 = vpop.permute.xlu0 %697
        %701 = vset.pattern.permute.xlu0 0
        %702 = vperm.xlu0 %701, %v664
        %v703 = vpop.permute.xlu0 %702
        %706 = vset.pattern.permute.xlu0 0
        %707 = vperm.xlu0 %706, %v665
        %v708 = vpop.permute.xlu0 %707
        %711 = vset.pattern.permute.xlu0 0
        %712 = vperm.xlu0 %711, %v666
        %v713 = vpop.permute.xlu0 %712
        %716 = vset.pattern.permute.xlu0 0
        %717 = vperm.xlu0 %716, %v667
        %v718 = vpop.permute.xlu0 %717
        %721 = vset.pattern.permute.xlu0 0
        %722 = vperm.xlu0 %721, %v668
        %v723 = vpop.permute.xlu0 %722
        %726 = vset.pattern.permute.xlu0 0
        %727 = vperm.xlu0 %726, %v669
        %v728 = vpop.permute.xlu0 %727
        %731 = vset.pattern.permute.xlu0 0
        %732 = vperm.xlu0 %731, %v670
        %v733 = vpop.permute.xlu0 %732
        %736 = vset.pattern.permute.xlu0 0
        %737 = vperm.xlu0 %736, %v671
        %v738 = vpop.permute.xlu0 %737
        %741 = vset.pattern.permute.xlu0 0
        %742 = vperm.xlu0 %741, %v672
        %v743 = vpop.permute.xlu0 %742
        %746 = vset.pattern.permute.xlu0 0
        %747 = vperm.xlu0 %746, %v673
        %v748 = vpop.permute.xlu0 %747
        %751 = vset.pattern.permute.xlu0 0
        %752 = vperm.xlu0 %751, %v674
        %v753 = vpop.permute.xlu0 %752
        %v771 = vunpack.c.l.b16 %v643
        %v772 = vunpack.c.l.b16 %v644
        %v773 = vunpack.c.l.b16 %v645
        %v774 = vunpack.c.l.b16 %v646
        %v775 = vunpack.c.l.b16 %v647
        %v776 = vunpack.c.l.b16 %v648
        %v777 = vunpack.c.l.b16 %v649
        %v778 = vunpack.c.l.b16 %v650
        %v779 = vunpack.c.l.b16 %v651
        %v780 = vunpack.c.l.b16 %v652
        %v781 = vunpack.c.l.b16 %v653
        %v782 = vunpack.c.l.b16 %v654
        %v783 = vunpack.c.l.b16 %v655
        %v784 = vunpack.c.l.b16 %v656
        %v785 = vunpack.c.l.b16 %v657
        %v786 = vunpack.c.l.b16 %v658
        %v787 = vpack.c.b16 %v772, %v771
        %v788 = vpack.c.b16 %v774, %v773
        %v789 = vpack.c.b16 %v776, %v775
        %v790 = vpack.c.b16 %v778, %v777
        %v791 = vpack.c.b16 %v780, %v779
        %v792 = vpack.c.b16 %v782, %v781
        %v793 = vpack.c.b16 %v784, %v783
        %v794 = vpack.c.b16 %v786, %v785
        %vm795 = vcmask 523264
        %v797 = vsel %vm795, %v787, 0
        %v800 = vsel %vm795, %v788, 0
        %v803 = vsel %vm795, %v789, 0
        %v806 = vsel %vm795, %v790, 0
        %v809 = vsel %vm795, %v791, 0
        %v812 = vsel %vm795, %v792, 0
        %v815 = vsel %vm795, %v793, 0
        %v818 = vsel %vm795, %v794, 0
        %820 = vmatpush.bf16.msra.mxu0 0
        %821 = vmatpush.bf16.msra.mxu0 0
        %822 = vmatpush.bf16.msra.mxu0 0
        %823 = vmatpush.bf16.msra.mxu0 0
        %824 = vmatpush.bf16.msra.mxu0 %v641
        %825 = vmatpush.bf16.msra.mxu0 %v639
        %826 = vmatpush.bf16.msra.mxu0 %v637
        %827 = vmatpush.bf16.msra.mxu0 %v635
        %828 = vmatmul.bf16.gmra.mxu0 %v797
        %v829 = vpop.f32.mrf.mxu0
        %v830 = vadd.f32 %v678, %v829
        %v831 = vpop.f32.mrf.mxu0
        %v832 = vadd.f32 %v683, %v831
        %833 = vmatmul.bf16.gmra.mxu0 %v800
        %v834 = vpop.f32.mrf.mxu0
        %v835 = vadd.f32 %v688, %v834
        %v836 = vpop.f32.mrf.mxu0
        %v837 = vadd.f32 %v693, %v836
        %838 = vmatmul.bf16.gmra.mxu0 %v803
        %v839 = vpop.f32.mrf.mxu0
        %v840 = vadd.f32 %v698, %v839
        %v841 = vpop.f32.mrf.mxu0
        %v842 = vadd.f32 %v703, %v841
        %843 = vmatmul.bf16.gmra.mxu0 %v806
        %v844 = vpop.f32.mrf.mxu0
        %v845 = vadd.f32 %v708, %v844
        %v846 = vpop.f32.mrf.mxu0
        %v847 = vadd.f32 %v713, %v846
        %848 = vmatmul.bf16.gmra.mxu0 %v809
        %v849 = vpop.f32.mrf.mxu0
        %v850 = vadd.f32 %v718, %v849
        %v851 = vpop.f32.mrf.mxu0
        %v852 = vadd.f32 %v723, %v851
        %853 = vmatmul.bf16.gmra.mxu0 %v812
        %v854 = vpop.f32.mrf.mxu0
        %v855 = vadd.f32 %v728, %v854
        %v856 = vpop.f32.mrf.mxu0
        %v857 = vadd.f32 %v733, %v856
        %858 = vmatmul.bf16.gmra.mxu0 %v815
        %v859 = vpop.f32.mrf.mxu0
        %v860 = vadd.f32 %v738, %v859
        %v861 = vpop.f32.mrf.mxu0
        %v862 = vadd.f32 %v743, %v861
        %863 = vmatmul.bf16.gmra.mxu0 %v818
        %v864 = vpop.f32.mrf.mxu0
        %v865 = vadd.f32 %v748, %v864
        %v866 = vpop.f32.mrf.mxu0
        %v867 = vadd.f32 %v753, %v866
        %868 = vdwg.mxu0
        %869 = vmatpush.bf16.msra.mxu0 0
        %870 = vmatpush.bf16.msra.mxu0 0
        %871 = vmatpush.bf16.msra.mxu0 0
        %872 = vmatpush.bf16.msra.mxu0 0
        %873 = vmatpush.bf16.msra.mxu0 %v642
        %874 = vmatpush.bf16.msra.mxu0 %v640
        %875 = vmatpush.bf16.msra.mxu0 %v638
        %876 = vmatpush.bf16.msra.mxu0 %v636
        %877 = vmatmul.bf16.gmra.mxu0 %v797
        %v878 = vpop.f32.mrf.mxu0
        %v879 = vadd.f32 %v678, %v878
        %v880 = vpop.f32.mrf.mxu0
        %v881 = vadd.f32 %v683, %v880
        %882 = vmatmul.bf16.gmra.mxu0 %v800
        %v883 = vpop.f32.mrf.mxu0
        %v884 = vadd.f32 %v688, %v883
        %v885 = vpop.f32.mrf.mxu0
        %v886 = vadd.f32 %v693, %v885
        %887 = vmatmul.bf16.gmra.mxu0 %v803
        %v888 = vpop.f32.mrf.mxu0
        %v889 = vadd.f32 %v698, %v888
        %v890 = vpop.f32.mrf.mxu0
        %v891 = vadd.f32 %v703, %v890
        %892 = vmatmul.bf16.gmra.mxu0 %v806
        %v893 = vpop.f32.mrf.mxu0
        %v894 = vadd.f32 %v708, %v893
        %v895 = vpop.f32.mrf.mxu0
        %v896 = vadd.f32 %v713, %v895
        %897 = vmatmul.bf16.gmra.mxu0 %v809
        %v898 = vpop.f32.mrf.mxu0
        %v899 = vadd.f32 %v718, %v898
        %v900 = vpop.f32.mrf.mxu0
        %v901 = vadd.f32 %v723, %v900
        %902 = vmatmul.bf16.gmra.mxu0 %v812
        %v903 = vpop.f32.mrf.mxu0
        %v904 = vadd.f32 %v728, %v903
        %v905 = vpop.f32.mrf.mxu0
        %v906 = vadd.f32 %v733, %v905
        %907 = vmatmul.bf16.gmra.mxu0 %v815
        %v908 = vpop.f32.mrf.mxu0
        %v909 = vadd.f32 %v738, %v908
        %v910 = vpop.f32.mrf.mxu0
        %v911 = vadd.f32 %v743, %v910
        %912 = vmatmul.bf16.gmra.mxu0 %v818
        %v913 = vpop.f32.mrf.mxu0
        %v914 = vadd.f32 %v748, %v913
        %v915 = vpop.f32.mrf.mxu0
        %v916 = vadd.f32 %v753, %v915
        %917 = vdwg.mxu0
        %v918 = vmax.f32 %v830, 0.0
        %v919 = vmax.f32 %v879, 0.0
        %v920 = vmax.f32 %v832, 0.0
        %v921 = vmax.f32 %v881, 0.0
        %v922 = vmax.f32 %v835, 0.0
        %v923 = vmax.f32 %v884, 0.0
        %v924 = vmax.f32 %v837, 0.0
        %v925 = vmax.f32 %v886, 0.0
        %v926 = vmax.f32 %v840, 0.0
        %v927 = vmax.f32 %v889, 0.0
        %v928 = vmax.f32 %v842, 0.0
        %v929 = vmax.f32 %v891, 0.0
        %v930 = vmax.f32 %v845, 0.0
        %v931 = vmax.f32 %v894, 0.0
        %v932 = vmax.f32 %v847, 0.0
        %v933 = vmax.f32 %v896, 0.0
        %v934 = vmax.f32 %v850, 0.0
        %v935 = vmax.f32 %v899, 0.0
        %v936 = vmax.f32 %v852, 0.0
        %v937 = vmax.f32 %v901, 0.0
        %v938 = vmax.f32 %v855, 0.0
        %v939 = vmax.f32 %v904, 0.0
        %v940 = vmax.f32 %v857, 0.0
        %v941 = vmax.f32 %v906, 0.0
        %v942 = vmax.f32 %v860, 0.0
        %v943 = vmax.f32 %v909, 0.0
        %v944 = vmax.f32 %v862, 0.0
        %v945 = vmax.f32 %v911, 0.0
        %v946 = vmax.f32 %v865, 0.0
        %v947 = vmax.f32 %v914, 0.0
        %v948 = vmax.f32 %v867, 0.0
        %v949 = vmax.f32 %v916, 0.0
        %v950 = vpack.c.bf16 %v920, %v918
        %v951 = vpack.c.bf16 %v921, %v919
        %v952 = vpack.c.bf16 %v924, %v922
        %v953 = vpack.c.bf16 %v925, %v923
        %v954 = vpack.c.bf16 %v928, %v926
        %v955 = vpack.c.bf16 %v929, %v927
        %v956 = vpack.c.bf16 %v932, %v930
        %v957 = vpack.c.bf16 %v933, %v931
        %v958 = vpack.c.bf16 %v936, %v934
        %v959 = vpack.c.bf16 %v937, %v935
        %v960 = vpack.c.bf16 %v940, %v938
        %v961 = vpack.c.bf16 %v941, %v939
        %v962 = vpack.c.bf16 %v944, %v942
        %v963 = vpack.c.bf16 %v945, %v943
        %v964 = vpack.c.bf16 %v948, %v946
        %v965 = vpack.c.bf16 %v949, %v947
        %v966 = vld [vmem:[#allocation3] sm:$0xf]
        %v967 = vld [vmem:[#allocation3 + $0x4] sm:$0xf]
        %v968 = vld [vmem:[#allocation3 + $0x8] sm:$0xf]
        %v969 = vld [vmem:[#allocation3 + $0xc] sm:$0xf]
        %v970 = vld [vmem:[#allocation3 + $0x10] sm:$0xf]
        %v971 = vld [vmem:[#allocation3 + $0x14] sm:$0xf]
        %v972 = vld [vmem:[#allocation3 + $0x18] sm:$0xf]
        %v973 = vld [vmem:[#allocation3 + $0x1c] sm:$0xf]
        %v974 = vld [vmem:[#allocation3 + $0x20] sm:$0xf]
        %v975 = vld [vmem:[#allocation3 + $0x24] sm:$0xf]
        %v976 = vld [vmem:[#allocation3 + $0x28] sm:$0xf]
        %v977 = vld [vmem:[#allocation3 + $0x2c] sm:$0xf]
        %v978 = vld [vmem:[#allocation3 + $0x30] sm:$0xf]
        %v979 = vld [vmem:[#allocation3 + $0x34] sm:$0xf]
        %v980 = vld [vmem:[#allocation3 + $0x38] sm:$0xf]
        %v981 = vld [vmem:[#allocation3 + $0x3c] sm:$0xf]
        %v982 = vld [vmem:[#allocation3 + $0x40] sm:$0xf]
        %v983 = vld [vmem:[#allocation3 + $0x44] sm:$0xf]
        %v984 = vld [vmem:[#allocation3 + $0x48] sm:$0xf]
        %v985 = vld [vmem:[#allocation3 + $0x4c] sm:$0xf]
        %v986 = vld [vmem:[#allocation3 + $0x50] sm:$0xf]
        %v987 = vld [vmem:[#allocation3 + $0x54] sm:$0xf]
        %v988 = vld [vmem:[#allocation3 + $0x58] sm:$0xf]
        %v989 = vld [vmem:[#allocation3 + $0x5c] sm:$0xf]
        %v990 = vld [vmem:[#allocation3 + $0x60] sm:$0xf]
        %v991 = vld [vmem:[#allocation3 + $0x64] sm:$0xf]
        %v992 = vld [vmem:[#allocation3 + $0x68] sm:$0xf]
        %v993 = vld [vmem:[#allocation3 + $0x6c] sm:$0xf]
        %v994 = vld [vmem:[#allocation3 + $0x70] sm:$0xf]
        %v995 = vld [vmem:[#allocation3 + $0x74] sm:$0xf]
        %v996 = vld [vmem:[#allocation3 + $0x78] sm:$0xf]
        %v997 = vld [vmem:[#allocation3 + $0x7c] sm:$0xf]
        %v998 = vld [vmem:[#allocation3 + $0x80] sm:$0xf]
        %v999 = vld [vmem:[#allocation3 + $0x84] sm:$0xf]
        %v1000 = vld [vmem:[#allocation3 + $0x88] sm:$0xf]
        %v1001 = vld [vmem:[#allocation3 + $0x8c] sm:$0xf]
        %v1002 = vld [vmem:[#allocation3 + $0x90] sm:$0xf]
        %v1003 = vld [vmem:[#allocation3 + $0x94] sm:$0xf]
        %v1004 = vld [vmem:[#allocation3 + $0x98] sm:$0xf]
        %v1005 = vld [vmem:[#allocation3 + $0x9c] sm:$0xf]
        %v1006 = vld [vmem:[#allocation3 + $0xa0] sm:$0xf]
        %v1007 = vld [vmem:[#allocation3 + $0xa4] sm:$0xf]
        %v1008 = vld [vmem:[#allocation3 + $0xa8] sm:$0xf]
        %v1009 = vld [vmem:[#allocation3 + $0xac] sm:$0xf]
        %v1010 = vld [vmem:[#allocation3 + $0xb0] sm:$0xf]
        %v1011 = vld [vmem:[#allocation3 + $0xb4] sm:$0xf]
        %v1012 = vld [vmem:[#allocation3 + $0xb8] sm:$0xf]
        %v1013 = vld [vmem:[#allocation3 + $0xbc] sm:$0xf]
        %v1014 = vld [vmem:[#allocation3 + $0xc0] sm:$0xf]
        %v1015 = vld [vmem:[#allocation3 + $0xc4] sm:$0xf]
        %v1016 = vld [vmem:[#allocation3 + $0xc8] sm:$0xf]
        %v1017 = vld [vmem:[#allocation3 + $0xcc] sm:$0xf]
        %v1018 = vld [vmem:[#allocation3 + $0xd0] sm:$0xf]
        %v1019 = vld [vmem:[#allocation3 + $0xd4] sm:$0xf]
        %v1020 = vld [vmem:[#allocation3 + $0xd8] sm:$0xf]
        %v1021 = vld [vmem:[#allocation3 + $0xdc] sm:$0xf]
        %v1022 = vld [vmem:[#allocation3 + $0xe0] sm:$0xf]
        %v1023 = vld [vmem:[#allocation3 + $0xe4] sm:$0xf]
        %v1024 = vld [vmem:[#allocation3 + $0xe8] sm:$0xf]
        %v1025 = vld [vmem:[#allocation3 + $0xec] sm:$0xf]
        %v1026 = vld [vmem:[#allocation3 + $0xf0] sm:$0xf]
        %v1027 = vld [vmem:[#allocation3 + $0xf4] sm:$0xf]
        %v1028 = vld [vmem:[#allocation3 + $0xf8] sm:$0xf]
        %v1029 = vld [vmem:[#allocation3 + $0xfc] sm:$0xf]
        %v1030 = vld [vmem:[#allocation3 + $0x100] sm:$0xf]
        %v1031 = vld [vmem:[#allocation3 + $0x104] sm:$0xf]
        %v1032 = vld [vmem:[#allocation3 + $0x108] sm:$0xf]
        %v1033 = vld [vmem:[#allocation3 + $0x10c] sm:$0xf]
        %v1034 = vld [vmem:[#allocation3 + $0x110] sm:$0xf]
        %v1035 = vld [vmem:[#allocation3 + $0x114] sm:$0xf]
        %v1036 = vld [vmem:[#allocation3 + $0x118] sm:$0xf]
        %v1037 = vld [vmem:[#allocation3 + $0x11c] sm:$0xf]
        %v1038 = vld [vmem:[#allocation3 + $0x120] sm:$0xf]
        %v1039 = vld [vmem:[#allocation3 + $0x124] sm:$0xf]
        %v1040 = vld [vmem:[#allocation3 + $0x128] sm:$0xf]
        %v1041 = vld [vmem:[#allocation3 + $0x12c] sm:$0xf]
        %v1042 = vld [vmem:[#allocation3 + $0x130] sm:$0xf]
        %v1043 = vld [vmem:[#allocation3 + $0x134] sm:$0xf]
        %v1044 = vld [vmem:[#allocation3 + $0x138] sm:$0xf]
        %v1045 = vld [vmem:[#allocation3 + $0x13c] sm:$0xf]
        %v1046 = vld [vmem:[#allocation3 + $0x140] sm:$0xf]
        %v1047 = vld [vmem:[#allocation3 + $0x144] sm:$0xf]
        %v1048 = vld [vmem:[#allocation3 + $0x148] sm:$0xf]
        %v1049 = vld [vmem:[#allocation3 + $0x14c] sm:$0xf]
        %v1050 = vld [vmem:[#allocation3 + $0x150] sm:$0xf]
        %v1051 = vld [vmem:[#allocation3 + $0x154] sm:$0xf]
        %v1052 = vld [vmem:[#allocation3 + $0x158] sm:$0xf]
        %v1053 = vld [vmem:[#allocation3 + $0x15c] sm:$0xf]
        %v1054 = vld [vmem:[#allocation3 + $0x160] sm:$0xf]
        %v1055 = vld [vmem:[#allocation3 + $0x164] sm:$0xf]
        %v1056 = vld [vmem:[#allocation3 + $0x168] sm:$0xf]
        %v1057 = vld [vmem:[#allocation3 + $0x16c] sm:$0xf]
        %v1058 = vld [vmem:[#allocation3 + $0x170] sm:$0xf]
        %v1059 = vld [vmem:[#allocation3 + $0x174] sm:$0xf]
        %v1060 = vld [vmem:[#allocation3 + $0x178] sm:$0xf]
        %v1061 = vld [vmem:[#allocation3 + $0x17c] sm:$0xf]
        %v1062 = vld [vmem:[#allocation3 + $0x180] sm:$0xf]
        %v1063 = vld [vmem:[#allocation3 + $0x184] sm:$0xf]
        %v1064 = vld [vmem:[#allocation3 + $0x188] sm:$0xf]
        %v1065 = vld [vmem:[#allocation3 + $0x18c] sm:$0xf]
        %v1066 = vld [vmem:[#allocation3 + $0x190] sm:$0xf]
        %v1067 = vld [vmem:[#allocation3 + $0x194] sm:$0xf]
        %v1068 = vld [vmem:[#allocation3 + $0x198] sm:$0xf]
        %v1069 = vld [vmem:[#allocation3 + $0x19c] sm:$0xf]
        %v1070 = vld [vmem:[#allocation3 + $0x1a0] sm:$0xf]
        %v1071 = vld [vmem:[#allocation3 + $0x1a4] sm:$0xf]
        %v1072 = vld [vmem:[#allocation3 + $0x1a8] sm:$0xf]
        %v1073 = vld [vmem:[#allocation3 + $0x1ac] sm:$0xf]
        %v1074 = vld [vmem:[#allocation3 + $0x1b0] sm:$0xf]
        %v1075 = vld [vmem:[#allocation3 + $0x1b4] sm:$0xf]
        %v1076 = vld [vmem:[#allocation3 + $0x1b8] sm:$0xf]
        %v1077 = vld [vmem:[#allocation3 + $0x1bc] sm:$0xf]
        %v1078 = vld [vmem:[#allocation3 + $0x1c0] sm:$0xf]
        %v1079 = vld [vmem:[#allocation3 + $0x1c4] sm:$0xf]
        %v1080 = vld [vmem:[#allocation3 + $0x1c8] sm:$0xf]
        %v1081 = vld [vmem:[#allocation3 + $0x1cc] sm:$0xf]
        %v1082 = vld [vmem:[#allocation3 + $0x1d0] sm:$0xf]
        %v1083 = vld [vmem:[#allocation3 + $0x1d4] sm:$0xf]
        %v1084 = vld [vmem:[#allocation3 + $0x1d8] sm:$0xf]
        %v1085 = vld [vmem:[#allocation3 + $0x1dc] sm:$0xf]
        %v1086 = vld [vmem:[#allocation3 + $0x1e0] sm:$0xf]
        %v1087 = vld [vmem:[#allocation3 + $0x1e4] sm:$0xf]
        %v1088 = vld [vmem:[#allocation3 + $0x1e8] sm:$0xf]
        %v1089 = vld [vmem:[#allocation3 + $0x1ec] sm:$0xf]
        %v1090 = vld [vmem:[#allocation3 + $0x1f0] sm:$0xf]
        %v1091 = vld [vmem:[#allocation3 + $0x1f4] sm:$0xf]
        %v1092 = vld [vmem:[#allocation3 + $0x1f8] sm:$0xf]
        %v1093 = vld [vmem:[#allocation3 + $0x1fc] sm:$0xf]
        %v1222 = vunpack.c.l.b16 %v966
        %v1223 = vunpack.c.l.b16 %v967
        %v1224 = vunpack.c.l.b16 %v968
        %v1225 = vunpack.c.l.b16 %v969
        %v1226 = vunpack.c.l.b16 %v970
        %v1227 = vunpack.c.l.b16 %v971
        %v1228 = vunpack.c.l.b16 %v972
        %v1229 = vunpack.c.l.b16 %v973
        %v1230 = vunpack.c.l.b16 %v974
        %v1231 = vunpack.c.l.b16 %v975
        %v1232 = vunpack.c.l.b16 %v976
        %v1233 = vunpack.c.l.b16 %v977
        %v1234 = vunpack.c.l.b16 %v978
        %v1235 = vunpack.c.l.b16 %v979
        %v1236 = vunpack.c.l.b16 %v980
        %v1237 = vunpack.c.l.b16 %v981
        %v1238 = vunpack.c.l.b16 %v982
        %v1239 = vunpack.c.l.b16 %v983
        %v1240 = vunpack.c.l.b16 %v984
        %v1241 = vunpack.c.l.b16 %v985
        %v1242 = vunpack.c.l.b16 %v986
        %v1243 = vunpack.c.l.b16 %v987
        %v1244 = vunpack.c.l.b16 %v988
        %v1245 = vunpack.c.l.b16 %v989
        %v1246 = vunpack.c.l.b16 %v990
        %v1247 = vunpack.c.l.b16 %v991
        %v1248 = vunpack.c.l.b16 %v992
        %v1249 = vunpack.c.l.b16 %v993
        %v1250 = vunpack.c.l.b16 %v994
        %v1251 = vunpack.c.l.b16 %v995
        %v1252 = vunpack.c.l.b16 %v996
        %v1253 = vunpack.c.l.b16 %v997
        %v1254 = vunpack.c.l.b16 %v998
        %v1255 = vunpack.c.l.b16 %v999
        %v1256 = vunpack.c.l.b16 %v1000
        %v1257 = vunpack.c.l.b16 %v1001
        %v1258 = vunpack.c.l.b16 %v1002
        %v1259 = vunpack.c.l.b16 %v1003
        %v1260 = vunpack.c.l.b16 %v1004
        %v1261 = vunpack.c.l.b16 %v1005
        %v1262 = vunpack.c.l.b16 %v1006
        %v1263 = vunpack.c.l.b16 %v1007
        %v1264 = vunpack.c.l.b16 %v1008
        %v1265 = vunpack.c.l.b16 %v1009
        %v1266 = vunpack.c.l.b16 %v1010
        %v1267 = vunpack.c.l.b16 %v1011
        %v1268 = vunpack.c.l.b16 %v1012
        %v1269 = vunpack.c.l.b16 %v1013
        %v1270 = vunpack.c.l.b16 %v1014
        %v1271 = vunpack.c.l.b16 %v1015
        %v1272 = vunpack.c.l.b16 %v1016
        %v1273 = vunpack.c.l.b16 %v1017
        %v1274 = vunpack.c.l.b16 %v1018
        %v1275 = vunpack.c.l.b16 %v1019
        %v1276 = vunpack.c.l.b16 %v1020
        %v1277 = vunpack.c.l.b16 %v1021
        %v1278 = vunpack.c.l.b16 %v1022
        %v1279 = vunpack.c.l.b16 %v1023
        %v1280 = vunpack.c.l.b16 %v1024
        %v1281 = vunpack.c.l.b16 %v1025
        %v1282 = vunpack.c.l.b16 %v1026
        %v1283 = vunpack.c.l.b16 %v1027
        %v1284 = vunpack.c.l.b16 %v1028
        %v1285 = vunpack.c.l.b16 %v1029
        %v1286 = vunpack.c.l.b16 %v1030
        %v1287 = vunpack.c.l.b16 %v1031
        %v1288 = vunpack.c.l.b16 %v1032
        %v1289 = vunpack.c.l.b16 %v1033
        %v1290 = vunpack.c.l.b16 %v1034
        %v1291 = vunpack.c.l.b16 %v1035
        %v1292 = vunpack.c.l.b16 %v1036
        %v1293 = vunpack.c.l.b16 %v1037
        %v1294 = vunpack.c.l.b16 %v1038
        %v1295 = vunpack.c.l.b16 %v1039
        %v1296 = vunpack.c.l.b16 %v1040
        %v1297 = vunpack.c.l.b16 %v1041
        %v1298 = vunpack.c.l.b16 %v1042
        %v1299 = vunpack.c.l.b16 %v1043
        %v1300 = vunpack.c.l.b16 %v1044
        %v1301 = vunpack.c.l.b16 %v1045
        %v1302 = vunpack.c.l.b16 %v1046
        %v1303 = vunpack.c.l.b16 %v1047
        %v1304 = vunpack.c.l.b16 %v1048
        %v1305 = vunpack.c.l.b16 %v1049
        %v1306 = vunpack.c.l.b16 %v1050
        %v1307 = vunpack.c.l.b16 %v1051
        %v1308 = vunpack.c.l.b16 %v1052
        %v1309 = vunpack.c.l.b16 %v1053
        %v1310 = vunpack.c.l.b16 %v1054
        %v1311 = vunpack.c.l.b16 %v1055
        %v1312 = vunpack.c.l.b16 %v1056
        %v1313 = vunpack.c.l.b16 %v1057
        %v1314 = vunpack.c.l.b16 %v1058
        %v1315 = vunpack.c.l.b16 %v1059
        %v1316 = vunpack.c.l.b16 %v1060
        %v1317 = vunpack.c.l.b16 %v1061
        %v1318 = vunpack.c.l.b16 %v1062
        %v1319 = vunpack.c.l.b16 %v1063
        %v1320 = vunpack.c.l.b16 %v1064
        %v1321 = vunpack.c.l.b16 %v1065
        %v1322 = vunpack.c.l.b16 %v1066
        %v1323 = vunpack.c.l.b16 %v1067
        %v1324 = vunpack.c.l.b16 %v1068
        %v1325 = vunpack.c.l.b16 %v1069
        %v1326 = vunpack.c.l.b16 %v1070
        %v1327 = vunpack.c.l.b16 %v1071
        %v1328 = vunpack.c.l.b16 %v1072
        %v1329 = vunpack.c.l.b16 %v1073
        %v1330 = vunpack.c.l.b16 %v1074
        %v1331 = vunpack.c.l.b16 %v1075
        %v1332 = vunpack.c.l.b16 %v1076
        %v1333 = vunpack.c.l.b16 %v1077
        %v1334 = vunpack.c.l.b16 %v1078
        %v1335 = vunpack.c.l.b16 %v1079
        %v1336 = vunpack.c.l.b16 %v1080
        %v1337 = vunpack.c.l.b16 %v1081
        %v1338 = vunpack.c.l.b16 %v1082
        %v1339 = vunpack.c.l.b16 %v1083
        %v1340 = vunpack.c.l.b16 %v1084
        %v1341 = vunpack.c.l.b16 %v1085
        %v1342 = vunpack.c.l.b16 %v1086
        %v1343 = vunpack.c.l.b16 %v1087
        %v1344 = vunpack.c.l.b16 %v1088
        %v1345 = vunpack.c.l.b16 %v1089
        %v1346 = vunpack.c.l.b16 %v1090
        %v1347 = vunpack.c.l.b16 %v1091
        %v1348 = vunpack.c.l.b16 %v1092
        %v1349 = vunpack.c.l.b16 %v1093
        %v1350 = vpack.c.b16 %v1223, %v1222
        %v1351 = vpack.c.b16 %v1225, %v1224
        %v1352 = vpack.c.b16 %v1227, %v1226
        %v1353 = vpack.c.b16 %v1229, %v1228
        %v1354 = vpack.c.b16 %v1231, %v1230
        %v1355 = vpack.c.b16 %v1233, %v1232
        %v1356 = vpack.c.b16 %v1235, %v1234
        %v1357 = vpack.c.b16 %v1237, %v1236
        %v1358 = vpack.c.b16 %v1239, %v1238
        %v1359 = vpack.c.b16 %v1241, %v1240
        %v1360 = vpack.c.b16 %v1243, %v1242
        %v1361 = vpack.c.b16 %v1245, %v1244
        %v1362 = vpack.c.b16 %v1247, %v1246
        %v1363 = vpack.c.b16 %v1249, %v1248
        %v1364 = vpack.c.b16 %v1251, %v1250
        %v1365 = vpack.c.b16 %v1253, %v1252
        %v1366 = vpack.c.b16 %v1255, %v1254
        %v1367 = vpack.c.b16 %v1257, %v1256
        %v1368 = vpack.c.b16 %v1259, %v1258
        %v1369 = vpack.c.b16 %v1261, %v1260
        %v1370 = vpack.c.b16 %v1263, %v1262
        %v1371 = vpack.c.b16 %v1265, %v1264
        %v1372 = vpack.c.b16 %v1267, %v1266
        %v1373 = vpack.c.b16 %v1269, %v1268
        %v1374 = vpack.c.b16 %v1271, %v1270
        %v1375 = vpack.c.b16 %v1273, %v1272
        %v1376 = vpack.c.b16 %v1275, %v1274
        %v1377 = vpack.c.b16 %v1277, %v1276
        %v1378 = vpack.c.b16 %v1279, %v1278
        %v1379 = vpack.c.b16 %v1281, %v1280
        %v1380 = vpack.c.b16 %v1283, %v1282
        %v1381 = vpack.c.b16 %v1285, %v1284
        %v1382 = vpack.c.b16 %v1287, %v1286
        %v1383 = vpack.c.b16 %v1289, %v1288
        %v1384 = vpack.c.b16 %v1291, %v1290
        %v1385 = vpack.c.b16 %v1293, %v1292
        %v1386 = vpack.c.b16 %v1295, %v1294
        %v1387 = vpack.c.b16 %v1297, %v1296
        %v1388 = vpack.c.b16 %v1299, %v1298
        %v1389 = vpack.c.b16 %v1301, %v1300
        %v1390 = vpack.c.b16 %v1303, %v1302
        %v1391 = vpack.c.b16 %v1305, %v1304
        %v1392 = vpack.c.b16 %v1307, %v1306
        %v1393 = vpack.c.b16 %v1309, %v1308
        %v1394 = vpack.c.b16 %v1311, %v1310
        %v1395 = vpack.c.b16 %v1313, %v1312
        %v1396 = vpack.c.b16 %v1315, %v1314
        %v1397 = vpack.c.b16 %v1317, %v1316
        %v1398 = vpack.c.b16 %v1319, %v1318
        %v1399 = vpack.c.b16 %v1321, %v1320
        %v1400 = vpack.c.b16 %v1323, %v1322
        %v1401 = vpack.c.b16 %v1325, %v1324
        %v1402 = vpack.c.b16 %v1327, %v1326
        %v1403 = vpack.c.b16 %v1329, %v1328
        %v1404 = vpack.c.b16 %v1331, %v1330
        %v1405 = vpack.c.b16 %v1333, %v1332
        %v1406 = vpack.c.b16 %v1335, %v1334
        %v1407 = vpack.c.b16 %v1337, %v1336
        %v1408 = vpack.c.b16 %v1339, %v1338
        %v1409 = vpack.c.b16 %v1341, %v1340
        %v1410 = vpack.c.b16 %v1343, %v1342
        %v1411 = vpack.c.b16 %v1345, %v1344
        %v1412 = vpack.c.b16 %v1347, %v1346
        %v1413 = vpack.c.b16 %v1349, %v1348
        %1478 = vmatpush.bf16.msra.mxu0 %v964
        %1479 = vmatpush.bf16.msra.mxu0 %v962
        %1480 = vmatpush.bf16.msra.mxu0 %v960
        %1481 = vmatpush.bf16.msra.mxu0 %v958
        %1482 = vmatpush.bf16.msra.mxu0 %v956
        %1483 = vmatpush.bf16.msra.mxu0 %v954
        %1484 = vmatpush.bf16.msra.mxu0 %v952
        %1485 = vmatpush.bf16.msra.mxu0 %v950
        %1486 = vmatmul.bf16.gmra.mxu0 %v1350
        %v1487 = vpop.f32.mrf.mxu0
        %v1488 = vadd.f32 0.0, %v1487
        %v1489 = vpop.f32.mrf.mxu0
        %v1490 = vadd.f32 0.0, %v1489
        %1491 = vmatmul.bf16.gmra.mxu0 %v1351
        %v1492 = vpop.f32.mrf.mxu0
        %v1493 = vadd.f32 0.0, %v1492
        %v1494 = vpop.f32.mrf.mxu0
        %v1495 = vadd.f32 0.0, %v1494
        %1496 = vmatmul.bf16.gmra.mxu0 %v1352
        %v1497 = vpop.f32.mrf.mxu0
        %v1498 = vadd.f32 0.0, %v1497
        %v1499 = vpop.f32.mrf.mxu0
        %v1500 = vadd.f32 0.0, %v1499
        %1501 = vmatmul.bf16.gmra.mxu0 %v1353
        %v1502 = vpop.f32.mrf.mxu0
        %v1503 = vadd.f32 0.0, %v1502
        %v1504 = vpop.f32.mrf.mxu0
        %v1505 = vadd.f32 0.0, %v1504
        %1506 = vmatmul.bf16.gmra.mxu0 %v1354
        %v1507 = vpop.f32.mrf.mxu0
        %v1508 = vadd.f32 0.0, %v1507
        %v1509 = vpop.f32.mrf.mxu0
        %v1510 = vadd.f32 0.0, %v1509
        %1511 = vmatmul.bf16.gmra.mxu0 %v1355
        %v1512 = vpop.f32.mrf.mxu0
        %v1513 = vadd.f32 0.0, %v1512
        %v1514 = vpop.f32.mrf.mxu0
        %v1515 = vadd.f32 0.0, %v1514
        %1516 = vmatmul.bf16.gmra.mxu0 %v1356
        %v1517 = vpop.f32.mrf.mxu0
        %v1518 = vadd.f32 0.0, %v1517
        %v1519 = vpop.f32.mrf.mxu0
        %v1520 = vadd.f32 0.0, %v1519
        %1521 = vmatmul.bf16.gmra.mxu0 %v1357
        %v1522 = vpop.f32.mrf.mxu0
        %v1523 = vadd.f32 0.0, %v1522
        %v1524 = vpop.f32.mrf.mxu0
        %v1525 = vadd.f32 0.0, %v1524
        %1526 = vmatmul.bf16.gmra.mxu0 %v1358
        %v1527 = vpop.f32.mrf.mxu0
        %v1528 = vadd.f32 0.0, %v1527
        %v1529 = vpop.f32.mrf.mxu0
        %v1530 = vadd.f32 0.0, %v1529
        %1531 = vmatmul.bf16.gmra.mxu0 %v1359
        %v1532 = vpop.f32.mrf.mxu0
        %v1533 = vadd.f32 0.0, %v1532
        %v1534 = vpop.f32.mrf.mxu0
        %v1535 = vadd.f32 0.0, %v1534
        %1536 = vmatmul.bf16.gmra.mxu0 %v1360
        %v1537 = vpop.f32.mrf.mxu0
        %v1538 = vadd.f32 0.0, %v1537
        %v1539 = vpop.f32.mrf.mxu0
        %v1540 = vadd.f32 0.0, %v1539
        %1541 = vmatmul.bf16.gmra.mxu0 %v1361
        %v1542 = vpop.f32.mrf.mxu0
        %v1543 = vadd.f32 0.0, %v1542
        %v1544 = vpop.f32.mrf.mxu0
        %v1545 = vadd.f32 0.0, %v1544
        %1546 = vmatmul.bf16.gmra.mxu0 %v1362
        %v1547 = vpop.f32.mrf.mxu0
        %v1548 = vadd.f32 0.0, %v1547
        %v1549 = vpop.f32.mrf.mxu0
        %v1550 = vadd.f32 0.0, %v1549
        %1551 = vmatmul.bf16.gmra.mxu0 %v1363
        %v1552 = vpop.f32.mrf.mxu0
        %v1553 = vadd.f32 0.0, %v1552
        %v1554 = vpop.f32.mrf.mxu0
        %v1555 = vadd.f32 0.0, %v1554
        %1556 = vmatmul.bf16.gmra.mxu0 %v1364
        %v1557 = vpop.f32.mrf.mxu0
        %v1558 = vadd.f32 0.0, %v1557
        %v1559 = vpop.f32.mrf.mxu0
        %v1560 = vadd.f32 0.0, %v1559
        %1561 = vmatmul.bf16.gmra.mxu0 %v1365
        %v1562 = vpop.f32.mrf.mxu0
        %v1563 = vadd.f32 0.0, %v1562
        %v1564 = vpop.f32.mrf.mxu0
        %v1565 = vadd.f32 0.0, %v1564
        %1566 = vmatmul.bf16.gmra.mxu0 %v1366
        %v1567 = vpop.f32.mrf.mxu0
        %v1568 = vadd.f32 0.0, %v1567
        %v1569 = vpop.f32.mrf.mxu0
        %v1570 = vadd.f32 0.0, %v1569
        %1571 = vmatmul.bf16.gmra.mxu0 %v1367
        %v1572 = vpop.f32.mrf.mxu0
        %v1573 = vadd.f32 0.0, %v1572
        %v1574 = vpop.f32.mrf.mxu0
        %v1575 = vadd.f32 0.0, %v1574
        %1576 = vmatmul.bf16.gmra.mxu0 %v1368
        %v1577 = vpop.f32.mrf.mxu0
        %v1578 = vadd.f32 0.0, %v1577
        %v1579 = vpop.f32.mrf.mxu0
        %v1580 = vadd.f32 0.0, %v1579
        %1581 = vmatmul.bf16.gmra.mxu0 %v1369
        %v1582 = vpop.f32.mrf.mxu0
        %v1583 = vadd.f32 0.0, %v1582
        %v1584 = vpop.f32.mrf.mxu0
        %v1585 = vadd.f32 0.0, %v1584
        %1586 = vmatmul.bf16.gmra.mxu0 %v1370
        %v1587 = vpop.f32.mrf.mxu0
        %v1588 = vadd.f32 0.0, %v1587
        %v1589 = vpop.f32.mrf.mxu0
        %v1590 = vadd.f32 0.0, %v1589
        %1591 = vmatmul.bf16.gmra.mxu0 %v1371
        %v1592 = vpop.f32.mrf.mxu0
        %v1593 = vadd.f32 0.0, %v1592
        %v1594 = vpop.f32.mrf.mxu0
        %v1595 = vadd.f32 0.0, %v1594
        %1596 = vmatmul.bf16.gmra.mxu0 %v1372
        %v1597 = vpop.f32.mrf.mxu0
        %v1598 = vadd.f32 0.0, %v1597
        %v1599 = vpop.f32.mrf.mxu0
        %v1600 = vadd.f32 0.0, %v1599
        %1601 = vmatmul.bf16.gmra.mxu0 %v1373
        %v1602 = vpop.f32.mrf.mxu0
        %v1603 = vadd.f32 0.0, %v1602
        %v1604 = vpop.f32.mrf.mxu0
        %v1605 = vadd.f32 0.0, %v1604
        %1606 = vmatmul.bf16.gmra.mxu0 %v1374
        %v1607 = vpop.f32.mrf.mxu0
        %v1608 = vadd.f32 0.0, %v1607
        %v1609 = vpop.f32.mrf.mxu0
        %v1610 = vadd.f32 0.0, %v1609
        %1611 = vmatmul.bf16.gmra.mxu0 %v1375
        %v1612 = vpop.f32.mrf.mxu0
        %v1613 = vadd.f32 0.0, %v1612
        %v1614 = vpop.f32.mrf.mxu0
        %v1615 = vadd.f32 0.0, %v1614
        %1616 = vmatmul.bf16.gmra.mxu0 %v1376
        %v1617 = vpop.f32.mrf.mxu0
        %v1618 = vadd.f32 0.0, %v1617
        %v1619 = vpop.f32.mrf.mxu0
        %v1620 = vadd.f32 0.0, %v1619
        %1621 = vmatmul.bf16.gmra.mxu0 %v1377
        %v1622 = vpop.f32.mrf.mxu0
        %v1623 = vadd.f32 0.0, %v1622
        %v1624 = vpop.f32.mrf.mxu0
        %v1625 = vadd.f32 0.0, %v1624
        %1626 = vmatmul.bf16.gmra.mxu0 %v1378
        %v1627 = vpop.f32.mrf.mxu0
        %v1628 = vadd.f32 0.0, %v1627
        %v1629 = vpop.f32.mrf.mxu0
        %v1630 = vadd.f32 0.0, %v1629
        %1631 = vmatmul.bf16.gmra.mxu0 %v1379
        %v1632 = vpop.f32.mrf.mxu0
        %v1633 = vadd.f32 0.0, %v1632
        %v1634 = vpop.f32.mrf.mxu0
        %v1635 = vadd.f32 0.0, %v1634
        %1636 = vmatmul.bf16.gmra.mxu0 %v1380
        %v1637 = vpop.f32.mrf.mxu0
        %v1638 = vadd.f32 0.0, %v1637
        %v1639 = vpop.f32.mrf.mxu0
        %v1640 = vadd.f32 0.0, %v1639
        %1641 = vmatmul.bf16.gmra.mxu0 %v1381
        %v1642 = vpop.f32.mrf.mxu0
        %v1643 = vadd.f32 0.0, %v1642
        %v1644 = vpop.f32.mrf.mxu0
        %v1645 = vadd.f32 0.0, %v1644
        %1646 = vmatmul.bf16.gmra.mxu0 %v1382
        %v1647 = vpop.f32.mrf.mxu0
        %v1648 = vadd.f32 0.0, %v1647
        %v1649 = vpop.f32.mrf.mxu0
        %v1650 = vadd.f32 0.0, %v1649
        %1651 = vmatmul.bf16.gmra.mxu0 %v1383
        %v1652 = vpop.f32.mrf.mxu0
        %v1653 = vadd.f32 0.0, %v1652
        %v1654 = vpop.f32.mrf.mxu0
        %v1655 = vadd.f32 0.0, %v1654
        %1656 = vmatmul.bf16.gmra.mxu0 %v1384
        %v1657 = vpop.f32.mrf.mxu0
        %v1658 = vadd.f32 0.0, %v1657
        %v1659 = vpop.f32.mrf.mxu0
        %v1660 = vadd.f32 0.0, %v1659
        %1661 = vmatmul.bf16.gmra.mxu0 %v1385
        %v1662 = vpop.f32.mrf.mxu0
        %v1663 = vadd.f32 0.0, %v1662
        %v1664 = vpop.f32.mrf.mxu0
        %v1665 = vadd.f32 0.0, %v1664
        %1666 = vmatmul.bf16.gmra.mxu0 %v1386
        %v1667 = vpop.f32.mrf.mxu0
        %v1668 = vadd.f32 0.0, %v1667
        %v1669 = vpop.f32.mrf.mxu0
        %v1670 = vadd.f32 0.0, %v1669
        %1671 = vmatmul.bf16.gmra.mxu0 %v1387
        %v1672 = vpop.f32.mrf.mxu0
        %v1673 = vadd.f32 0.0, %v1672
        %v1674 = vpop.f32.mrf.mxu0
        %v1675 = vadd.f32 0.0, %v1674
        %1676 = vmatmul.bf16.gmra.mxu0 %v1388
        %v1677 = vpop.f32.mrf.mxu0
        %v1678 = vadd.f32 0.0, %v1677
        %v1679 = vpop.f32.mrf.mxu0
        %v1680 = vadd.f32 0.0, %v1679
        %1681 = vmatmul.bf16.gmra.mxu0 %v1389
        %v1682 = vpop.f32.mrf.mxu0
        %v1683 = vadd.f32 0.0, %v1682
        %v1684 = vpop.f32.mrf.mxu0
        %v1685 = vadd.f32 0.0, %v1684
        %1686 = vmatmul.bf16.gmra.mxu0 %v1390
        %v1687 = vpop.f32.mrf.mxu0
        %v1688 = vadd.f32 0.0, %v1687
        %v1689 = vpop.f32.mrf.mxu0
        %v1690 = vadd.f32 0.0, %v1689
        %1691 = vmatmul.bf16.gmra.mxu0 %v1391
        %v1692 = vpop.f32.mrf.mxu0
        %v1693 = vadd.f32 0.0, %v1692
        %v1694 = vpop.f32.mrf.mxu0
        %v1695 = vadd.f32 0.0, %v1694
        %1696 = vmatmul.bf16.gmra.mxu0 %v1392
        %v1697 = vpop.f32.mrf.mxu0
        %v1698 = vadd.f32 0.0, %v1697
        %v1699 = vpop.f32.mrf.mxu0
        %v1700 = vadd.f32 0.0, %v1699
        %1701 = vmatmul.bf16.gmra.mxu0 %v1393
        %v1702 = vpop.f32.mrf.mxu0
        %v1703 = vadd.f32 0.0, %v1702
        %v1704 = vpop.f32.mrf.mxu0
        %v1705 = vadd.f32 0.0, %v1704
        %1706 = vmatmul.bf16.gmra.mxu0 %v1394
        %v1707 = vpop.f32.mrf.mxu0
        %v1708 = vadd.f32 0.0, %v1707
        %v1709 = vpop.f32.mrf.mxu0
        %v1710 = vadd.f32 0.0, %v1709
        %1711 = vmatmul.bf16.gmra.mxu0 %v1395
        %v1712 = vpop.f32.mrf.mxu0
        %v1713 = vadd.f32 0.0, %v1712
        %v1714 = vpop.f32.mrf.mxu0
        %v1715 = vadd.f32 0.0, %v1714
        %1716 = vmatmul.bf16.gmra.mxu0 %v1396
        %v1717 = vpop.f32.mrf.mxu0
        %v1718 = vadd.f32 0.0, %v1717
        %v1719 = vpop.f32.mrf.mxu0
        %v1720 = vadd.f32 0.0, %v1719
        %1721 = vmatmul.bf16.gmra.mxu0 %v1397
        %v1722 = vpop.f32.mrf.mxu0
        %v1723 = vadd.f32 0.0, %v1722
        %v1724 = vpop.f32.mrf.mxu0
        %v1725 = vadd.f32 0.0, %v1724
        %1726 = vmatmul.bf16.gmra.mxu0 %v1398
        %v1727 = vpop.f32.mrf.mxu0
        %v1728 = vadd.f32 0.0, %v1727
        %v1729 = vpop.f32.mrf.mxu0
        %v1730 = vadd.f32 0.0, %v1729
        %1731 = vmatmul.bf16.gmra.mxu0 %v1399
        %v1732 = vpop.f32.mrf.mxu0
        %v1733 = vadd.f32 0.0, %v1732
        %v1734 = vpop.f32.mrf.mxu0
        %v1735 = vadd.f32 0.0, %v1734
        %1736 = vmatmul.bf16.gmra.mxu0 %v1400
        %v1737 = vpop.f32.mrf.mxu0
        %v1738 = vadd.f32 0.0, %v1737
        %v1739 = vpop.f32.mrf.mxu0
        %v1740 = vadd.f32 0.0, %v1739
        %1741 = vmatmul.bf16.gmra.mxu0 %v1401
        %v1742 = vpop.f32.mrf.mxu0
        %v1743 = vadd.f32 0.0, %v1742
        %v1744 = vpop.f32.mrf.mxu0
        %v1745 = vadd.f32 0.0, %v1744
        %1746 = vmatmul.bf16.gmra.mxu0 %v1402
        %v1747 = vpop.f32.mrf.mxu0
        %v1748 = vadd.f32 0.0, %v1747
        %v1749 = vpop.f32.mrf.mxu0
        %v1750 = vadd.f32 0.0, %v1749
        %1751 = vmatmul.bf16.gmra.mxu0 %v1403
        %v1752 = vpop.f32.mrf.mxu0
        %v1753 = vadd.f32 0.0, %v1752
        %v1754 = vpop.f32.mrf.mxu0
        %v1755 = vadd.f32 0.0, %v1754
        %1756 = vmatmul.bf16.gmra.mxu0 %v1404
        %v1757 = vpop.f32.mrf.mxu0
        %v1758 = vadd.f32 0.0, %v1757
        %v1759 = vpop.f32.mrf.mxu0
        %v1760 = vadd.f32 0.0, %v1759
        %1761 = vmatmul.bf16.gmra.mxu0 %v1405
        %v1762 = vpop.f32.mrf.mxu0
        %v1763 = vadd.f32 0.0, %v1762
        %v1764 = vpop.f32.mrf.mxu0
        %v1765 = vadd.f32 0.0, %v1764
        %1766 = vmatmul.bf16.gmra.mxu0 %v1406
        %v1767 = vpop.f32.mrf.mxu0
        %v1768 = vadd.f32 0.0, %v1767
        %v1769 = vpop.f32.mrf.mxu0
        %v1770 = vadd.f32 0.0, %v1769
        %1771 = vmatmul.bf16.gmra.mxu0 %v1407
        %v1772 = vpop.f32.mrf.mxu0
        %v1773 = vadd.f32 0.0, %v1772
        %v1774 = vpop.f32.mrf.mxu0
        %v1775 = vadd.f32 0.0, %v1774
        %1776 = vmatmul.bf16.gmra.mxu0 %v1408
        %v1777 = vpop.f32.mrf.mxu0
        %v1778 = vadd.f32 0.0, %v1777
        %v1779 = vpop.f32.mrf.mxu0
        %v1780 = vadd.f32 0.0, %v1779
        %1781 = vmatmul.bf16.gmra.mxu0 %v1409
        %v1782 = vpop.f32.mrf.mxu0
        %v1783 = vadd.f32 0.0, %v1782
        %v1784 = vpop.f32.mrf.mxu0
        %v1785 = vadd.f32 0.0, %v1784
        %1786 = vmatmul.bf16.gmra.mxu0 %v1410
        %v1787 = vpop.f32.mrf.mxu0
        %v1788 = vadd.f32 0.0, %v1787
        %v1789 = vpop.f32.mrf.mxu0
        %v1790 = vadd.f32 0.0, %v1789
        %1791 = vmatmul.bf16.gmra.mxu0 %v1411
        %v1792 = vpop.f32.mrf.mxu0
        %v1793 = vadd.f32 0.0, %v1792
        %v1794 = vpop.f32.mrf.mxu0
        %v1795 = vadd.f32 0.0, %v1794
        %1796 = vmatmul.bf16.gmra.mxu0 %v1412
        %v1797 = vpop.f32.mrf.mxu0
        %v1798 = vadd.f32 0.0, %v1797
        %v1799 = vpop.f32.mrf.mxu0
        %v1800 = vadd.f32 0.0, %v1799
        %1801 = vmatmul.bf16.gmra.mxu0 %v1413
        %v1802 = vpop.f32.mrf.mxu0
        %v1803 = vadd.f32 0.0, %v1802
        %v1804 = vpop.f32.mrf.mxu0
        %v1805 = vadd.f32 0.0, %v1804
        %1806 = vdwg.mxu0
        %1807 = vmatpush.bf16.msra.mxu0 %v965
        %1808 = vmatpush.bf16.msra.mxu0 %v963
        %1809 = vmatpush.bf16.msra.mxu0 %v961
        %1810 = vmatpush.bf16.msra.mxu0 %v959
        %1811 = vmatpush.bf16.msra.mxu0 %v957
        %1812 = vmatpush.bf16.msra.mxu0 %v955
        %1813 = vmatpush.bf16.msra.mxu0 %v953
        %1814 = vmatpush.bf16.msra.mxu0 %v951
        %1815 = vmatmul.bf16.gmra.mxu0 %v1350
        %v1816 = vpop.f32.mrf.mxu0
        %v1817 = vadd.f32 0.0, %v1816
        %v1818 = vpop.f32.mrf.mxu0
        %v1819 = vadd.f32 0.0, %v1818
        %1820 = vmatmul.bf16.gmra.mxu0 %v1351
        %v1821 = vpop.f32.mrf.mxu0
        %v1822 = vadd.f32 0.0, %v1821
        %v1823 = vpop.f32.mrf.mxu0
        %v1824 = vadd.f32 0.0, %v1823
        %1825 = vmatmul.bf16.gmra.mxu0 %v1352
        %v1826 = vpop.f32.mrf.mxu0
        %v1827 = vadd.f32 0.0, %v1826
        %v1828 = vpop.f32.mrf.mxu0
        %v1829 = vadd.f32 0.0, %v1828
        %1830 = vmatmul.bf16.gmra.mxu0 %v1353
        %v1831 = vpop.f32.mrf.mxu0
        %v1832 = vadd.f32 0.0, %v1831
        %v1833 = vpop.f32.mrf.mxu0
        %v1834 = vadd.f32 0.0, %v1833
        %1835 = vmatmul.bf16.gmra.mxu0 %v1354
        %v1836 = vpop.f32.mrf.mxu0
        %v1837 = vadd.f32 0.0, %v1836
        %v1838 = vpop.f32.mrf.mxu0
        %v1839 = vadd.f32 0.0, %v1838
        %1840 = vmatmul.bf16.gmra.mxu0 %v1355
        %v1841 = vpop.f32.mrf.mxu0
        %v1842 = vadd.f32 0.0, %v1841
        %v1843 = vpop.f32.mrf.mxu0
        %v1844 = vadd.f32 0.0, %v1843
        %1845 = vmatmul.bf16.gmra.mxu0 %v1356
        %v1846 = vpop.f32.mrf.mxu0
        %v1847 = vadd.f32 0.0, %v1846
        %v1848 = vpop.f32.mrf.mxu0
        %v1849 = vadd.f32 0.0, %v1848
        %1850 = vmatmul.bf16.gmra.mxu0 %v1357
        %v1851 = vpop.f32.mrf.mxu0
        %v1852 = vadd.f32 0.0, %v1851
        %v1853 = vpop.f32.mrf.mxu0
        %v1854 = vadd.f32 0.0, %v1853
        %1855 = vmatmul.bf16.gmra.mxu0 %v1358
        %v1856 = vpop.f32.mrf.mxu0
        %v1857 = vadd.f32 0.0, %v1856
        %v1858 = vpop.f32.mrf.mxu0
        %v1859 = vadd.f32 0.0, %v1858
        %1860 = vmatmul.bf16.gmra.mxu0 %v1359
        %v1861 = vpop.f32.mrf.mxu0
        %v1862 = vadd.f32 0.0, %v1861
        %v1863 = vpop.f32.mrf.mxu0
        %v1864 = vadd.f32 0.0, %v1863
        %1865 = vmatmul.bf16.gmra.mxu0 %v1360
        %v1866 = vpop.f32.mrf.mxu0
        %v1867 = vadd.f32 0.0, %v1866
        %v1868 = vpop.f32.mrf.mxu0
        %v1869 = vadd.f32 0.0, %v1868
        %1870 = vmatmul.bf16.gmra.mxu0 %v1361
        %v1871 = vpop.f32.mrf.mxu0
        %v1872 = vadd.f32 0.0, %v1871
        %v1873 = vpop.f32.mrf.mxu0
        %v1874 = vadd.f32 0.0, %v1873
        %1875 = vmatmul.bf16.gmra.mxu0 %v1362
        %v1876 = vpop.f32.mrf.mxu0
        %v1877 = vadd.f32 0.0, %v1876
        %v1878 = vpop.f32.mrf.mxu0
        %v1879 = vadd.f32 0.0, %v1878
        %1880 = vmatmul.bf16.gmra.mxu0 %v1363
        %v1881 = vpop.f32.mrf.mxu0
        %v1882 = vadd.f32 0.0, %v1881
        %v1883 = vpop.f32.mrf.mxu0
        %v1884 = vadd.f32 0.0, %v1883
        %1885 = vmatmul.bf16.gmra.mxu0 %v1364
        %v1886 = vpop.f32.mrf.mxu0
        %v1887 = vadd.f32 0.0, %v1886
        %v1888 = vpop.f32.mrf.mxu0
        %v1889 = vadd.f32 0.0, %v1888
        %1890 = vmatmul.bf16.gmra.mxu0 %v1365
        %v1891 = vpop.f32.mrf.mxu0
        %v1892 = vadd.f32 0.0, %v1891
        %v1893 = vpop.f32.mrf.mxu0
        %v1894 = vadd.f32 0.0, %v1893
        %1895 = vmatmul.bf16.gmra.mxu0 %v1366
        %v1896 = vpop.f32.mrf.mxu0
        %v1897 = vadd.f32 0.0, %v1896
        %v1898 = vpop.f32.mrf.mxu0
        %v1899 = vadd.f32 0.0, %v1898
        %1900 = vmatmul.bf16.gmra.mxu0 %v1367
        %v1901 = vpop.f32.mrf.mxu0
        %v1902 = vadd.f32 0.0, %v1901
        %v1903 = vpop.f32.mrf.mxu0
        %v1904 = vadd.f32 0.0, %v1903
        %1905 = vmatmul.bf16.gmra.mxu0 %v1368
        %v1906 = vpop.f32.mrf.mxu0
        %v1907 = vadd.f32 0.0, %v1906
        %v1908 = vpop.f32.mrf.mxu0
        %v1909 = vadd.f32 0.0, %v1908
        %1910 = vmatmul.bf16.gmra.mxu0 %v1369
        %v1911 = vpop.f32.mrf.mxu0
        %v1912 = vadd.f32 0.0, %v1911
        %v1913 = vpop.f32.mrf.mxu0
        %v1914 = vadd.f32 0.0, %v1913
        %1915 = vmatmul.bf16.gmra.mxu0 %v1370
        %v1916 = vpop.f32.mrf.mxu0
        %v1917 = vadd.f32 0.0, %v1916
        %v1918 = vpop.f32.mrf.mxu0
        %v1919 = vadd.f32 0.0, %v1918
        %1920 = vmatmul.bf16.gmra.mxu0 %v1371
        %v1921 = vpop.f32.mrf.mxu0
        %v1922 = vadd.f32 0.0, %v1921
        %v1923 = vpop.f32.mrf.mxu0
        %v1924 = vadd.f32 0.0, %v1923
        %1925 = vmatmul.bf16.gmra.mxu0 %v1372
        %v1926 = vpop.f32.mrf.mxu0
        %v1927 = vadd.f32 0.0, %v1926
        %v1928 = vpop.f32.mrf.mxu0
        %v1929 = vadd.f32 0.0, %v1928
        %1930 = vmatmul.bf16.gmra.mxu0 %v1373
        %v1931 = vpop.f32.mrf.mxu0
        %v1932 = vadd.f32 0.0, %v1931
        %v1933 = vpop.f32.mrf.mxu0
        %v1934 = vadd.f32 0.0, %v1933
        %1935 = vmatmul.bf16.gmra.mxu0 %v1374
        %v1936 = vpop.f32.mrf.mxu0
        %v1937 = vadd.f32 0.0, %v1936
        %v1938 = vpop.f32.mrf.mxu0
        %v1939 = vadd.f32 0.0, %v1938
        %1940 = vmatmul.bf16.gmra.mxu0 %v1375
        %v1941 = vpop.f32.mrf.mxu0
        %v1942 = vadd.f32 0.0, %v1941
        %v1943 = vpop.f32.mrf.mxu0
        %v1944 = vadd.f32 0.0, %v1943
        %1945 = vmatmul.bf16.gmra.mxu0 %v1376
        %v1946 = vpop.f32.mrf.mxu0
        %v1947 = vadd.f32 0.0, %v1946
        %v1948 = vpop.f32.mrf.mxu0
        %v1949 = vadd.f32 0.0, %v1948
        %1950 = vmatmul.bf16.gmra.mxu0 %v1377
        %v1951 = vpop.f32.mrf.mxu0
        %v1952 = vadd.f32 0.0, %v1951
        %v1953 = vpop.f32.mrf.mxu0
        %v1954 = vadd.f32 0.0, %v1953
        %1955 = vmatmul.bf16.gmra.mxu0 %v1378
        %v1956 = vpop.f32.mrf.mxu0
        %v1957 = vadd.f32 0.0, %v1956
        %v1958 = vpop.f32.mrf.mxu0
        %v1959 = vadd.f32 0.0, %v1958
        %1960 = vmatmul.bf16.gmra.mxu0 %v1379
        %v1961 = vpop.f32.mrf.mxu0
        %v1962 = vadd.f32 0.0, %v1961
        %v1963 = vpop.f32.mrf.mxu0
        %v1964 = vadd.f32 0.0, %v1963
        %1965 = vmatmul.bf16.gmra.mxu0 %v1380
        %v1966 = vpop.f32.mrf.mxu0
        %v1967 = vadd.f32 0.0, %v1966
        %v1968 = vpop.f32.mrf.mxu0
        %v1969 = vadd.f32 0.0, %v1968
        %1970 = vmatmul.bf16.gmra.mxu0 %v1381
        %v1971 = vpop.f32.mrf.mxu0
        %v1972 = vadd.f32 0.0, %v1971
        %v1973 = vpop.f32.mrf.mxu0
        %v1974 = vadd.f32 0.0, %v1973
        %1975 = vmatmul.bf16.gmra.mxu0 %v1382
        %v1976 = vpop.f32.mrf.mxu0
        %v1977 = vadd.f32 0.0, %v1976
        %v1978 = vpop.f32.mrf.mxu0
        %v1979 = vadd.f32 0.0, %v1978
        %1980 = vmatmul.bf16.gmra.mxu0 %v1383
        %v1981 = vpop.f32.mrf.mxu0
        %v1982 = vadd.f32 0.0, %v1981
        %v1983 = vpop.f32.mrf.mxu0
        %v1984 = vadd.f32 0.0, %v1983
        %1985 = vmatmul.bf16.gmra.mxu0 %v1384
        %v1986 = vpop.f32.mrf.mxu0
        %v1987 = vadd.f32 0.0, %v1986
        %v1988 = vpop.f32.mrf.mxu0
        %v1989 = vadd.f32 0.0, %v1988
        %1990 = vmatmul.bf16.gmra.mxu0 %v1385
        %v1991 = vpop.f32.mrf.mxu0
        %v1992 = vadd.f32 0.0, %v1991
        %v1993 = vpop.f32.mrf.mxu0
        %v1994 = vadd.f32 0.0, %v1993
        %1995 = vmatmul.bf16.gmra.mxu0 %v1386
        %v1996 = vpop.f32.mrf.mxu0
        %v1997 = vadd.f32 0.0, %v1996
        %v1998 = vpop.f32.mrf.mxu0
        %v1999 = vadd.f32 0.0, %v1998
        %2000 = vmatmul.bf16.gmra.mxu0 %v1387
        %v2001 = vpop.f32.mrf.mxu0
        %v2002 = vadd.f32 0.0, %v2001
        %v2003 = vpop.f32.mrf.mxu0
        %v2004 = vadd.f32 0.0, %v2003
        %2005 = vmatmul.bf16.gmra.mxu0 %v1388
        %v2006 = vpop.f32.mrf.mxu0
        %v2007 = vadd.f32 0.0, %v2006
        %v2008 = vpop.f32.mrf.mxu0
        %v2009 = vadd.f32 0.0, %v2008
        %2010 = vmatmul.bf16.gmra.mxu0 %v1389
        %v2011 = vpop.f32.mrf.mxu0
        %v2012 = vadd.f32 0.0, %v2011
        %v2013 = vpop.f32.mrf.mxu0
        %v2014 = vadd.f32 0.0, %v2013
        %2015 = vmatmul.bf16.gmra.mxu0 %v1390
        %v2016 = vpop.f32.mrf.mxu0
        %v2017 = vadd.f32 0.0, %v2016
        %v2018 = vpop.f32.mrf.mxu0
        %v2019 = vadd.f32 0.0, %v2018
        %2020 = vmatmul.bf16.gmra.mxu0 %v1391
        %v2021 = vpop.f32.mrf.mxu0
        %v2022 = vadd.f32 0.0, %v2021
        %v2023 = vpop.f32.mrf.mxu0
        %v2024 = vadd.f32 0.0, %v2023
        %2025 = vmatmul.bf16.gmra.mxu0 %v1392
        %v2026 = vpop.f32.mrf.mxu0
        %v2027 = vadd.f32 0.0, %v2026
        %v2028 = vpop.f32.mrf.mxu0
        %v2029 = vadd.f32 0.0, %v2028
        %2030 = vmatmul.bf16.gmra.mxu0 %v1393
        %v2031 = vpop.f32.mrf.mxu0
        %v2032 = vadd.f32 0.0, %v2031
        %v2033 = vpop.f32.mrf.mxu0
        %v2034 = vadd.f32 0.0, %v2033
        %2035 = vmatmul.bf16.gmra.mxu0 %v1394
        %v2036 = vpop.f32.mrf.mxu0
        %v2037 = vadd.f32 0.0, %v2036
        %v2038 = vpop.f32.mrf.mxu0
        %v2039 = vadd.f32 0.0, %v2038
        %2040 = vmatmul.bf16.gmra.mxu0 %v1395
        %v2041 = vpop.f32.mrf.mxu0
        %v2042 = vadd.f32 0.0, %v2041
        %v2043 = vpop.f32.mrf.mxu0
        %v2044 = vadd.f32 0.0, %v2043
        %2045 = vmatmul.bf16.gmra.mxu0 %v1396
        %v2046 = vpop.f32.mrf.mxu0
        %v2047 = vadd.f32 0.0, %v2046
        %v2048 = vpop.f32.mrf.mxu0
        %v2049 = vadd.f32 0.0, %v2048
        %2050 = vmatmul.bf16.gmra.mxu0 %v1397
        %v2051 = vpop.f32.mrf.mxu0
        %v2052 = vadd.f32 0.0, %v2051
        %v2053 = vpop.f32.mrf.mxu0
        %v2054 = vadd.f32 0.0, %v2053
        %2055 = vmatmul.bf16.gmra.mxu0 %v1398
        %v2056 = vpop.f32.mrf.mxu0
        %v2057 = vadd.f32 0.0, %v2056
        %v2058 = vpop.f32.mrf.mxu0
        %v2059 = vadd.f32 0.0, %v2058
        %2060 = vmatmul.bf16.gmra.mxu0 %v1399
        %v2061 = vpop.f32.mrf.mxu0
        %v2062 = vadd.f32 0.0, %v2061
        %v2063 = vpop.f32.mrf.mxu0
        %v2064 = vadd.f32 0.0, %v2063
        %2065 = vmatmul.bf16.gmra.mxu0 %v1400
        %v2066 = vpop.f32.mrf.mxu0
        %v2067 = vadd.f32 0.0, %v2066
        %v2068 = vpop.f32.mrf.mxu0
        %v2069 = vadd.f32 0.0, %v2068
        %2070 = vmatmul.bf16.gmra.mxu0 %v1401
        %v2071 = vpop.f32.mrf.mxu0
        %v2072 = vadd.f32 0.0, %v2071
        %v2073 = vpop.f32.mrf.mxu0
        %v2074 = vadd.f32 0.0, %v2073
        %2075 = vmatmul.bf16.gmra.mxu0 %v1402
        %v2076 = vpop.f32.mrf.mxu0
        %v2077 = vadd.f32 0.0, %v2076
        %v2078 = vpop.f32.mrf.mxu0
        %v2079 = vadd.f32 0.0, %v2078
        %2080 = vmatmul.bf16.gmra.mxu0 %v1403
        %v2081 = vpop.f32.mrf.mxu0
        %v2082 = vadd.f32 0.0, %v2081
        %v2083 = vpop.f32.mrf.mxu0
        %v2084 = vadd.f32 0.0, %v2083
        %2085 = vmatmul.bf16.gmra.mxu0 %v1404
        %v2086 = vpop.f32.mrf.mxu0
        %v2087 = vadd.f32 0.0, %v2086
        %v2088 = vpop.f32.mrf.mxu0
        %v2089 = vadd.f32 0.0, %v2088
        %2090 = vmatmul.bf16.gmra.mxu0 %v1405
        %v2091 = vpop.f32.mrf.mxu0
        %v2092 = vadd.f32 0.0, %v2091
        %v2093 = vpop.f32.mrf.mxu0
        %v2094 = vadd.f32 0.0, %v2093
        %2095 = vmatmul.bf16.gmra.mxu0 %v1406
        %v2096 = vpop.f32.mrf.mxu0
        %v2097 = vadd.f32 0.0, %v2096
        %v2098 = vpop.f32.mrf.mxu0
        %v2099 = vadd.f32 0.0, %v2098
        %2100 = vmatmul.bf16.gmra.mxu0 %v1407
        %v2101 = vpop.f32.mrf.mxu0
        %v2102 = vadd.f32 0.0, %v2101
        %v2103 = vpop.f32.mrf.mxu0
        %v2104 = vadd.f32 0.0, %v2103
        %2105 = vmatmul.bf16.gmra.mxu0 %v1408
        %v2106 = vpop.f32.mrf.mxu0
        %v2107 = vadd.f32 0.0, %v2106
        %v2108 = vpop.f32.mrf.mxu0
        %v2109 = vadd.f32 0.0, %v2108
        %2110 = vmatmul.bf16.gmra.mxu0 %v1409
        %v2111 = vpop.f32.mrf.mxu0
        %v2112 = vadd.f32 0.0, %v2111
        %v2113 = vpop.f32.mrf.mxu0
        %v2114 = vadd.f32 0.0, %v2113
        %2115 = vmatmul.bf16.gmra.mxu0 %v1410
        %v2116 = vpop.f32.mrf.mxu0
        %v2117 = vadd.f32 0.0, %v2116
        %v2118 = vpop.f32.mrf.mxu0
        %v2119 = vadd.f32 0.0, %v2118
        %2120 = vmatmul.bf16.gmra.mxu0 %v1411
        %v2121 = vpop.f32.mrf.mxu0
        %v2122 = vadd.f32 0.0, %v2121
        %v2123 = vpop.f32.mrf.mxu0
        %v2124 = vadd.f32 0.0, %v2123
        %2125 = vmatmul.bf16.gmra.mxu0 %v1412
        %v2126 = vpop.f32.mrf.mxu0
        %v2127 = vadd.f32 0.0, %v2126
        %v2128 = vpop.f32.mrf.mxu0
        %v2129 = vadd.f32 0.0, %v2128
        %2130 = vmatmul.bf16.gmra.mxu0 %v1413
        %v2131 = vpop.f32.mrf.mxu0
        %v2132 = vadd.f32 0.0, %v2131
        %v2133 = vpop.f32.mrf.mxu0
        %v2134 = vadd.f32 0.0, %v2133
        %2135 = vdwg.mxu0
        %p2136 = scmp.ne.s32.totalorder %s23, 1
        // Predicated region
        $region91: #{tpu_custom_call.1} parent=77 // pred_check
          %p2137 = pneg %p2136
        $region92: #{tpu_custom_call.1} parent=77 // pred_check_branch
          %2139 = sbr.rel (%p2137) target = $region94
        $region93: #{tpu_custom_call.1} parent=77 // pred_region
          %v2140 = vld [vmem:[%s325] sm:$0xff]
          %v2141 = vld [vmem:[%s325 + $0x8] sm:$0xff]
          %v2142 = vld [vmem:[%s325 + $0x10] sm:$0xff]
          %v2143 = vld [vmem:[%s325 + $0x18] sm:$0xff]
          %v2144 = vld [vmem:[%s325 + $0x20] sm:$0xff]
          %v2145 = vld [vmem:[%s325 + $0x28] sm:$0xff]
          %v2146 = vld [vmem:[%s325 + $0x30] sm:$0xff]
          %v2147 = vld [vmem:[%s325 + $0x38] sm:$0xff]
          %v2148 = vld [vmem:[%s325 + $0x40] sm:$0xff]
          %v2149 = vld [vmem:[%s325 + $0x48] sm:$0xff]
          %v2150 = vld [vmem:[%s325 + $0x50] sm:$0xff]
          %v2151 = vld [vmem:[%s325 + $0x58] sm:$0xff]
          %v2152 = vld [vmem:[%s325 + $0x60] sm:$0xff]
          %v2153 = vld [vmem:[%s325 + $0x68] sm:$0xff]
          %v2154 = vld [vmem:[%s325 + $0x70] sm:$0xff]
          %v2155 = vld [vmem:[%s325 + $0x78] sm:$0xff]
          %v2156 = vld [vmem:[%s325 + $0x80] sm:$0xff]
          %v2157 = vld [vmem:[%s325 + $0x88] sm:$0xff]
          %v2158 = vld [vmem:[%s325 + $0x90] sm:$0xff]
          %v2159 = vld [vmem:[%s325 + $0x98] sm:$0xff]
          %v2160 = vld [vmem:[%s325 + $0xa0] sm:$0xff]
          %v2161 = vld [vmem:[%s325 + $0xa8] sm:$0xff]
          %v2162 = vld [vmem:[%s325 + $0xb0] sm:$0xff]
          %v2163 = vld [vmem:[%s325 + $0xb8] sm:$0xff]
          %v2164 = vld [vmem:[%s325 + $0xc0] sm:$0xff]
          %v2165 = vld [vmem:[%s325 + $0xc8] sm:$0xff]
          %v2166 = vld [vmem:[%s325 + $0xd0] sm:$0xff]
          %v2167 = vld [vmem:[%s325 + $0xd8] sm:$0xff]
          %v2168 = vld [vmem:[%s325 + $0xe0] sm:$0xff]
          %v2169 = vld [vmem:[%s325 + $0xe8] sm:$0xff]
          %v2170 = vld [vmem:[%s325 + $0xf0] sm:$0xff]
          %v2171 = vld [vmem:[%s325 + $0xf8] sm:$0xff]
          %v2172 = vld [vmem:[%s325 + $0x100] sm:$0xff]
          %v2173 = vld [vmem:[%s325 + $0x108] sm:$0xff]
          %v2174 = vld [vmem:[%s325 + $0x110] sm:$0xff]
          %v2175 = vld [vmem:[%s325 + $0x118] sm:$0xff]
          %v2176 = vld [vmem:[%s325 + $0x120] sm:$0xff]
          %v2177 = vld [vmem:[%s325 + $0x128] sm:$0xff]
          %v2178 = vld [vmem:[%s325 + $0x130] sm:$0xff]
          %v2179 = vld [vmem:[%s325 + $0x138] sm:$0xff]
          %v2180 = vld [vmem:[%s325 + $0x140] sm:$0xff]
          %v2181 = vld [vmem:[%s325 + $0x148] sm:$0xff]
          %v2182 = vld [vmem:[%s325 + $0x150] sm:$0xff]
          %v2183 = vld [vmem:[%s325 + $0x158] sm:$0xff]
          %v2184 = vld [vmem:[%s325 + $0x160] sm:$0xff]
          %v2185 = vld [vmem:[%s325 + $0x168] sm:$0xff]
          %v2186 = vld [vmem:[%s325 + $0x170] sm:$0xff]
          %v2187 = vld [vmem:[%s325 + $0x178] sm:$0xff]
          %v2188 = vld [vmem:[%s325 + $0x180] sm:$0xff]
          %v2189 = vld [vmem:[%s325 + $0x188] sm:$0xff]
          %v2190 = vld [vmem:[%s325 + $0x190] sm:$0xff]
          %v2191 = vld [vmem:[%s325 + $0x198] sm:$0xff]
          %v2192 = vld [vmem:[%s325 + $0x1a0] sm:$0xff]
          %v2193 = vld [vmem:[%s325 + $0x1a8] sm:$0xff]
          %v2194 = vld [vmem:[%s325 + $0x1b0] sm:$0xff]
          %v2195 = vld [vmem:[%s325 + $0x1b8] sm:$0xff]
          %v2196 = vld [vmem:[%s325 + $0x1c0] sm:$0xff]
          %v2197 = vld [vmem:[%s325 + $0x1c8] sm:$0xff]
          %v2198 = vld [vmem:[%s325 + $0x1d0] sm:$0xff]
          %v2199 = vld [vmem:[%s325 + $0x1d8] sm:$0xff]
          %v2200 = vld [vmem:[%s325 + $0x1e0] sm:$0xff]
          %v2201 = vld [vmem:[%s325 + $0x1e8] sm:$0xff]
          %v2202 = vld [vmem:[%s325 + $0x1f0] sm:$0xff]
          %v2203 = vld [vmem:[%s325 + $0x1f8] sm:$0xff]
          %v2204 = vld [vmem:[%s325 + $0x200] sm:$0xff]
          %v2205 = vld [vmem:[%s325 + $0x208] sm:$0xff]
          %v2206 = vld [vmem:[%s325 + $0x210] sm:$0xff]
          %v2207 = vld [vmem:[%s325 + $0x218] sm:$0xff]
          %v2208 = vld [vmem:[%s325 + $0x220] sm:$0xff]
          %v2209 = vld [vmem:[%s325 + $0x228] sm:$0xff]
          %v2210 = vld [vmem:[%s325 + $0x230] sm:$0xff]
          %v2211 = vld [vmem:[%s325 + $0x238] sm:$0xff]
          %v2212 = vld [vmem:[%s325 + $0x240] sm:$0xff]
          %v2213 = vld [vmem:[%s325 + $0x248] sm:$0xff]
          %v2214 = vld [vmem:[%s325 + $0x250] sm:$0xff]
          %v2215 = vld [vmem:[%s325 + $0x258] sm:$0xff]
          %v2216 = vld [vmem:[%s325 + $0x260] sm:$0xff]
          %v2217 = vld [vmem:[%s325 + $0x268] sm:$0xff]
          %v2218 = vld [vmem:[%s325 + $0x270] sm:$0xff]
          %v2219 = vld [vmem:[%s325 + $0x278] sm:$0xff]
          %v2220 = vld [vmem:[%s325 + $0x280] sm:$0xff]
          %v2221 = vld [vmem:[%s325 + $0x288] sm:$0xff]
          %v2222 = vld [vmem:[%s325 + $0x290] sm:$0xff]
          %v2223 = vld [vmem:[%s325 + $0x298] sm:$0xff]
          %v2224 = vld [vmem:[%s325 + $0x2a0] sm:$0xff]
          %v2225 = vld [vmem:[%s325 + $0x2a8] sm:$0xff]
          %v2226 = vld [vmem:[%s325 + $0x2b0] sm:$0xff]
          %v2227 = vld [vmem:[%s325 + $0x2b8] sm:$0xff]
          %v2228 = vld [vmem:[%s325 + $0x2c0] sm:$0xff]
          %v2229 = vld [vmem:[%s325 + $0x2c8] sm:$0xff]
          %v2230 = vld [vmem:[%s325 + $0x2d0] sm:$0xff]
          %v2231 = vld [vmem:[%s325 + $0x2d8] sm:$0xff]
          %v2232 = vld [vmem:[%s325 + $0x2e0] sm:$0xff]
          %v2233 = vld [vmem:[%s325 + $0x2e8] sm:$0xff]
          %v2234 = vld [vmem:[%s325 + $0x2f0] sm:$0xff]
          %v2235 = vld [vmem:[%s325 + $0x2f8] sm:$0xff]
          %v2236 = vld [vmem:[%s325 + $0x300] sm:$0xff]
          %v2237 = vld [vmem:[%s325 + $0x308] sm:$0xff]
          %v2238 = vld [vmem:[%s325 + $0x310] sm:$0xff]
          %v2239 = vld [vmem:[%s325 + $0x318] sm:$0xff]
          %v2240 = vld [vmem:[%s325 + $0x320] sm:$0xff]
          %v2241 = vld [vmem:[%s325 + $0x328] sm:$0xff]
          %v2242 = vld [vmem:[%s325 + $0x330] sm:$0xff]
          %v2243 = vld [vmem:[%s325 + $0x338] sm:$0xff]
          %v2244 = vld [vmem:[%s325 + $0x340] sm:$0xff]
          %v2245 = vld [vmem:[%s325 + $0x348] sm:$0xff]
          %v2246 = vld [vmem:[%s325 + $0x350] sm:$0xff]
          %v2247 = vld [vmem:[%s325 + $0x358] sm:$0xff]
          %v2248 = vld [vmem:[%s325 + $0x360] sm:$0xff]
          %v2249 = vld [vmem:[%s325 + $0x368] sm:$0xff]
          %v2250 = vld [vmem:[%s325 + $0x370] sm:$0xff]
          %v2251 = vld [vmem:[%s325 + $0x378] sm:$0xff]
          %v2252 = vld [vmem:[%s325 + $0x380] sm:$0xff]
          %v2253 = vld [vmem:[%s325 + $0x388] sm:$0xff]
          %v2254 = vld [vmem:[%s325 + $0x390] sm:$0xff]
          %v2255 = vld [vmem:[%s325 + $0x398] sm:$0xff]
          %v2256 = vld [vmem:[%s325 + $0x3a0] sm:$0xff]
          %v2257 = vld [vmem:[%s325 + $0x3a8] sm:$0xff]
          %v2258 = vld [vmem:[%s325 + $0x3b0] sm:$0xff]
          %v2259 = vld [vmem:[%s325 + $0x3b8] sm:$0xff]
          %v2260 = vld [vmem:[%s325 + $0x3c0] sm:$0xff]
          %v2261 = vld [vmem:[%s325 + $0x3c8] sm:$0xff]
          %v2262 = vld [vmem:[%s325 + $0x3d0] sm:$0xff]
          %v2263 = vld [vmem:[%s325 + $0x3d8] sm:$0xff]
          %v2264 = vld [vmem:[%s325 + $0x3e0] sm:$0xff]
          %v2265 = vld [vmem:[%s325 + $0x3e8] sm:$0xff]
          %v2266 = vld [vmem:[%s325 + $0x3f0] sm:$0xff]
          %v2267 = vld [vmem:[%s325 + $0x3f8] sm:$0xff]
          %v2268 = vmax.f32 %v1488, %v1817
          %2269 = vmax.xlane.f32.xlu0 %v2268
          %v2270 = vpop.xlane.xlu0 %2269
          %v2271 = vmax.f32 %v1490, %v1819
          %2272 = vmax.xlane.f32.xlu0 %v2271
          %v2273 = vpop.xlane.xlu0 %2272
          %v2274 = vmax.f32 %v1493, %v1822
          %2275 = vmax.xlane.f32.xlu0 %v2274
          %v2276 = vpop.xlane.xlu0 %2275
          %v2277 = vmax.f32 %v1495, %v1824
          %2278 = vmax.xlane.f32.xlu0 %v2277
          %v2279 = vpop.xlane.xlu0 %2278
          %v2280 = vmax.f32 %v1498, %v1827
          %2281 = vmax.xlane.f32.xlu0 %v2280
          %v2282 = vpop.xlane.xlu0 %2281
          %v2283 = vmax.f32 %v1500, %v1829
          %2284 = vmax.xlane.f32.xlu0 %v2283
          %v2285 = vpop.xlane.xlu0 %2284
          %v2286 = vmax.f32 %v1503, %v1832
          %2287 = vmax.xlane.f32.xlu0 %v2286
          %v2288 = vpop.xlane.xlu0 %2287
          %v2289 = vmax.f32 %v1505, %v1834
          %2290 = vmax.xlane.f32.xlu0 %v2289
          %v2291 = vpop.xlane.xlu0 %2290
          %v2292 = vmax.f32 %v1508, %v1837
          %2293 = vmax.xlane.f32.xlu0 %v2292
          %v2294 = vpop.xlane.xlu0 %2293
          %v2295 = vmax.f32 %v1510, %v1839
          %2296 = vmax.xlane.f32.xlu0 %v2295
          %v2297 = vpop.xlane.xlu0 %2296
          %v2298 = vmax.f32 %v1513, %v1842
          %2299 = vmax.xlane.f32.xlu0 %v2298
          %v2300 = vpop.xlane.xlu0 %2299
          %v2301 = vmax.f32 %v1515, %v1844
          %2302 = vmax.xlane.f32.xlu0 %v2301
          %v2303 = vpop.xlane.xlu0 %2302
          %v2304 = vmax.f32 %v1518, %v1847
          %2305 = vmax.xlane.f32.xlu0 %v2304
          %v2306 = vpop.xlane.xlu0 %2305
          %v2307 = vmax.f32 %v1520, %v1849
          %2308 = vmax.xlane.f32.xlu0 %v2307
          %v2309 = vpop.xlane.xlu0 %2308
          %v2310 = vmax.f32 %v1523, %v1852
          %2311 = vmax.xlane.f32.xlu0 %v2310
          %v2312 = vpop.xlane.xlu0 %2311
          %v2313 = vmax.f32 %v1525, %v1854
          %2314 = vmax.xlane.f32.xlu0 %v2313
          %v2315 = vpop.xlane.xlu0 %2314
          %v2316 = vmax.f32 %v1528, %v1857
          %2317 = vmax.xlane.f32.xlu0 %v2316
          %v2318 = vpop.xlane.xlu0 %2317
          %v2319 = vmax.f32 %v1530, %v1859
          %2320 = vmax.xlane.f32.xlu0 %v2319
          %v2321 = vpop.xlane.xlu0 %2320
          %v2322 = vmax.f32 %v1533, %v1862
          %2323 = vmax.xlane.f32.xlu0 %v2322
          %v2324 = vpop.xlane.xlu0 %2323
          %v2325 = vmax.f32 %v1535, %v1864
          %2326 = vmax.xlane.f32.xlu0 %v2325
          %v2327 = vpop.xlane.xlu0 %2326
          %v2328 = vmax.f32 %v1538, %v1867
          %2329 = vmax.xlane.f32.xlu0 %v2328
          %v2330 = vpop.xlane.xlu0 %2329
          %v2331 = vmax.f32 %v1540, %v1869
          %2332 = vmax.xlane.f32.xlu0 %v2331
          %v2333 = vpop.xlane.xlu0 %2332
          %v2334 = vmax.f32 %v1543, %v1872
          %2335 = vmax.xlane.f32.xlu0 %v2334
          %v2336 = vpop.xlane.xlu0 %2335
          %v2337 = vmax.f32 %v1545, %v1874
          %2338 = vmax.xlane.f32.xlu0 %v2337
          %v2339 = vpop.xlane.xlu0 %2338
          %v2340 = vmax.f32 %v1548, %v1877
          %2341 = vmax.xlane.f32.xlu0 %v2340
          %v2342 = vpop.xlane.xlu0 %2341
          %v2343 = vmax.f32 %v1550, %v1879
          %2344 = vmax.xlane.f32.xlu0 %v2343
          %v2345 = vpop.xlane.xlu0 %2344
          %v2346 = vmax.f32 %v1553, %v1882
          %2347 = vmax.xlane.f32.xlu0 %v2346
          %v2348 = vpop.xlane.xlu0 %2347
          %v2349 = vmax.f32 %v1555, %v1884
          %2350 = vmax.xlane.f32.xlu0 %v2349
          %v2351 = vpop.xlane.xlu0 %2350
          %v2352 = vmax.f32 %v1558, %v1887
          %2353 = vmax.xlane.f32.xlu0 %v2352
          %v2354 = vpop.xlane.xlu0 %2353
          %v2355 = vmax.f32 %v1560, %v1889
          %2356 = vmax.xlane.f32.xlu0 %v2355
          %v2357 = vpop.xlane.xlu0 %2356
          %v2358 = vmax.f32 %v1563, %v1892
          %2359 = vmax.xlane.f32.xlu0 %v2358
          %v2360 = vpop.xlane.xlu0 %2359
          %v2361 = vmax.f32 %v1565, %v1894
          %2362 = vmax.xlane.f32.xlu0 %v2361
          %v2363 = vpop.xlane.xlu0 %2362
          %v2364 = vmax.f32 %v1568, %v1897
          %2365 = vmax.xlane.f32.xlu0 %v2364
          %v2366 = vpop.xlane.xlu0 %2365
          %v2367 = vmax.f32 %v1570, %v1899
          %2368 = vmax.xlane.f32.xlu0 %v2367
          %v2369 = vpop.xlane.xlu0 %2368
          %v2370 = vmax.f32 %v1573, %v1902
          %2371 = vmax.xlane.f32.xlu0 %v2370
          %v2372 = vpop.xlane.xlu0 %2371
          %v2373 = vmax.f32 %v1575, %v1904
          %2374 = vmax.xlane.f32.xlu0 %v2373
          %v2375 = vpop.xlane.xlu0 %2374
          %v2376 = vmax.f32 %v1578, %v1907
          %2377 = vmax.xlane.f32.xlu0 %v2376
          %v2378 = vpop.xlane.xlu0 %2377
          %v2379 = vmax.f32 %v1580, %v1909
          %2380 = vmax.xlane.f32.xlu0 %v2379
          %v2381 = vpop.xlane.xlu0 %2380
          %v2382 = vmax.f32 %v1583, %v1912
          %2383 = vmax.xlane.f32.xlu0 %v2382
          %v2384 = vpop.xlane.xlu0 %2383
          %v2385 = vmax.f32 %v1585, %v1914
          %2386 = vmax.xlane.f32.xlu0 %v2385
          %v2387 = vpop.xlane.xlu0 %2386
          %v2388 = vmax.f32 %v1588, %v1917
          %2389 = vmax.xlane.f32.xlu0 %v2388
          %v2390 = vpop.xlane.xlu0 %2389
          %v2391 = vmax.f32 %v1590, %v1919
          %2392 = vmax.xlane.f32.xlu0 %v2391
          %v2393 = vpop.xlane.xlu0 %2392
          %v2394 = vmax.f32 %v1593, %v1922
          %2395 = vmax.xlane.f32.xlu0 %v2394
          %v2396 = vpop.xlane.xlu0 %2395
          %v2397 = vmax.f32 %v1595, %v1924
          %2398 = vmax.xlane.f32.xlu0 %v2397
          %v2399 = vpop.xlane.xlu0 %2398
          %v2400 = vmax.f32 %v1598, %v1927
          %2401 = vmax.xlane.f32.xlu0 %v2400
          %v2402 = vpop.xlane.xlu0 %2401
          %v2403 = vmax.f32 %v1600, %v1929
          %2404 = vmax.xlane.f32.xlu0 %v2403
          %v2405 = vpop.xlane.xlu0 %2404
          %v2406 = vmax.f32 %v1603, %v1932
          %2407 = vmax.xlane.f32.xlu0 %v2406
          %v2408 = vpop.xlane.xlu0 %2407
          %v2409 = vmax.f32 %v1605, %v1934
          %2410 = vmax.xlane.f32.xlu0 %v2409
          %v2411 = vpop.xlane.xlu0 %2410
          %v2412 = vmax.f32 %v1608, %v1937
          %2413 = vmax.xlane.f32.xlu0 %v2412
          %v2414 = vpop.xlane.xlu0 %2413
          %v2415 = vmax.f32 %v1610, %v1939
          %2416 = vmax.xlane.f32.xlu0 %v2415
          %v2417 = vpop.xlane.xlu0 %2416
          %v2418 = vmax.f32 %v1613, %v1942
          %2419 = vmax.xlane.f32.xlu0 %v2418
          %v2420 = vpop.xlane.xlu0 %2419
          %v2421 = vmax.f32 %v1615, %v1944
          %2422 = vmax.xlane.f32.xlu0 %v2421
          %v2423 = vpop.xlane.xlu0 %2422
          %v2424 = vmax.f32 %v1618, %v1947
          %2425 = vmax.xlane.f32.xlu0 %v2424
          %v2426 = vpop.xlane.xlu0 %2425
          %v2427 = vmax.f32 %v1620, %v1949
          %2428 = vmax.xlane.f32.xlu0 %v2427
          %v2429 = vpop.xlane.xlu0 %2428
          %v2430 = vmax.f32 %v1623, %v1952
          %2431 = vmax.xlane.f32.xlu0 %v2430
          %v2432 = vpop.xlane.xlu0 %2431
          %v2433 = vmax.f32 %v1625, %v1954
          %2434 = vmax.xlane.f32.xlu0 %v2433
          %v2435 = vpop.xlane.xlu0 %2434
          %v2436 = vmax.f32 %v1628, %v1957
          %2437 = vmax.xlane.f32.xlu0 %v2436
          %v2438 = vpop.xlane.xlu0 %2437
          %v2439 = vmax.f32 %v1630, %v1959
          %2440 = vmax.xlane.f32.xlu0 %v2439
          %v2441 = vpop.xlane.xlu0 %2440
          %v2442 = vmax.f32 %v1633, %v1962
          %2443 = vmax.xlane.f32.xlu0 %v2442
          %v2444 = vpop.xlane.xlu0 %2443
          %v2445 = vmax.f32 %v1635, %v1964
          %2446 = vmax.xlane.f32.xlu0 %v2445
          %v2447 = vpop.xlane.xlu0 %2446
          %v2448 = vmax.f32 %v1638, %v1967
          %2449 = vmax.xlane.f32.xlu0 %v2448
          %v2450 = vpop.xlane.xlu0 %2449
          %v2451 = vmax.f32 %v1640, %v1969
          %2452 = vmax.xlane.f32.xlu0 %v2451
          %v2453 = vpop.xlane.xlu0 %2452
          %v2454 = vmax.f32 %v1643, %v1972
          %2455 = vmax.xlane.f32.xlu0 %v2454
          %v2456 = vpop.xlane.xlu0 %2455
          %v2457 = vmax.f32 %v1645, %v1974
          %2458 = vmax.xlane.f32.xlu0 %v2457
          %v2459 = vpop.xlane.xlu0 %2458
          %v2460 = vmax.f32 %v1648, %v1977
          %2461 = vmax.xlane.f32.xlu0 %v2460
          %v2462 = vpop.xlane.xlu0 %2461
          %v2463 = vmax.f32 %v1650, %v1979
          %2464 = vmax.xlane.f32.xlu0 %v2463
          %v2465 = vpop.xlane.xlu0 %2464
          %v2466 = vmax.f32 %v1653, %v1982
          %2467 = vmax.xlane.f32.xlu0 %v2466
          %v2468 = vpop.xlane.xlu0 %2467
          %v2469 = vmax.f32 %v1655, %v1984
          %2470 = vmax.xlane.f32.xlu0 %v2469
          %v2471 = vpop.xlane.xlu0 %2470
          %v2472 = vmax.f32 %v1658, %v1987
          %2473 = vmax.xlane.f32.xlu0 %v2472
          %v2474 = vpop.xlane.xlu0 %2473
          %v2475 = vmax.f32 %v1660, %v1989
          %2476 = vmax.xlane.f32.xlu0 %v2475
          %v2477 = vpop.xlane.xlu0 %2476
          %v2478 = vmax.f32 %v1663, %v1992
          %2479 = vmax.xlane.f32.xlu0 %v2478
          %v2480 = vpop.xlane.xlu0 %2479
          %v2481 = vmax.f32 %v1665, %v1994
          %2482 = vmax.xlane.f32.xlu0 %v2481
          %v2483 = vpop.xlane.xlu0 %2482
          %v2484 = vmax.f32 %v1668, %v1997
          %2485 = vmax.xlane.f32.xlu0 %v2484
          %v2486 = vpop.xlane.xlu0 %2485
          %v2487 = vmax.f32 %v1670, %v1999
          %2488 = vmax.xlane.f32.xlu0 %v2487
          %v2489 = vpop.xlane.xlu0 %2488
          %v2490 = vmax.f32 %v1673, %v2002
          %2491 = vmax.xlane.f32.xlu0 %v2490
          %v2492 = vpop.xlane.xlu0 %2491
          %v2493 = vmax.f32 %v1675, %v2004
          %2494 = vmax.xlane.f32.xlu0 %v2493
          %v2495 = vpop.xlane.xlu0 %2494
          %v2496 = vmax.f32 %v1678, %v2007
          %2497 = vmax.xlane.f32.xlu0 %v2496
          %v2498 = vpop.xlane.xlu0 %2497
          %v2499 = vmax.f32 %v1680, %v2009
          %2500 = vmax.xlane.f32.xlu0 %v2499
          %v2501 = vpop.xlane.xlu0 %2500
          %v2502 = vmax.f32 %v1683, %v2012
          %2503 = vmax.xlane.f32.xlu0 %v2502
          %v2504 = vpop.xlane.xlu0 %2503
          %v2505 = vmax.f32 %v1685, %v2014
          %2506 = vmax.xlane.f32.xlu0 %v2505
          %v2507 = vpop.xlane.xlu0 %2506
          %v2508 = vmax.f32 %v1688, %v2017
          %2509 = vmax.xlane.f32.xlu0 %v2508
          %v2510 = vpop.xlane.xlu0 %2509
          %v2511 = vmax.f32 %v1690, %v2019
          %2512 = vmax.xlane.f32.xlu0 %v2511
          %v2513 = vpop.xlane.xlu0 %2512
          %v2514 = vmax.f32 %v1693, %v2022
          %2515 = vmax.xlane.f32.xlu0 %v2514
          %v2516 = vpop.xlane.xlu0 %2515
          %v2517 = vmax.f32 %v1695, %v2024
          %2518 = vmax.xlane.f32.xlu0 %v2517
          %v2519 = vpop.xlane.xlu0 %2518
          %v2520 = vmax.f32 %v1698, %v2027
          %2521 = vmax.xlane.f32.xlu0 %v2520
          %v2522 = vpop.xlane.xlu0 %2521
          %v2523 = vmax.f32 %v1700, %v2029
          %2524 = vmax.xlane.f32.xlu0 %v2523
          %v2525 = vpop.xlane.xlu0 %2524
          %v2526 = vmax.f32 %v1703, %v2032
          %2527 = vmax.xlane.f32.xlu0 %v2526
          %v2528 = vpop.xlane.xlu0 %2527
          %v2529 = vmax.f32 %v1705, %v2034
          %2530 = vmax.xlane.f32.xlu0 %v2529
          %v2531 = vpop.xlane.xlu0 %2530
          %v2532 = vmax.f32 %v1708, %v2037
          %2533 = vmax.xlane.f32.xlu0 %v2532
          %v2534 = vpop.xlane.xlu0 %2533
          %v2535 = vmax.f32 %v1710, %v2039
          %2536 = vmax.xlane.f32.xlu0 %v2535
          %v2537 = vpop.xlane.xlu0 %2536
          %v2538 = vmax.f32 %v1713, %v2042
          %2539 = vmax.xlane.f32.xlu0 %v2538
          %v2540 = vpop.xlane.xlu0 %2539
          %v2541 = vmax.f32 %v1715, %v2044
          %2542 = vmax.xlane.f32.xlu0 %v2541
          %v2543 = vpop.xlane.xlu0 %2542
          %v2544 = vmax.f32 %v1718, %v2047
          %2545 = vmax.xlane.f32.xlu0 %v2544
          %v2546 = vpop.xlane.xlu0 %2545
          %v2547 = vmax.f32 %v1720, %v2049
          %2548 = vmax.xlane.f32.xlu0 %v2547
          %v2549 = vpop.xlane.xlu0 %2548
          %v2550 = vmax.f32 %v1723, %v2052
          %2551 = vmax.xlane.f32.xlu0 %v2550
          %v2552 = vpop.xlane.xlu0 %2551
          %v2553 = vmax.f32 %v1725, %v2054
          %2554 = vmax.xlane.f32.xlu0 %v2553
          %v2555 = vpop.xlane.xlu0 %2554
          %v2556 = vmax.f32 %v1728, %v2057
          %2557 = vmax.xlane.f32.xlu0 %v2556
          %v2558 = vpop.xlane.xlu0 %2557
          %v2559 = vmax.f32 %v1730, %v2059
          %2560 = vmax.xlane.f32.xlu0 %v2559
          %v2561 = vpop.xlane.xlu0 %2560
          %v2562 = vmax.f32 %v1733, %v2062
          %2563 = vmax.xlane.f32.xlu0 %v2562
          %v2564 = vpop.xlane.xlu0 %2563
          %v2565 = vmax.f32 %v1735, %v2064
          %2566 = vmax.xlane.f32.xlu0 %v2565
          %v2567 = vpop.xlane.xlu0 %2566
          %v2568 = vmax.f32 %v1738, %v2067
          %2569 = vmax.xlane.f32.xlu0 %v2568
          %v2570 = vpop.xlane.xlu0 %2569
          %v2571 = vmax.f32 %v1740, %v2069
          %2572 = vmax.xlane.f32.xlu0 %v2571
          %v2573 = vpop.xlane.xlu0 %2572
          %v2574 = vmax.f32 %v1743, %v2072
          %2575 = vmax.xlane.f32.xlu0 %v2574
          %v2576 = vpop.xlane.xlu0 %2575
          %v2577 = vmax.f32 %v1745, %v2074
          %2578 = vmax.xlane.f32.xlu0 %v2577
          %v2579 = vpop.xlane.xlu0 %2578
          %v2580 = vmax.f32 %v1748, %v2077
          %2581 = vmax.xlane.f32.xlu0 %v2580
          %v2582 = vpop.xlane.xlu0 %2581
          %v2583 = vmax.f32 %v1750, %v2079
          %2584 = vmax.xlane.f32.xlu0 %v2583
          %v2585 = vpop.xlane.xlu0 %2584
          %v2586 = vmax.f32 %v1753, %v2082
          %2587 = vmax.xlane.f32.xlu0 %v2586
          %v2588 = vpop.xlane.xlu0 %2587
          %v2589 = vmax.f32 %v1755, %v2084
          %2590 = vmax.xlane.f32.xlu0 %v2589
          %v2591 = vpop.xlane.xlu0 %2590
          %v2592 = vmax.f32 %v1758, %v2087
          %2593 = vmax.xlane.f32.xlu0 %v2592
          %v2594 = vpop.xlane.xlu0 %2593
          %v2595 = vmax.f32 %v1760, %v2089
          %2596 = vmax.xlane.f32.xlu0 %v2595
          %v2597 = vpop.xlane.xlu0 %2596
          %v2598 = vmax.f32 %v1763, %v2092
          %2599 = vmax.xlane.f32.xlu0 %v2598
          %v2600 = vpop.xlane.xlu0 %2599
          %v2601 = vmax.f32 %v1765, %v2094
          %2602 = vmax.xlane.f32.xlu0 %v2601
          %v2603 = vpop.xlane.xlu0 %2602
          %v2604 = vmax.f32 %v1768, %v2097
          %2605 = vmax.xlane.f32.xlu0 %v2604
          %v2606 = vpop.xlane.xlu0 %2605
          %v2607 = vmax.f32 %v1770, %v2099
          %2608 = vmax.xlane.f32.xlu0 %v2607
          %v2609 = vpop.xlane.xlu0 %2608
          %v2610 = vmax.f32 %v1773, %v2102
          %2611 = vmax.xlane.f32.xlu0 %v2610
          %v2612 = vpop.xlane.xlu0 %2611
          %v2613 = vmax.f32 %v1775, %v2104
          %2614 = vmax.xlane.f32.xlu0 %v2613
          %v2615 = vpop.xlane.xlu0 %2614
          %v2616 = vmax.f32 %v1778, %v2107
          %2617 = vmax.xlane.f32.xlu0 %v2616
          %v2618 = vpop.xlane.xlu0 %2617
          %v2619 = vmax.f32 %v1780, %v2109
          %2620 = vmax.xlane.f32.xlu0 %v2619
          %v2621 = vpop.xlane.xlu0 %2620
          %v2622 = vmax.f32 %v1783, %v2112
          %2623 = vmax.xlane.f32.xlu0 %v2622
          %v2624 = vpop.xlane.xlu0 %2623
          %v2625 = vmax.f32 %v1785, %v2114
          %2626 = vmax.xlane.f32.xlu0 %v2625
          %v2627 = vpop.xlane.xlu0 %2626
          %v2628 = vmax.f32 %v1788, %v2117
          %2629 = vmax.xlane.f32.xlu0 %v2628
          %v2630 = vpop.xlane.xlu0 %2629
          %v2631 = vmax.f32 %v1790, %v2119
          %2632 = vmax.xlane.f32.xlu0 %v2631
          %v2633 = vpop.xlane.xlu0 %2632
          %v2634 = vmax.f32 %v1793, %v2122
          %2635 = vmax.xlane.f32.xlu0 %v2634
          %v2636 = vpop.xlane.xlu0 %2635
          %v2637 = vmax.f32 %v1795, %v2124
          %2638 = vmax.xlane.f32.xlu0 %v2637
          %v2639 = vpop.xlane.xlu0 %2638
          %v2640 = vmax.f32 %v1798, %v2127
          %2641 = vmax.xlane.f32.xlu0 %v2640
          %v2642 = vpop.xlane.xlu0 %2641
          %v2643 = vmax.f32 %v1800, %v2129
          %2644 = vmax.xlane.f32.xlu0 %v2643
          %v2645 = vpop.xlane.xlu0 %2644
          %v2646 = vmax.f32 %v1803, %v2132
          %2647 = vmax.xlane.f32.xlu0 %v2646
          %v2648 = vpop.xlane.xlu0 %2647
          %v2649 = vmax.f32 %v1805, %v2134
          %2650 = vmax.xlane.f32.xlu0 %v2649
          %v2651 = vpop.xlane.xlu0 %2650
          %v2652 = vmax.f32 %v2140, %v2270
          %v2653 = vmax.f32 %v2141, %v2273
          %v2654 = vmax.f32 %v2142, %v2276
          %v2655 = vmax.f32 %v2143, %v2279
          %v2656 = vmax.f32 %v2144, %v2282
          %v2657 = vmax.f32 %v2145, %v2285
          %v2658 = vmax.f32 %v2146, %v2288
          %v2659 = vmax.f32 %v2147, %v2291
          %v2660 = vmax.f32 %v2148, %v2294
          %v2661 = vmax.f32 %v2149, %v2297
          %v2662 = vmax.f32 %v2150, %v2300
          %v2663 = vmax.f32 %v2151, %v2303
          %v2664 = vmax.f32 %v2152, %v2306
          %v2665 = vmax.f32 %v2153, %v2309
          %v2666 = vmax.f32 %v2154, %v2312
          %v2667 = vmax.f32 %v2155, %v2315
          %v2668 = vmax.f32 %v2156, %v2318
          %v2669 = vmax.f32 %v2157, %v2321
          %v2670 = vmax.f32 %v2158, %v2324
          %v2671 = vmax.f32 %v2159, %v2327
          %v2672 = vmax.f32 %v2160, %v2330
          %v2673 = vmax.f32 %v2161, %v2333
          %v2674 = vmax.f32 %v2162, %v2336
          %v2675 = vmax.f32 %v2163, %v2339
          %v2676 = vmax.f32 %v2164, %v2342
          %v2677 = vmax.f32 %v2165, %v2345
          %v2678 = vmax.f32 %v2166, %v2348
          %v2679 = vmax.f32 %v2167, %v2351
          %v2680 = vmax.f32 %v2168, %v2354
          %v2681 = vmax.f32 %v2169, %v2357
          %v2682 = vmax.f32 %v2170, %v2360
          %v2683 = vmax.f32 %v2171, %v2363
          %v2684 = vmax.f32 %v2172, %v2366
          %v2685 = vmax.f32 %v2173, %v2369
          %v2686 = vmax.f32 %v2174, %v2372
          %v2687 = vmax.f32 %v2175, %v2375
          %v2688 = vmax.f32 %v2176, %v2378
          %v2689 = vmax.f32 %v2177, %v2381
          %v2690 = vmax.f32 %v2178, %v2384
          %v2691 = vmax.f32 %v2179, %v2387
          %v2692 = vmax.f32 %v2180, %v2390
          %v2693 = vmax.f32 %v2181, %v2393
          %v2694 = vmax.f32 %v2182, %v2396
          %v2695 = vmax.f32 %v2183, %v2399
          %v2696 = vmax.f32 %v2184, %v2402
          %v2697 = vmax.f32 %v2185, %v2405
          %v2698 = vmax.f32 %v2186, %v2408
          %v2699 = vmax.f32 %v2187, %v2411
          %v2700 = vmax.f32 %v2188, %v2414
          %v2701 = vmax.f32 %v2189, %v2417
          %v2702 = vmax.f32 %v2190, %v2420
          %v2703 = vmax.f32 %v2191, %v2423
          %v2704 = vmax.f32 %v2192, %v2426
          %v2705 = vmax.f32 %v2193, %v2429
          %v2706 = vmax.f32 %v2194, %v2432
          %v2707 = vmax.f32 %v2195, %v2435
          %v2708 = vmax.f32 %v2196, %v2438
          %v2709 = vmax.f32 %v2197, %v2441
          %v2710 = vmax.f32 %v2198, %v2444
          %v2711 = vmax.f32 %v2199, %v2447
          %v2712 = vmax.f32 %v2200, %v2450
          %v2713 = vmax.f32 %v2201, %v2453
          %v2714 = vmax.f32 %v2202, %v2456
          %v2715 = vmax.f32 %v2203, %v2459
          %v2716 = vmax.f32 %v2204, %v2462
          %v2717 = vmax.f32 %v2205, %v2465
          %v2718 = vmax.f32 %v2206, %v2468
          %v2719 = vmax.f32 %v2207, %v2471
          %v2720 = vmax.f32 %v2208, %v2474
          %v2721 = vmax.f32 %v2209, %v2477
          %v2722 = vmax.f32 %v2210, %v2480
          %v2723 = vmax.f32 %v2211, %v2483
          %v2724 = vmax.f32 %v2212, %v2486
          %v2725 = vmax.f32 %v2213, %v2489
          %v2726 = vmax.f32 %v2214, %v2492
          %v2727 = vmax.f32 %v2215, %v2495
          %v2728 = vmax.f32 %v2216, %v2498
          %v2729 = vmax.f32 %v2217, %v2501
          %v2730 = vmax.f32 %v2218, %v2504
          %v2731 = vmax.f32 %v2219, %v2507
          %v2732 = vmax.f32 %v2220, %v2510
          %v2733 = vmax.f32 %v2221, %v2513
          %v2734 = vmax.f32 %v2222, %v2516
          %v2735 = vmax.f32 %v2223, %v2519
          %v2736 = vmax.f32 %v2224, %v2522
          %v2737 = vmax.f32 %v2225, %v2525
          %v2738 = vmax.f32 %v2226, %v2528
          %v2739 = vmax.f32 %v2227, %v2531
          %v2740 = vmax.f32 %v2228, %v2534
          %v2741 = vmax.f32 %v2229, %v2537
          %v2742 = vmax.f32 %v2230, %v2540
          %v2743 = vmax.f32 %v2231, %v2543
          %v2744 = vmax.f32 %v2232, %v2546
          %v2745 = vmax.f32 %v2233, %v2549
          %v2746 = vmax.f32 %v2234, %v2552
          %v2747 = vmax.f32 %v2235, %v2555
          %v2748 = vmax.f32 %v2236, %v2558
          %v2749 = vmax.f32 %v2237, %v2561
          %v2750 = vmax.f32 %v2238, %v2564
          %v2751 = vmax.f32 %v2239, %v2567
          %v2752 = vmax.f32 %v2240, %v2570
          %v2753 = vmax.f32 %v2241, %v2573
          %v2754 = vmax.f32 %v2242, %v2576
          %v2755 = vmax.f32 %v2243, %v2579
          %v2756 = vmax.f32 %v2244, %v2582
          %v2757 = vmax.f32 %v2245, %v2585
          %v2758 = vmax.f32 %v2246, %v2588
          %v2759 = vmax.f32 %v2247, %v2591
          %v2760 = vmax.f32 %v2248, %v2594
          %v2761 = vmax.f32 %v2249, %v2597
          %v2762 = vmax.f32 %v2250, %v2600
          %v2763 = vmax.f32 %v2251, %v2603
          %v2764 = vmax.f32 %v2252, %v2606
          %v2765 = vmax.f32 %v2253, %v2609
          %v2766 = vmax.f32 %v2254, %v2612
          %v2767 = vmax.f32 %v2255, %v2615
          %v2768 = vmax.f32 %v2256, %v2618
          %v2769 = vmax.f32 %v2257, %v2621
          %v2770 = vmax.f32 %v2258, %v2624
          %v2771 = vmax.f32 %v2259, %v2627
          %v2772 = vmax.f32 %v2260, %v2630
          %v2773 = vmax.f32 %v2261, %v2633
          %v2774 = vmax.f32 %v2262, %v2636
          %v2775 = vmax.f32 %v2263, %v2639
          %v2776 = vmax.f32 %v2264, %v2642
          %v2777 = vmax.f32 %v2265, %v2645
          %v2778 = vmax.f32 %v2266, %v2648
          %v2779 = vmax.f32 %v2267, %v2651
          %vm2780 = vcmask 7168
          %2781 = vst.msk [vmem:[%s325] sm:$0xff] %vm2780, %v2652
          %2782 = vst.msk [vmem:[%s325 + $0x8] sm:$0xff] %vm2780, %v2653
          %2783 = vst.msk [vmem:[%s325 + $0x10] sm:$0xff] %vm2780, %v2654
          %2784 = vst.msk [vmem:[%s325 + $0x18] sm:$0xff] %vm2780, %v2655
          %2785 = vst.msk [vmem:[%s325 + $0x20] sm:$0xff] %vm2780, %v2656
          %2786 = vst.msk [vmem:[%s325 + $0x28] sm:$0xff] %vm2780, %v2657
          %2787 = vst.msk [vmem:[%s325 + $0x30] sm:$0xff] %vm2780, %v2658
          %2788 = vst.msk [vmem:[%s325 + $0x38] sm:$0xff] %vm2780, %v2659
          %2789 = vst.msk [vmem:[%s325 + $0x40] sm:$0xff] %vm2780, %v2660
          %2790 = vst.msk [vmem:[%s325 + $0x48] sm:$0xff] %vm2780, %v2661
          %2791 = vst.msk [vmem:[%s325 + $0x50] sm:$0xff] %vm2780, %v2662
          %2792 = vst.msk [vmem:[%s325 + $0x58] sm:$0xff] %vm2780, %v2663
          %2793 = vst.msk [vmem:[%s325 + $0x60] sm:$0xff] %vm2780, %v2664
          %2794 = vst.msk [vmem:[%s325 + $0x68] sm:$0xff] %vm2780, %v2665
          %2795 = vst.msk [vmem:[%s325 + $0x70] sm:$0xff] %vm2780, %v2666
          %2796 = vst.msk [vmem:[%s325 + $0x78] sm:$0xff] %vm2780, %v2667
          %2797 = vst.msk [vmem:[%s325 + $0x80] sm:$0xff] %vm2780, %v2668
          %2798 = vst.msk [vmem:[%s325 + $0x88] sm:$0xff] %vm2780, %v2669
          %2799 = vst.msk [vmem:[%s325 + $0x90] sm:$0xff] %vm2780, %v2670
          %2800 = vst.msk [vmem:[%s325 + $0x98] sm:$0xff] %vm2780, %v2671
          %2801 = vst.msk [vmem:[%s325 + $0xa0] sm:$0xff] %vm2780, %v2672
          %2802 = vst.msk [vmem:[%s325 + $0xa8] sm:$0xff] %vm2780, %v2673
          %2803 = vst.msk [vmem:[%s325 + $0xb0] sm:$0xff] %vm2780, %v2674
          %2804 = vst.msk [vmem:[%s325 + $0xb8] sm:$0xff] %vm2780, %v2675
          %2805 = vst.msk [vmem:[%s325 + $0xc0] sm:$0xff] %vm2780, %v2676
          %2806 = vst.msk [vmem:[%s325 + $0xc8] sm:$0xff] %vm2780, %v2677
          %2807 = vst.msk [vmem:[%s325 + $0xd0] sm:$0xff] %vm2780, %v2678
          %2808 = vst.msk [vmem:[%s325 + $0xd8] sm:$0xff] %vm2780, %v2679
          %2809 = vst.msk [vmem:[%s325 + $0xe0] sm:$0xff] %vm2780, %v2680
          %2810 = vst.msk [vmem:[%s325 + $0xe8] sm:$0xff] %vm2780, %v2681
          %2811 = vst.msk [vmem:[%s325 + $0xf0] sm:$0xff] %vm2780, %v2682
          %2812 = vst.msk [vmem:[%s325 + $0xf8] sm:$0xff] %vm2780, %v2683
          %2813 = vst.msk [vmem:[%s325 + $0x100] sm:$0xff] %vm2780, %v2684
          %2814 = vst.msk [vmem:[%s325 + $0x108] sm:$0xff] %vm2780, %v2685
          %2815 = vst.msk [vmem:[%s325 + $0x110] sm:$0xff] %vm2780, %v2686
          %2816 = vst.msk [vmem:[%s325 + $0x118] sm:$0xff] %vm2780, %v2687
          %2817 = vst.msk [vmem:[%s325 + $0x120] sm:$0xff] %vm2780, %v2688
          %2818 = vst.msk [vmem:[%s325 + $0x128] sm:$0xff] %vm2780, %v2689
          %2819 = vst.msk [vmem:[%s325 + $0x130] sm:$0xff] %vm2780, %v2690
          %2820 = vst.msk [vmem:[%s325 + $0x138] sm:$0xff] %vm2780, %v2691
          %2821 = vst.msk [vmem:[%s325 + $0x140] sm:$0xff] %vm2780, %v2692
          %2822 = vst.msk [vmem:[%s325 + $0x148] sm:$0xff] %vm2780, %v2693
          %2823 = vst.msk [vmem:[%s325 + $0x150] sm:$0xff] %vm2780, %v2694
          %2824 = vst.msk [vmem:[%s325 + $0x158] sm:$0xff] %vm2780, %v2695
          %2825 = vst.msk [vmem:[%s325 + $0x160] sm:$0xff] %vm2780, %v2696
          %2826 = vst.msk [vmem:[%s325 + $0x168] sm:$0xff] %vm2780, %v2697
          %2827 = vst.msk [vmem:[%s325 + $0x170] sm:$0xff] %vm2780, %v2698
          %2828 = vst.msk [vmem:[%s325 + $0x178] sm:$0xff] %vm2780, %v2699
          %2829 = vst.msk [vmem:[%s325 + $0x180] sm:$0xff] %vm2780, %v2700
          %2830 = vst.msk [vmem:[%s325 + $0x188] sm:$0xff] %vm2780, %v2701
          %2831 = vst.msk [vmem:[%s325 + $0x190] sm:$0xff] %vm2780, %v2702
          %2832 = vst.msk [vmem:[%s325 + $0x198] sm:$0xff] %vm2780, %v2703
          %2833 = vst.msk [vmem:[%s325 + $0x1a0] sm:$0xff] %vm2780, %v2704
          %2834 = vst.msk [vmem:[%s325 + $0x1a8] sm:$0xff] %vm2780, %v2705
          %2835 = vst.msk [vmem:[%s325 + $0x1b0] sm:$0xff] %vm2780, %v2706
          %2836 = vst.msk [vmem:[%s325 + $0x1b8] sm:$0xff] %vm2780, %v2707
          %2837 = vst.msk [vmem:[%s325 + $0x1c0] sm:$0xff] %vm2780, %v2708
          %2838 = vst.msk [vmem:[%s325 + $0x1c8] sm:$0xff] %vm2780, %v2709
          %2839 = vst.msk [vmem:[%s325 + $0x1d0] sm:$0xff] %vm2780, %v2710
          %2840 = vst.msk [vmem:[%s325 + $0x1d8] sm:$0xff] %vm2780, %v2711
          %2841 = vst.msk [vmem:[%s325 + $0x1e0] sm:$0xff] %vm2780, %v2712
          %2842 = vst.msk [vmem:[%s325 + $0x1e8] sm:$0xff] %vm2780, %v2713
          %2843 = vst.msk [vmem:[%s325 + $0x1f0] sm:$0xff] %vm2780, %v2714
          %2844 = vst.msk [vmem:[%s325 + $0x1f8] sm:$0xff] %vm2780, %v2715
          %2845 = vst.msk [vmem:[%s325 + $0x200] sm:$0xff] %vm2780, %v2716
          %2846 = vst.msk [vmem:[%s325 + $0x208] sm:$0xff] %vm2780, %v2717
          %2847 = vst.msk [vmem:[%s325 + $0x210] sm:$0xff] %vm2780, %v2718
          %2848 = vst.msk [vmem:[%s325 + $0x218] sm:$0xff] %vm2780, %v2719
          %2849 = vst.msk [vmem:[%s325 + $0x220] sm:$0xff] %vm2780, %v2720
          %2850 = vst.msk [vmem:[%s325 + $0x228] sm:$0xff] %vm2780, %v2721
          %2851 = vst.msk [vmem:[%s325 + $0x230] sm:$0xff] %vm2780, %v2722
          %2852 = vst.msk [vmem:[%s325 + $0x238] sm:$0xff] %vm2780, %v2723
          %2853 = vst.msk [vmem:[%s325 + $0x240] sm:$0xff] %vm2780, %v2724
          %2854 = vst.msk [vmem:[%s325 + $0x248] sm:$0xff] %vm2780, %v2725
          %2855 = vst.msk [vmem:[%s325 + $0x250] sm:$0xff] %vm2780, %v2726
          %2856 = vst.msk [vmem:[%s325 + $0x258] sm:$0xff] %vm2780, %v2727
          %2857 = vst.msk [vmem:[%s325 + $0x260] sm:$0xff] %vm2780, %v2728
          %2858 = vst.msk [vmem:[%s325 + $0x268] sm:$0xff] %vm2780, %v2729
          %2859 = vst.msk [vmem:[%s325 + $0x270] sm:$0xff] %vm2780, %v2730
          %2860 = vst.msk [vmem:[%s325 + $0x278] sm:$0xff] %vm2780, %v2731
          %2861 = vst.msk [vmem:[%s325 + $0x280] sm:$0xff] %vm2780, %v2732
          %2862 = vst.msk [vmem:[%s325 + $0x288] sm:$0xff] %vm2780, %v2733
          %2863 = vst.msk [vmem:[%s325 + $0x290] sm:$0xff] %vm2780, %v2734
          %2864 = vst.msk [vmem:[%s325 + $0x298] sm:$0xff] %vm2780, %v2735
          %2865 = vst.msk [vmem:[%s325 + $0x2a0] sm:$0xff] %vm2780, %v2736
          %2866 = vst.msk [vmem:[%s325 + $0x2a8] sm:$0xff] %vm2780, %v2737
          %2867 = vst.msk [vmem:[%s325 + $0x2b0] sm:$0xff] %vm2780, %v2738
          %2868 = vst.msk [vmem:[%s325 + $0x2b8] sm:$0xff] %vm2780, %v2739
          %2869 = vst.msk [vmem:[%s325 + $0x2c0] sm:$0xff] %vm2780, %v2740
          %2870 = vst.msk [vmem:[%s325 + $0x2c8] sm:$0xff] %vm2780, %v2741
          %2871 = vst.msk [vmem:[%s325 + $0x2d0] sm:$0xff] %vm2780, %v2742
          %2872 = vst.msk [vmem:[%s325 + $0x2d8] sm:$0xff] %vm2780, %v2743
          %2873 = vst.msk [vmem:[%s325 + $0x2e0] sm:$0xff] %vm2780, %v2744
          %2874 = vst.msk [vmem:[%s325 + $0x2e8] sm:$0xff] %vm2780, %v2745
          %2875 = vst.msk [vmem:[%s325 + $0x2f0] sm:$0xff] %vm2780, %v2746
          %2876 = vst.msk [vmem:[%s325 + $0x2f8] sm:$0xff] %vm2780, %v2747
          %2877 = vst.msk [vmem:[%s325 + $0x300] sm:$0xff] %vm2780, %v2748
          %2878 = vst.msk [vmem:[%s325 + $0x308] sm:$0xff] %vm2780, %v2749
          %2879 = vst.msk [vmem:[%s325 + $0x310] sm:$0xff] %vm2780, %v2750
          %2880 = vst.msk [vmem:[%s325 + $0x318] sm:$0xff] %vm2780, %v2751
          %2881 = vst.msk [vmem:[%s325 + $0x320] sm:$0xff] %vm2780, %v2752
          %2882 = vst.msk [vmem:[%s325 + $0x328] sm:$0xff] %vm2780, %v2753
          %2883 = vst.msk [vmem:[%s325 + $0x330] sm:$0xff] %vm2780, %v2754
          %2884 = vst.msk [vmem:[%s325 + $0x338] sm:$0xff] %vm2780, %v2755
          %2885 = vst.msk [vmem:[%s325 + $0x340] sm:$0xff] %vm2780, %v2756
          %2886 = vst.msk [vmem:[%s325 + $0x348] sm:$0xff] %vm2780, %v2757
          %2887 = vst.msk [vmem:[%s325 + $0x350] sm:$0xff] %vm2780, %v2758
          %2888 = vst.msk [vmem:[%s325 + $0x358] sm:$0xff] %vm2780, %v2759
          %2889 = vst.msk [vmem:[%s325 + $0x360] sm:$0xff] %vm2780, %v2760
          %2890 = vst.msk [vmem:[%s325 + $0x368] sm:$0xff] %vm2780, %v2761
          %2891 = vst.msk [vmem:[%s325 + $0x370] sm:$0xff] %vm2780, %v2762
          %2892 = vst.msk [vmem:[%s325 + $0x378] sm:$0xff] %vm2780, %v2763
          %2893 = vst.msk [vmem:[%s325 + $0x380] sm:$0xff] %vm2780, %v2764
          %2894 = vst.msk [vmem:[%s325 + $0x388] sm:$0xff] %vm2780, %v2765
          %2895 = vst.msk [vmem:[%s325 + $0x390] sm:$0xff] %vm2780, %v2766
          %2896 = vst.msk [vmem:[%s325 + $0x398] sm:$0xff] %vm2780, %v2767
          %2897 = vst.msk [vmem:[%s325 + $0x3a0] sm:$0xff] %vm2780, %v2768
          %2898 = vst.msk [vmem:[%s325 + $0x3a8] sm:$0xff] %vm2780, %v2769
          %2899 = vst.msk [vmem:[%s325 + $0x3b0] sm:$0xff] %vm2780, %v2770
          %2900 = vst.msk [vmem:[%s325 + $0x3b8] sm:$0xff] %vm2780, %v2771
          %2901 = vst.msk [vmem:[%s325 + $0x3c0] sm:$0xff] %vm2780, %v2772
          %2902 = vst.msk [vmem:[%s325 + $0x3c8] sm:$0xff] %vm2780, %v2773
          %2903 = vst.msk [vmem:[%s325 + $0x3d0] sm:$0xff] %vm2780, %v2774
          %2904 = vst.msk [vmem:[%s325 + $0x3d8] sm:$0xff] %vm2780, %v2775
          %2905 = vst.msk [vmem:[%s325 + $0x3e0] sm:$0xff] %vm2780, %v2776
          %2906 = vst.msk [vmem:[%s325 + $0x3e8] sm:$0xff] %vm2780, %v2777
          %2907 = vst.msk [vmem:[%s325 + $0x3f0] sm:$0xff] %vm2780, %v2778
          %2908 = vst.msk [vmem:[%s325 + $0x3f8] sm:$0xff] %vm2780, %v2779
        $region94: #{tpu_custom_call.1} parent=77 // pred_fallthru
          _
        %p2909 = scmp.eq.s32.totalorder %s23, 1
        // Predicated region
        $region95: #{tpu_custom_call.1} parent=77 // pred_check
          %p2910 = pneg %p2909
        $region96: #{tpu_custom_call.1} parent=77 // pred_check_branch
          %2912 = sbr.rel (%p2910) target = $region98
        $region97: #{tpu_custom_call.1} parent=77 // pred_region
          %v2913 = vlaneseq
          %v2914 = vand.u32 %v2913, 127
          %v2915 = vadd.s32 %v2914, 128
          %s2916 = smul.u32 %s23, 256
          %v2917 = vstv %s2916
          %v2918 = vadd.s32 %v2914, %v2917
          %v2919 = vadd.s32 %v2915, %v2917
          %vm2920 = vcmp.lt.s32.totalorder %v2918, 384
          %vm2921 = vcmp.lt.s32.totalorder %v2919, 384
          %v2922 = vsel %vm2920, 1, 0
          %v2923 = vsel %vm2921, 1, 0
          %vm2924 = vcmp.eq.s32.totalorder %v2922, 1
          %vm2925 = vcmp.eq.s32.totalorder %v2923, 1
          %v2926 = vsel %vm2924, %v1488, -inf
          %v2927 = vsel %vm2925, %v1817, -inf
          %v2928 = vsel %vm2924, %v1490, -inf
          %v2929 = vsel %vm2925, %v1819, -inf
          %v2930 = vsel %vm2924, %v1493, -inf
          %v2931 = vsel %vm2925, %v1822, -inf
          %v2932 = vsel %vm2924, %v1495, -inf
          %v2933 = vsel %vm2925, %v1824, -inf
          %v2934 = vsel %vm2924, %v1498, -inf
          %v2935 = vsel %vm2925, %v1827, -inf
          %v2936 = vsel %vm2924, %v1500, -inf
          %v2937 = vsel %vm2925, %v1829, -inf
          %v2938 = vsel %vm2924, %v1503, -inf
          %v2939 = vsel %vm2925, %v1832, -inf
          %v2940 = vsel %vm2924, %v1505, -inf
          %v2941 = vsel %vm2925, %v1834, -inf
          %v2942 = vsel %vm2924, %v1508, -inf
          %v2943 = vsel %vm2925, %v1837, -inf
          %v2944 = vsel %vm2924, %v1510, -inf
          %v2945 = vsel %vm2925, %v1839, -inf
          %v2946 = vsel %vm2924, %v1513, -inf
          %v2947 = vsel %vm2925, %v1842, -inf
          %v2948 = vsel %vm2924, %v1515, -inf
          %v2949 = vsel %vm2925, %v1844, -inf
          %v2950 = vsel %vm2924, %v1518, -inf
          %v2951 = vsel %vm2925, %v1847, -inf
          %v2952 = vsel %vm2924, %v1520, -inf
          %v2953 = vsel %vm2925, %v1849, -inf
          %v2954 = vsel %vm2924, %v1523, -inf
          %v2955 = vsel %vm2925, %v1852, -inf
          %v2956 = vsel %vm2924, %v1525, -inf
          %v2957 = vsel %vm2925, %v1854, -inf
          %v2958 = vsel %vm2924, %v1528, -inf
          %v2959 = vsel %vm2925, %v1857, -inf
          %v2960 = vsel %vm2924, %v1530, -inf
          %v2961 = vsel %vm2925, %v1859, -inf
          %v2962 = vsel %vm2924, %v1533, -inf
          %v2963 = vsel %vm2925, %v1862, -inf
          %v2964 = vsel %vm2924, %v1535, -inf
          %v2965 = vsel %vm2925, %v1864, -inf
          %v2966 = vsel %vm2924, %v1538, -inf
          %v2967 = vsel %vm2925, %v1867, -inf
          %v2968 = vsel %vm2924, %v1540, -inf
          %v2969 = vsel %vm2925, %v1869, -inf
          %v2970 = vsel %vm2924, %v1543, -inf
          %v2971 = vsel %vm2925, %v1872, -inf
          %v2972 = vsel %vm2924, %v1545, -inf
          %v2973 = vsel %vm2925, %v1874, -inf
          %v2974 = vsel %vm2924, %v1548, -inf
          %v2975 = vsel %vm2925, %v1877, -inf
          %v2976 = vsel %vm2924, %v1550, -inf
          %v2977 = vsel %vm2925, %v1879, -inf
          %v2978 = vsel %vm2924, %v1553, -inf
          %v2979 = vsel %vm2925, %v1882, -inf
          %v2980 = vsel %vm2924, %v1555, -inf
          %v2981 = vsel %vm2925, %v1884, -inf
          %v2982 = vsel %vm2924, %v1558, -inf
          %v2983 = vsel %vm2925, %v1887, -inf
          %v2984 = vsel %vm2924, %v1560, -inf
          %v2985 = vsel %vm2925, %v1889, -inf
          %v2986 = vsel %vm2924, %v1563, -inf
          %v2987 = vsel %vm2925, %v1892, -inf
          %v2988 = vsel %vm2924, %v1565, -inf
          %v2989 = vsel %vm2925, %v1894, -inf
          %v2990 = vsel %vm2924, %v1568, -inf
          %v2991 = vsel %vm2925, %v1897, -inf
          %v2992 = vsel %vm2924, %v1570, -inf
          %v2993 = vsel %vm2925, %v1899, -inf
          %v2994 = vsel %vm2924, %v1573, -inf
          %v2995 = vsel %vm2925, %v1902, -inf
          %v2996 = vsel %vm2924, %v1575, -inf
          %v2997 = vsel %vm2925, %v1904, -inf
          %v2998 = vsel %vm2924, %v1578, -inf
          %v2999 = vsel %vm2925, %v1907, -inf
          %v3000 = vsel %vm2924, %v1580, -inf
          %v3001 = vsel %vm2925, %v1909, -inf
          %v3002 = vsel %vm2924, %v1583, -inf
          %v3003 = vsel %vm2925, %v1912, -inf
          %v3004 = vsel %vm2924, %v1585, -inf
          %v3005 = vsel %vm2925, %v1914, -inf
          %v3006 = vsel %vm2924, %v1588, -inf
          %v3007 = vsel %vm2925, %v1917, -inf
          %v3008 = vsel %vm2924, %v1590, -inf
          %v3009 = vsel %vm2925, %v1919, -inf
          %v3010 = vsel %vm2924, %v1593, -inf
          %v3011 = vsel %vm2925, %v1922, -inf
          %v3012 = vsel %vm2924, %v1595, -inf
          %v3013 = vsel %vm2925, %v1924, -inf
          %v3014 = vsel %vm2924, %v1598, -inf
          %v3015 = vsel %vm2925, %v1927, -inf
          %v3016 = vsel %vm2924, %v1600, -inf
          %v3017 = vsel %vm2925, %v1929, -inf
          %v3018 = vsel %vm2924, %v1603, -inf
          %v3019 = vsel %vm2925, %v1932, -inf
          %v3020 = vsel %vm2924, %v1605, -inf
          %v3021 = vsel %vm2925, %v1934, -inf
          %v3022 = vsel %vm2924, %v1608, -inf
          %v3023 = vsel %vm2925, %v1937, -inf
          %v3024 = vsel %vm2924, %v1610, -inf
          %v3025 = vsel %vm2925, %v1939, -inf
          %v3026 = vsel %vm2924, %v1613, -inf
          %v3027 = vsel %vm2925, %v1942, -inf
          %v3028 = vsel %vm2924, %v1615, -inf
          %v3029 = vsel %vm2925, %v1944, -inf
          %v3030 = vsel %vm2924, %v1618, -inf
          %v3031 = vsel %vm2925, %v1947, -inf
          %v3032 = vsel %vm2924, %v1620, -inf
          %v3033 = vsel %vm2925, %v1949, -inf
          %v3034 = vsel %vm2924, %v1623, -inf
          %v3035 = vsel %vm2925, %v1952, -inf
          %v3036 = vsel %vm2924, %v1625, -inf
          %v3037 = vsel %vm2925, %v1954, -inf
          %v3038 = vsel %vm2924, %v1628, -inf
          %v3039 = vsel %vm2925, %v1957, -inf
          %v3040 = vsel %vm2924, %v1630, -inf
          %v3041 = vsel %vm2925, %v1959, -inf
          %v3042 = vsel %vm2924, %v1633, -inf
          %v3043 = vsel %vm2925, %v1962, -inf
          %v3044 = vsel %vm2924, %v1635, -inf
          %v3045 = vsel %vm2925, %v1964, -inf
          %v3046 = vsel %vm2924, %v1638, -inf
          %v3047 = vsel %vm2925, %v1967, -inf
          %v3048 = vsel %vm2924, %v1640, -inf
          %v3049 = vsel %vm2925, %v1969, -inf
          %v3050 = vsel %vm2924, %v1643, -inf
          %v3051 = vsel %vm2925, %v1972, -inf
          %v3052 = vsel %vm2924, %v1645, -inf
          %v3053 = vsel %vm2925, %v1974, -inf
          %v3054 = vsel %vm2924, %v1648, -inf
          %v3055 = vsel %vm2925, %v1977, -inf
          %v3056 = vsel %vm2924, %v1650, -inf
          %v3057 = vsel %vm2925, %v1979, -inf
          %v3058 = vsel %vm2924, %v1653, -inf
          %v3059 = vsel %vm2925, %v1982, -inf
          %v3060 = vsel %vm2924, %v1655, -inf
          %v3061 = vsel %vm2925, %v1984, -inf
          %v3062 = vsel %vm2924, %v1658, -inf
          %v3063 = vsel %vm2925, %v1987, -inf
          %v3064 = vsel %vm2924, %v1660, -inf
          %v3065 = vsel %vm2925, %v1989, -inf
          %v3066 = vsel %vm2924, %v1663, -inf
          %v3067 = vsel %vm2925, %v1992, -inf
          %v3068 = vsel %vm2924, %v1665, -inf
          %v3069 = vsel %vm2925, %v1994, -inf
          %v3070 = vsel %vm2924, %v1668, -inf
          %v3071 = vsel %vm2925, %v1997, -inf
          %v3072 = vsel %vm2924, %v1670, -inf
          %v3073 = vsel %vm2925, %v1999, -inf
          %v3074 = vsel %vm2924, %v1673, -inf
          %v3075 = vsel %vm2925, %v2002, -inf
          %v3076 = vsel %vm2924, %v1675, -inf
          %v3077 = vsel %vm2925, %v2004, -inf
          %v3078 = vsel %vm2924, %v1678, -inf
          %v3079 = vsel %vm2925, %v2007, -inf
          %v3080 = vsel %vm2924, %v1680, -inf
          %v3081 = vsel %vm2925, %v2009, -inf
          %v3082 = vsel %vm2924, %v1683, -inf
          %v3083 = vsel %vm2925, %v2012, -inf
          %v3084 = vsel %vm2924, %v1685, -inf
          %v3085 = vsel %vm2925, %v2014, -inf
          %v3086 = vsel %vm2924, %v1688, -inf
          %v3087 = vsel %vm2925, %v2017, -inf
          %v3088 = vsel %vm2924, %v1690, -inf
          %v3089 = vsel %vm2925, %v2019, -inf
          %v3090 = vsel %vm2924, %v1693, -inf
          %v3091 = vsel %vm2925, %v2022, -inf
          %v3092 = vsel %vm2924, %v1695, -inf
          %v3093 = vsel %vm2925, %v2024, -inf
          %v3094 = vsel %vm2924, %v1698, -inf
          %v3095 = vsel %vm2925, %v2027, -inf
          %v3096 = vsel %vm2924, %v1700, -inf
          %v3097 = vsel %vm2925, %v2029, -inf
          %v3098 = vsel %vm2924, %v1703, -inf
          %v3099 = vsel %vm2925, %v2032, -inf
          %v3100 = vsel %vm2924, %v1705, -inf
          %v3101 = vsel %vm2925, %v2034, -inf
          %v3102 = vsel %vm2924, %v1708, -inf
          %v3103 = vsel %vm2925, %v2037, -inf
          %v3104 = vsel %vm2924, %v1710, -inf
          %v3105 = vsel %vm2925, %v2039, -inf
          %v3106 = vsel %vm2924, %v1713, -inf
          %v3107 = vsel %vm2925, %v2042, -inf
          %v3108 = vsel %vm2924, %v1715, -inf
          %v3109 = vsel %vm2925, %v2044, -inf
          %v3110 = vsel %vm2924, %v1718, -inf
          %v3111 = vsel %vm2925, %v2047, -inf
          %v3112 = vsel %vm2924, %v1720, -inf
          %v3113 = vsel %vm2925, %v2049, -inf
          %v3114 = vsel %vm2924, %v1723, -inf
          %v3115 = vsel %vm2925, %v2052, -inf
          %v3116 = vsel %vm2924, %v1725, -inf
          %v3117 = vsel %vm2925, %v2054, -inf
          %v3118 = vsel %vm2924, %v1728, -inf
          %v3119 = vsel %vm2925, %v2057, -inf
          %v3120 = vsel %vm2924, %v1730, -inf
          %v3121 = vsel %vm2925, %v2059, -inf
          %v3122 = vsel %vm2924, %v1733, -inf
          %v3123 = vsel %vm2925, %v2062, -inf
          %v3124 = vsel %vm2924, %v1735, -inf
          %v3125 = vsel %vm2925, %v2064, -inf
          %v3126 = vsel %vm2924, %v1738, -inf
          %v3127 = vsel %vm2925, %v2067, -inf
          %v3128 = vsel %vm2924, %v1740, -inf
          %v3129 = vsel %vm2925, %v2069, -inf
          %v3130 = vsel %vm2924, %v1743, -inf
          %v3131 = vsel %vm2925, %v2072, -inf
          %v3132 = vsel %vm2924, %v1745, -inf
          %v3133 = vsel %vm2925, %v2074, -inf
          %v3134 = vsel %vm2924, %v1748, -inf
          %v3135 = vsel %vm2925, %v2077, -inf
          %v3136 = vsel %vm2924, %v1750, -inf
          %v3137 = vsel %vm2925, %v2079, -inf
          %v3138 = vsel %vm2924, %v1753, -inf
          %v3139 = vsel %vm2925, %v2082, -inf
          %v3140 = vsel %vm2924, %v1755, -inf
          %v3141 = vsel %vm2925, %v2084, -inf
          %v3142 = vsel %vm2924, %v1758, -inf
          %v3143 = vsel %vm2925, %v2087, -inf
          %v3144 = vsel %vm2924, %v1760, -inf
          %v3145 = vsel %vm2925, %v2089, -inf
          %v3146 = vsel %vm2924, %v1763, -inf
          %v3147 = vsel %vm2925, %v2092, -inf
          %v3148 = vsel %vm2924, %v1765, -inf
          %v3149 = vsel %vm2925, %v2094, -inf
          %v3150 = vsel %vm2924, %v1768, -inf
          %v3151 = vsel %vm2925, %v2097, -inf
          %v3152 = vsel %vm2924, %v1770, -inf
          %v3153 = vsel %vm2925, %v2099, -inf
          %v3154 = vsel %vm2924, %v1773, -inf
          %v3155 = vsel %vm2925, %v2102, -inf
          %v3156 = vsel %vm2924, %v1775, -inf
          %v3157 = vsel %vm2925, %v2104, -inf
          %v3158 = vsel %vm2924, %v1778, -inf
          %v3159 = vsel %vm2925, %v2107, -inf
          %v3160 = vsel %vm2924, %v1780, -inf
          %v3161 = vsel %vm2925, %v2109, -inf
          %v3162 = vsel %vm2924, %v1783, -inf
          %v3163 = vsel %vm2925, %v2112, -inf
          %v3164 = vsel %vm2924, %v1785, -inf
          %v3165 = vsel %vm2925, %v2114, -inf
          %v3166 = vsel %vm2924, %v1788, -inf
          %v3167 = vsel %vm2925, %v2117, -inf
          %v3168 = vsel %vm2924, %v1790, -inf
          %v3169 = vsel %vm2925, %v2119, -inf
          %v3170 = vsel %vm2924, %v1793, -inf
          %v3171 = vsel %vm2925, %v2122, -inf
          %v3172 = vsel %vm2924, %v1795, -inf
          %v3173 = vsel %vm2925, %v2124, -inf
          %v3174 = vsel %vm2924, %v1798, -inf
          %v3175 = vsel %vm2925, %v2127, -inf
          %v3176 = vsel %vm2924, %v1800, -inf
          %v3177 = vsel %vm2925, %v2129, -inf
          %v3178 = vsel %vm2924, %v1803, -inf
          %v3179 = vsel %vm2925, %v2132, -inf
          %v3180 = vsel %vm2924, %v1805, -inf
          %v3181 = vsel %vm2925, %v2134, -inf
          %v3182 = vld [vmem:[%s325] sm:$0xff]
          %v3183 = vld [vmem:[%s325 + $0x8] sm:$0xff]
          %v3184 = vld [vmem:[%s325 + $0x10] sm:$0xff]
          %v3185 = vld [vmem:[%s325 + $0x18] sm:$0xff]
          %v3186 = vld [vmem:[%s325 + $0x20] sm:$0xff]
          %v3187 = vld [vmem:[%s325 + $0x28] sm:$0xff]
          %v3188 = vld [vmem:[%s325 + $0x30] sm:$0xff]
          %v3189 = vld [vmem:[%s325 + $0x38] sm:$0xff]
          %v3190 = vld [vmem:[%s325 + $0x40] sm:$0xff]
          %v3191 = vld [vmem:[%s325 + $0x48] sm:$0xff]
          %v3192 = vld [vmem:[%s325 + $0x50] sm:$0xff]
          %v3193 = vld [vmem:[%s325 + $0x58] sm:$0xff]
          %v3194 = vld [vmem:[%s325 + $0x60] sm:$0xff]
          %v3195 = vld [vmem:[%s325 + $0x68] sm:$0xff]
          %v3196 = vld [vmem:[%s325 + $0x70] sm:$0xff]
          %v3197 = vld [vmem:[%s325 + $0x78] sm:$0xff]
          %v3198 = vld [vmem:[%s325 + $0x80] sm:$0xff]
          %v3199 = vld [vmem:[%s325 + $0x88] sm:$0xff]
          %v3200 = vld [vmem:[%s325 + $0x90] sm:$0xff]
          %v3201 = vld [vmem:[%s325 + $0x98] sm:$0xff]
          %v3202 = vld [vmem:[%s325 + $0xa0] sm:$0xff]
          %v3203 = vld [vmem:[%s325 + $0xa8] sm:$0xff]
          %v3204 = vld [vmem:[%s325 + $0xb0] sm:$0xff]
          %v3205 = vld [vmem:[%s325 + $0xb8] sm:$0xff]
          %v3206 = vld [vmem:[%s325 + $0xc0] sm:$0xff]
          %v3207 = vld [vmem:[%s325 + $0xc8] sm:$0xff]
          %v3208 = vld [vmem:[%s325 + $0xd0] sm:$0xff]
          %v3209 = vld [vmem:[%s325 + $0xd8] sm:$0xff]
          %v3210 = vld [vmem:[%s325 + $0xe0] sm:$0xff]
          %v3211 = vld [vmem:[%s325 + $0xe8] sm:$0xff]
          %v3212 = vld [vmem:[%s325 + $0xf0] sm:$0xff]
          %v3213 = vld [vmem:[%s325 + $0xf8] sm:$0xff]
          %v3214 = vld [vmem:[%s325 + $0x100] sm:$0xff]
          %v3215 = vld [vmem:[%s325 + $0x108] sm:$0xff]
          %v3216 = vld [vmem:[%s325 + $0x110] sm:$0xff]
          %v3217 = vld [vmem:[%s325 + $0x118] sm:$0xff]
          %v3218 = vld [vmem:[%s325 + $0x120] sm:$0xff]
          %v3219 = vld [vmem:[%s325 + $0x128] sm:$0xff]
          %v3220 = vld [vmem:[%s325 + $0x130] sm:$0xff]
          %v3221 = vld [vmem:[%s325 + $0x138] sm:$0xff]
          %v3222 = vld [vmem:[%s325 + $0x140] sm:$0xff]
          %v3223 = vld [vmem:[%s325 + $0x148] sm:$0xff]
          %v3224 = vld [vmem:[%s325 + $0x150] sm:$0xff]
          %v3225 = vld [vmem:[%s325 + $0x158] sm:$0xff]
          %v3226 = vld [vmem:[%s325 + $0x160] sm:$0xff]
          %v3227 = vld [vmem:[%s325 + $0x168] sm:$0xff]
          %v3228 = vld [vmem:[%s325 + $0x170] sm:$0xff]
          %v3229 = vld [vmem:[%s325 + $0x178] sm:$0xff]
          %v3230 = vld [vmem:[%s325 + $0x180] sm:$0xff]
          %v3231 = vld [vmem:[%s325 + $0x188] sm:$0xff]
          %v3232 = vld [vmem:[%s325 + $0x190] sm:$0xff]
          %v3233 = vld [vmem:[%s325 + $0x198] sm:$0xff]
          %v3234 = vld [vmem:[%s325 + $0x1a0] sm:$0xff]
          %v3235 = vld [vmem:[%s325 + $0x1a8] sm:$0xff]
          %v3236 = vld [vmem:[%s325 + $0x1b0] sm:$0xff]
          %v3237 = vld [vmem:[%s325 + $0x1b8] sm:$0xff]
          %v3238 = vld [vmem:[%s325 + $0x1c0] sm:$0xff]
          %v3239 = vld [vmem:[%s325 + $0x1c8] sm:$0xff]
          %v3240 = vld [vmem:[%s325 + $0x1d0] sm:$0xff]
          %v3241 = vld [vmem:[%s325 + $0x1d8] sm:$0xff]
          %v3242 = vld [vmem:[%s325 + $0x1e0] sm:$0xff]
          %v3243 = vld [vmem:[%s325 + $0x1e8] sm:$0xff]
          %v3244 = vld [vmem:[%s325 + $0x1f0] sm:$0xff]
          %v3245 = vld [vmem:[%s325 + $0x1f8] sm:$0xff]
          %v3246 = vld [vmem:[%s325 + $0x200] sm:$0xff]
          %v3247 = vld [vmem:[%s325 + $0x208] sm:$0xff]
          %v3248 = vld [vmem:[%s325 + $0x210] sm:$0xff]
          %v3249 = vld [vmem:[%s325 + $0x218] sm:$0xff]
          %v3250 = vld [vmem:[%s325 + $0x220] sm:$0xff]
          %v3251 = vld [vmem:[%s325 + $0x228] sm:$0xff]
          %v3252 = vld [vmem:[%s325 + $0x230] sm:$0xff]
          %v3253 = vld [vmem:[%s325 + $0x238] sm:$0xff]
          %v3254 = vld [vmem:[%s325 + $0x240] sm:$0xff]
          %v3255 = vld [vmem:[%s325 + $0x248] sm:$0xff]
          %v3256 = vld [vmem:[%s325 + $0x250] sm:$0xff]
          %v3257 = vld [vmem:[%s325 + $0x258] sm:$0xff]
          %v3258 = vld [vmem:[%s325 + $0x260] sm:$0xff]
          %v3259 = vld [vmem:[%s325 + $0x268] sm:$0xff]
          %v3260 = vld [vmem:[%s325 + $0x270] sm:$0xff]
          %v3261 = vld [vmem:[%s325 + $0x278] sm:$0xff]
          %v3262 = vld [vmem:[%s325 + $0x280] sm:$0xff]
          %v3263 = vld [vmem:[%s325 + $0x288] sm:$0xff]
          %v3264 = vld [vmem:[%s325 + $0x290] sm:$0xff]
          %v3265 = vld [vmem:[%s325 + $0x298] sm:$0xff]
          %v3266 = vld [vmem:[%s325 + $0x2a0] sm:$0xff]
          %v3267 = vld [vmem:[%s325 + $0x2a8] sm:$0xff]
          %v3268 = vld [vmem:[%s325 + $0x2b0] sm:$0xff]
          %v3269 = vld [vmem:[%s325 + $0x2b8] sm:$0xff]
          %v3270 = vld [vmem:[%s325 + $0x2c0] sm:$0xff]
          %v3271 = vld [vmem:[%s325 + $0x2c8] sm:$0xff]
          %v3272 = vld [vmem:[%s325 + $0x2d0] sm:$0xff]
          %v3273 = vld [vmem:[%s325 + $0x2d8] sm:$0xff]
          %v3274 = vld [vmem:[%s325 + $0x2e0] sm:$0xff]
          %v3275 = vld [vmem:[%s325 + $0x2e8] sm:$0xff]
          %v3276 = vld [vmem:[%s325 + $0x2f0] sm:$0xff]
          %v3277 = vld [vmem:[%s325 + $0x2f8] sm:$0xff]
          %v3278 = vld [vmem:[%s325 + $0x300] sm:$0xff]
          %v3279 = vld [vmem:[%s325 + $0x308] sm:$0xff]
          %v3280 = vld [vmem:[%s325 + $0x310] sm:$0xff]
          %v3281 = vld [vmem:[%s325 + $0x318] sm:$0xff]
          %v3282 = vld [vmem:[%s325 + $0x320] sm:$0xff]
          %v3283 = vld [vmem:[%s325 + $0x328] sm:$0xff]
          %v3284 = vld [vmem:[%s325 + $0x330] sm:$0xff]
          %v3285 = vld [vmem:[%s325 + $0x338] sm:$0xff]
          %v3286 = vld [vmem:[%s325 + $0x340] sm:$0xff]
          %v3287 = vld [vmem:[%s325 + $0x348] sm:$0xff]
          %v3288 = vld [vmem:[%s325 + $0x350] sm:$0xff]
          %v3289 = vld [vmem:[%s325 + $0x358] sm:$0xff]
          %v3290 = vld [vmem:[%s325 + $0x360] sm:$0xff]
          %v3291 = vld [vmem:[%s325 + $0x368] sm:$0xff]
          %v3292 = vld [vmem:[%s325 + $0x370] sm:$0xff]
          %v3293 = vld [vmem:[%s325 + $0x378] sm:$0xff]
          %v3294 = vld [vmem:[%s325 + $0x380] sm:$0xff]
          %v3295 = vld [vmem:[%s325 + $0x388] sm:$0xff]
          %v3296 = vld [vmem:[%s325 + $0x390] sm:$0xff]
          %v3297 = vld [vmem:[%s325 + $0x398] sm:$0xff]
          %v3298 = vld [vmem:[%s325 + $0x3a0] sm:$0xff]
          %v3299 = vld [vmem:[%s325 + $0x3a8] sm:$0xff]
          %v3300 = vld [vmem:[%s325 + $0x3b0] sm:$0xff]
          %v3301 = vld [vmem:[%s325 + $0x3b8] sm:$0xff]
          %v3302 = vld [vmem:[%s325 + $0x3c0] sm:$0xff]
          %v3303 = vld [vmem:[%s325 + $0x3c8] sm:$0xff]
          %v3304 = vld [vmem:[%s325 + $0x3d0] sm:$0xff]
          %v3305 = vld [vmem:[%s325 + $0x3d8] sm:$0xff]
          %v3306 = vld [vmem:[%s325 + $0x3e0] sm:$0xff]
          %v3307 = vld [vmem:[%s325 + $0x3e8] sm:$0xff]
          %v3308 = vld [vmem:[%s325 + $0x3f0] sm:$0xff]
          %v3309 = vld [vmem:[%s325 + $0x3f8] sm:$0xff]
          %v3310 = vmax.f32 %v2926, %v2927
          %3311 = vmax.xlane.f32.xlu0 %v3310
          %v3312 = vpop.xlane.xlu0 %3311
          %v3313 = vmax.f32 %v2928, %v2929
          %3314 = vmax.xlane.f32.xlu0 %v3313
          %v3315 = vpop.xlane.xlu0 %3314
          %v3316 = vmax.f32 %v2930, %v2931
          %3317 = vmax.xlane.f32.xlu0 %v3316
          %v3318 = vpop.xlane.xlu0 %3317
          %v3319 = vmax.f32 %v2932, %v2933
          %3320 = vmax.xlane.f32.xlu0 %v3319
          %v3321 = vpop.xlane.xlu0 %3320
          %v3322 = vmax.f32 %v2934, %v2935
          %3323 = vmax.xlane.f32.xlu0 %v3322
          %v3324 = vpop.xlane.xlu0 %3323
          %v3325 = vmax.f32 %v2936, %v2937
          %3326 = vmax.xlane.f32.xlu0 %v3325
          %v3327 = vpop.xlane.xlu0 %3326
          %v3328 = vmax.f32 %v2938, %v2939
          %3329 = vmax.xlane.f32.xlu0 %v3328
          %v3330 = vpop.xlane.xlu0 %3329
          %v3331 = vmax.f32 %v2940, %v2941
          %3332 = vmax.xlane.f32.xlu0 %v3331
          %v3333 = vpop.xlane.xlu0 %3332
          %v3334 = vmax.f32 %v2942, %v2943
          %3335 = vmax.xlane.f32.xlu0 %v3334
          %v3336 = vpop.xlane.xlu0 %3335
          %v3337 = vmax.f32 %v2944, %v2945
          %3338 = vmax.xlane.f32.xlu0 %v3337
          %v3339 = vpop.xlane.xlu0 %3338
          %v3340 = vmax.f32 %v2946, %v2947
          %3341 = vmax.xlane.f32.xlu0 %v3340
          %v3342 = vpop.xlane.xlu0 %3341
          %v3343 = vmax.f32 %v2948, %v2949
          %3344 = vmax.xlane.f32.xlu0 %v3343
          %v3345 = vpop.xlane.xlu0 %3344
          %v3346 = vmax.f32 %v2950, %v2951
          %3347 = vmax.xlane.f32.xlu0 %v3346
          %v3348 = vpop.xlane.xlu0 %3347
          %v3349 = vmax.f32 %v2952, %v2953
          %3350 = vmax.xlane.f32.xlu0 %v3349
          %v3351 = vpop.xlane.xlu0 %3350
          %v3352 = vmax.f32 %v2954, %v2955
          %3353 = vmax.xlane.f32.xlu0 %v3352
          %v3354 = vpop.xlane.xlu0 %3353
          %v3355 = vmax.f32 %v2956, %v2957
          %3356 = vmax.xlane.f32.xlu0 %v3355
          %v3357 = vpop.xlane.xlu0 %3356
          %v3358 = vmax.f32 %v2958, %v2959
          %3359 = vmax.xlane.f32.xlu0 %v3358
          %v3360 = vpop.xlane.xlu0 %3359
          %v3361 = vmax.f32 %v2960, %v2961
          %3362 = vmax.xlane.f32.xlu0 %v3361
          %v3363 = vpop.xlane.xlu0 %3362
          %v3364 = vmax.f32 %v2962, %v2963
          %3365 = vmax.xlane.f32.xlu0 %v3364
          %v3366 = vpop.xlane.xlu0 %3365
          %v3367 = vmax.f32 %v2964, %v2965
          %3368 = vmax.xlane.f32.xlu0 %v3367
          %v3369 = vpop.xlane.xlu0 %3368
          %v3370 = vmax.f32 %v2966, %v2967
          %3371 = vmax.xlane.f32.xlu0 %v3370
          %v3372 = vpop.xlane.xlu0 %3371
          %v3373 = vmax.f32 %v2968, %v2969
          %3374 = vmax.xlane.f32.xlu0 %v3373
          %v3375 = vpop.xlane.xlu0 %3374
          %v3376 = vmax.f32 %v2970, %v2971
          %3377 = vmax.xlane.f32.xlu0 %v3376
          %v3378 = vpop.xlane.xlu0 %3377
          %v3379 = vmax.f32 %v2972, %v2973
          %3380 = vmax.xlane.f32.xlu0 %v3379
          %v3381 = vpop.xlane.xlu0 %3380
          %v3382 = vmax.f32 %v2974, %v2975
          %3383 = vmax.xlane.f32.xlu0 %v3382
          %v3384 = vpop.xlane.xlu0 %3383
          %v3385 = vmax.f32 %v2976, %v2977
          %3386 = vmax.xlane.f32.xlu0 %v3385
          %v3387 = vpop.xlane.xlu0 %3386
          %v3388 = vmax.f32 %v2978, %v2979
          %3389 = vmax.xlane.f32.xlu0 %v3388
          %v3390 = vpop.xlane.xlu0 %3389
          %v3391 = vmax.f32 %v2980, %v2981
          %3392 = vmax.xlane.f32.xlu0 %v3391
          %v3393 = vpop.xlane.xlu0 %3392
          %v3394 = vmax.f32 %v2982, %v2983
          %3395 = vmax.xlane.f32.xlu0 %v3394
          %v3396 = vpop.xlane.xlu0 %3395
          %v3397 = vmax.f32 %v2984, %v2985
          %3398 = vmax.xlane.f32.xlu0 %v3397
          %v3399 = vpop.xlane.xlu0 %3398
          %v3400 = vmax.f32 %v2986, %v2987
          %3401 = vmax.xlane.f32.xlu0 %v3400
          %v3402 = vpop.xlane.xlu0 %3401
          %v3403 = vmax.f32 %v2988, %v2989
          %3404 = vmax.xlane.f32.xlu0 %v3403
          %v3405 = vpop.xlane.xlu0 %3404
          %v3406 = vmax.f32 %v2990, %v2991
          %3407 = vmax.xlane.f32.xlu0 %v3406
          %v3408 = vpop.xlane.xlu0 %3407
          %v3409 = vmax.f32 %v2992, %v2993
          %3410 = vmax.xlane.f32.xlu0 %v3409
          %v3411 = vpop.xlane.xlu0 %3410
          %v3412 = vmax.f32 %v2994, %v2995
          %3413 = vmax.xlane.f32.xlu0 %v3412
          %v3414 = vpop.xlane.xlu0 %3413
          %v3415 = vmax.f32 %v2996, %v2997
          %3416 = vmax.xlane.f32.xlu0 %v3415
          %v3417 = vpop.xlane.xlu0 %3416
          %v3418 = vmax.f32 %v2998, %v2999
          %3419 = vmax.xlane.f32.xlu0 %v3418
          %v3420 = vpop.xlane.xlu0 %3419
          %v3421 = vmax.f32 %v3000, %v3001
          %3422 = vmax.xlane.f32.xlu0 %v3421
          %v3423 = vpop.xlane.xlu0 %3422
          %v3424 = vmax.f32 %v3002, %v3003
          %3425 = vmax.xlane.f32.xlu0 %v3424
          %v3426 = vpop.xlane.xlu0 %3425
          %v3427 = vmax.f32 %v3004, %v3005
          %3428 = vmax.xlane.f32.xlu0 %v3427
          %v3429 = vpop.xlane.xlu0 %3428
          %v3430 = vmax.f32 %v3006, %v3007
          %3431 = vmax.xlane.f32.xlu0 %v3430
          %v3432 = vpop.xlane.xlu0 %3431
          %v3433 = vmax.f32 %v3008, %v3009
          %3434 = vmax.xlane.f32.xlu0 %v3433
          %v3435 = vpop.xlane.xlu0 %3434
          %v3436 = vmax.f32 %v3010, %v3011
          %3437 = vmax.xlane.f32.xlu0 %v3436
          %v3438 = vpop.xlane.xlu0 %3437
          %v3439 = vmax.f32 %v3012, %v3013
          %3440 = vmax.xlane.f32.xlu0 %v3439
          %v3441 = vpop.xlane.xlu0 %3440
          %v3442 = vmax.f32 %v3014, %v3015
          %3443 = vmax.xlane.f32.xlu0 %v3442
          %v3444 = vpop.xlane.xlu0 %3443
          %v3445 = vmax.f32 %v3016, %v3017
          %3446 = vmax.xlane.f32.xlu0 %v3445
          %v3447 = vpop.xlane.xlu0 %3446
          %v3448 = vmax.f32 %v3018, %v3019
          %3449 = vmax.xlane.f32.xlu0 %v3448
          %v3450 = vpop.xlane.xlu0 %3449
          %v3451 = vmax.f32 %v3020, %v3021
          %3452 = vmax.xlane.f32.xlu0 %v3451
          %v3453 = vpop.xlane.xlu0 %3452
          %v3454 = vmax.f32 %v3022, %v3023
          %3455 = vmax.xlane.f32.xlu0 %v3454
          %v3456 = vpop.xlane.xlu0 %3455
          %v3457 = vmax.f32 %v3024, %v3025
          %3458 = vmax.xlane.f32.xlu0 %v3457
          %v3459 = vpop.xlane.xlu0 %3458
          %v3460 = vmax.f32 %v3026, %v3027
          %3461 = vmax.xlane.f32.xlu0 %v3460
          %v3462 = vpop.xlane.xlu0 %3461
          %v3463 = vmax.f32 %v3028, %v3029
          %3464 = vmax.xlane.f32.xlu0 %v3463
          %v3465 = vpop.xlane.xlu0 %3464
          %v3466 = vmax.f32 %v3030, %v3031
          %3467 = vmax.xlane.f32.xlu0 %v3466
          %v3468 = vpop.xlane.xlu0 %3467
          %v3469 = vmax.f32 %v3032, %v3033
          %3470 = vmax.xlane.f32.xlu0 %v3469
          %v3471 = vpop.xlane.xlu0 %3470
          %v3472 = vmax.f32 %v3034, %v3035
          %3473 = vmax.xlane.f32.xlu0 %v3472
          %v3474 = vpop.xlane.xlu0 %3473
          %v3475 = vmax.f32 %v3036, %v3037
          %3476 = vmax.xlane.f32.xlu0 %v3475
          %v3477 = vpop.xlane.xlu0 %3476
          %v3478 = vmax.f32 %v3038, %v3039
          %3479 = vmax.xlane.f32.xlu0 %v3478
          %v3480 = vpop.xlane.xlu0 %3479
          %v3481 = vmax.f32 %v3040, %v3041
          %3482 = vmax.xlane.f32.xlu0 %v3481
          %v3483 = vpop.xlane.xlu0 %3482
          %v3484 = vmax.f32 %v3042, %v3043
          %3485 = vmax.xlane.f32.xlu0 %v3484
          %v3486 = vpop.xlane.xlu0 %3485
          %v3487 = vmax.f32 %v3044, %v3045
          %3488 = vmax.xlane.f32.xlu0 %v3487
          %v3489 = vpop.xlane.xlu0 %3488
          %v3490 = vmax.f32 %v3046, %v3047
          %3491 = vmax.xlane.f32.xlu0 %v3490
          %v3492 = vpop.xlane.xlu0 %3491
          %v3493 = vmax.f32 %v3048, %v3049
          %3494 = vmax.xlane.f32.xlu0 %v3493
          %v3495 = vpop.xlane.xlu0 %3494
          %v3496 = vmax.f32 %v3050, %v3051
          %3497 = vmax.xlane.f32.xlu0 %v3496
          %v3498 = vpop.xlane.xlu0 %3497
          %v3499 = vmax.f32 %v3052, %v3053
          %3500 = vmax.xlane.f32.xlu0 %v3499
          %v3501 = vpop.xlane.xlu0 %3500
          %v3502 = vmax.f32 %v3054, %v3055
          %3503 = vmax.xlane.f32.xlu0 %v3502
          %v3504 = vpop.xlane.xlu0 %3503
          %v3505 = vmax.f32 %v3056, %v3057
          %3506 = vmax.xlane.f32.xlu0 %v3505
          %v3507 = vpop.xlane.xlu0 %3506
          %v3508 = vmax.f32 %v3058, %v3059
          %3509 = vmax.xlane.f32.xlu0 %v3508
          %v3510 = vpop.xlane.xlu0 %3509
          %v3511 = vmax.f32 %v3060, %v3061
          %3512 = vmax.xlane.f32.xlu0 %v3511
          %v3513 = vpop.xlane.xlu0 %3512
          %v3514 = vmax.f32 %v3062, %v3063
          %3515 = vmax.xlane.f32.xlu0 %v3514
          %v3516 = vpop.xlane.xlu0 %3515
          %v3517 = vmax.f32 %v3064, %v3065
          %3518 = vmax.xlane.f32.xlu0 %v3517
          %v3519 = vpop.xlane.xlu0 %3518
          %v3520 = vmax.f32 %v3066, %v3067
          %3521 = vmax.xlane.f32.xlu0 %v3520
          %v3522 = vpop.xlane.xlu0 %3521
          %v3523 = vmax.f32 %v3068, %v3069
          %3524 = vmax.xlane.f32.xlu0 %v3523
          %v3525 = vpop.xlane.xlu0 %3524
          %v3526 = vmax.f32 %v3070, %v3071
          %3527 = vmax.xlane.f32.xlu0 %v3526
          %v3528 = vpop.xlane.xlu0 %3527
          %v3529 = vmax.f32 %v3072, %v3073
          %3530 = vmax.xlane.f32.xlu0 %v3529
          %v3531 = vpop.xlane.xlu0 %3530
          %v3532 = vmax.f32 %v3074, %v3075
          %3533 = vmax.xlane.f32.xlu0 %v3532
          %v3534 = vpop.xlane.xlu0 %3533
          %v3535 = vmax.f32 %v3076, %v3077
          %3536 = vmax.xlane.f32.xlu0 %v3535
          %v3537 = vpop.xlane.xlu0 %3536
          %v3538 = vmax.f32 %v3078, %v3079
          %3539 = vmax.xlane.f32.xlu0 %v3538
          %v3540 = vpop.xlane.xlu0 %3539
          %v3541 = vmax.f32 %v3080, %v3081
          %3542 = vmax.xlane.f32.xlu0 %v3541
          %v3543 = vpop.xlane.xlu0 %3542
          %v3544 = vmax.f32 %v3082, %v3083
          %3545 = vmax.xlane.f32.xlu0 %v3544
          %v3546 = vpop.xlane.xlu0 %3545
          %v3547 = vmax.f32 %v3084, %v3085
          %3548 = vmax.xlane.f32.xlu0 %v3547
          %v3549 = vpop.xlane.xlu0 %3548
          %v3550 = vmax.f32 %v3086, %v3087
          %3551 = vmax.xlane.f32.xlu0 %v3550
          %v3552 = vpop.xlane.xlu0 %3551
          %v3553 = vmax.f32 %v3088, %v3089
          %3554 = vmax.xlane.f32.xlu0 %v3553
          %v3555 = vpop.xlane.xlu0 %3554
          %v3556 = vmax.f32 %v3090, %v3091
          %3557 = vmax.xlane.f32.xlu0 %v3556
          %v3558 = vpop.xlane.xlu0 %3557
          %v3559 = vmax.f32 %v3092, %v3093
          %3560 = vmax.xlane.f32.xlu0 %v3559
          %v3561 = vpop.xlane.xlu0 %3560
          %v3562 = vmax.f32 %v3094, %v3095
          %3563 = vmax.xlane.f32.xlu0 %v3562
          %v3564 = vpop.xlane.xlu0 %3563
          %v3565 = vmax.f32 %v3096, %v3097
          %3566 = vmax.xlane.f32.xlu0 %v3565
          %v3567 = vpop.xlane.xlu0 %3566
          %v3568 = vmax.f32 %v3098, %v3099
          %3569 = vmax.xlane.f32.xlu0 %v3568
          %v3570 = vpop.xlane.xlu0 %3569
          %v3571 = vmax.f32 %v3100, %v3101
          %3572 = vmax.xlane.f32.xlu0 %v3571
          %v3573 = vpop.xlane.xlu0 %3572
          %v3574 = vmax.f32 %v3102, %v3103
          %3575 = vmax.xlane.f32.xlu0 %v3574
          %v3576 = vpop.xlane.xlu0 %3575
          %v3577 = vmax.f32 %v3104, %v3105
          %3578 = vmax.xlane.f32.xlu0 %v3577
          %v3579 = vpop.xlane.xlu0 %3578
          %v3580 = vmax.f32 %v3106, %v3107
          %3581 = vmax.xlane.f32.xlu0 %v3580
          %v3582 = vpop.xlane.xlu0 %3581
          %v3583 = vmax.f32 %v3108, %v3109
          %3584 = vmax.xlane.f32.xlu0 %v3583
          %v3585 = vpop.xlane.xlu0 %3584
          %v3586 = vmax.f32 %v3110, %v3111
          %3587 = vmax.xlane.f32.xlu0 %v3586
          %v3588 = vpop.xlane.xlu0 %3587
          %v3589 = vmax.f32 %v3112, %v3113
          %3590 = vmax.xlane.f32.xlu0 %v3589
          %v3591 = vpop.xlane.xlu0 %3590
          %v3592 = vmax.f32 %v3114, %v3115
          %3593 = vmax.xlane.f32.xlu0 %v3592
          %v3594 = vpop.xlane.xlu0 %3593
          %v3595 = vmax.f32 %v3116, %v3117
          %3596 = vmax.xlane.f32.xlu0 %v3595
          %v3597 = vpop.xlane.xlu0 %3596
          %v3598 = vmax.f32 %v3118, %v3119
          %3599 = vmax.xlane.f32.xlu0 %v3598
          %v3600 = vpop.xlane.xlu0 %3599
          %v3601 = vmax.f32 %v3120, %v3121
          %3602 = vmax.xlane.f32.xlu0 %v3601
          %v3603 = vpop.xlane.xlu0 %3602
          %v3604 = vmax.f32 %v3122, %v3123
          %3605 = vmax.xlane.f32.xlu0 %v3604
          %v3606 = vpop.xlane.xlu0 %3605
          %v3607 = vmax.f32 %v3124, %v3125
          %3608 = vmax.xlane.f32.xlu0 %v3607
          %v3609 = vpop.xlane.xlu0 %3608
          %v3610 = vmax.f32 %v3126, %v3127
          %3611 = vmax.xlane.f32.xlu0 %v3610
          %v3612 = vpop.xlane.xlu0 %3611
          %v3613 = vmax.f32 %v3128, %v3129
          %3614 = vmax.xlane.f32.xlu0 %v3613
          %v3615 = vpop.xlane.xlu0 %3614
          %v3616 = vmax.f32 %v3130, %v3131
          %3617 = vmax.xlane.f32.xlu0 %v3616
          %v3618 = vpop.xlane.xlu0 %3617
          %v3619 = vmax.f32 %v3132, %v3133
          %3620 = vmax.xlane.f32.xlu0 %v3619
          %v3621 = vpop.xlane.xlu0 %3620
          %v3622 = vmax.f32 %v3134, %v3135
          %3623 = vmax.xlane.f32.xlu0 %v3622
          %v3624 = vpop.xlane.xlu0 %3623
          %v3625 = vmax.f32 %v3136, %v3137
          %3626 = vmax.xlane.f32.xlu0 %v3625
          %v3627 = vpop.xlane.xlu0 %3626
          %v3628 = vmax.f32 %v3138, %v3139
          %3629 = vmax.xlane.f32.xlu0 %v3628
          %v3630 = vpop.xlane.xlu0 %3629
          %v3631 = vmax.f32 %v3140, %v3141
          %3632 = vmax.xlane.f32.xlu0 %v3631
          %v3633 = vpop.xlane.xlu0 %3632
          %v3634 = vmax.f32 %v3142, %v3143
          %3635 = vmax.xlane.f32.xlu0 %v3634
          %v3636 = vpop.xlane.xlu0 %3635
          %v3637 = vmax.f32 %v3144, %v3145
          %3638 = vmax.xlane.f32.xlu0 %v3637
          %v3639 = vpop.xlane.xlu0 %3638
          %v3640 = vmax.f32 %v3146, %v3147
          %3641 = vmax.xlane.f32.xlu0 %v3640
          %v3642 = vpop.xlane.xlu0 %3641
          %v3643 = vmax.f32 %v3148, %v3149
          %3644 = vmax.xlane.f32.xlu0 %v3643
          %v3645 = vpop.xlane.xlu0 %3644
          %v3646 = vmax.f32 %v3150, %v3151
          %3647 = vmax.xlane.f32.xlu0 %v3646
          %v3648 = vpop.xlane.xlu0 %3647
          %v3649 = vmax.f32 %v3152, %v3153
          %3650 = vmax.xlane.f32.xlu0 %v3649
          %v3651 = vpop.xlane.xlu0 %3650
          %v3652 = vmax.f32 %v3154, %v3155
          %3653 = vmax.xlane.f32.xlu0 %v3652
          %v3654 = vpop.xlane.xlu0 %3653
          %v3655 = vmax.f32 %v3156, %v3157
          %3656 = vmax.xlane.f32.xlu0 %v3655
          %v3657 = vpop.xlane.xlu0 %3656
          %v3658 = vmax.f32 %v3158, %v3159
          %3659 = vmax.xlane.f32.xlu0 %v3658
          %v3660 = vpop.xlane.xlu0 %3659
          %v3661 = vmax.f32 %v3160, %v3161
          %3662 = vmax.xlane.f32.xlu0 %v3661
          %v3663 = vpop.xlane.xlu0 %3662
          %v3664 = vmax.f32 %v3162, %v3163
          %3665 = vmax.xlane.f32.xlu0 %v3664
          %v3666 = vpop.xlane.xlu0 %3665
          %v3667 = vmax.f32 %v3164, %v3165
          %3668 = vmax.xlane.f32.xlu0 %v3667
          %v3669 = vpop.xlane.xlu0 %3668
          %v3670 = vmax.f32 %v3166, %v3167
          %3671 = vmax.xlane.f32.xlu0 %v3670
          %v3672 = vpop.xlane.xlu0 %3671
          %v3673 = vmax.f32 %v3168, %v3169
          %3674 = vmax.xlane.f32.xlu0 %v3673
          %v3675 = vpop.xlane.xlu0 %3674
          %v3676 = vmax.f32 %v3170, %v3171
          %3677 = vmax.xlane.f32.xlu0 %v3676
          %v3678 = vpop.xlane.xlu0 %3677
          %v3679 = vmax.f32 %v3172, %v3173
          %3680 = vmax.xlane.f32.xlu0 %v3679
          %v3681 = vpop.xlane.xlu0 %3680
          %v3682 = vmax.f32 %v3174, %v3175
          %3683 = vmax.xlane.f32.xlu0 %v3682
          %v3684 = vpop.xlane.xlu0 %3683
          %v3685 = vmax.f32 %v3176, %v3177
          %3686 = vmax.xlane.f32.xlu0 %v3685
          %v3687 = vpop.xlane.xlu0 %3686
          %v3688 = vmax.f32 %v3178, %v3179
          %3689 = vmax.xlane.f32.xlu0 %v3688
          %v3690 = vpop.xlane.xlu0 %3689
          %v3691 = vmax.f32 %v3180, %v3181
          %3692 = vmax.xlane.f32.xlu0 %v3691
          %v3693 = vpop.xlane.xlu0 %3692
          %v3694 = vmax.f32 %v3182, %v3312
          %v3695 = vmax.f32 %v3183, %v3315
          %v3696 = vmax.f32 %v3184, %v3318
          %v3697 = vmax.f32 %v3185, %v3321
          %v3698 = vmax.f32 %v3186, %v3324
          %v3699 = vmax.f32 %v3187, %v3327
          %v3700 = vmax.f32 %v3188, %v3330
          %v3701 = vmax.f32 %v3189, %v3333
          %v3702 = vmax.f32 %v3190, %v3336
          %v3703 = vmax.f32 %v3191, %v3339
          %v3704 = vmax.f32 %v3192, %v3342
          %v3705 = vmax.f32 %v3193, %v3345
          %v3706 = vmax.f32 %v3194, %v3348
          %v3707 = vmax.f32 %v3195, %v3351
          %v3708 = vmax.f32 %v3196, %v3354
          %v3709 = vmax.f32 %v3197, %v3357
          %v3710 = vmax.f32 %v3198, %v3360
          %v3711 = vmax.f32 %v3199, %v3363
          %v3712 = vmax.f32 %v3200, %v3366
          %v3713 = vmax.f32 %v3201, %v3369
          %v3714 = vmax.f32 %v3202, %v3372
          %v3715 = vmax.f32 %v3203, %v3375
          %v3716 = vmax.f32 %v3204, %v3378
          %v3717 = vmax.f32 %v3205, %v3381
          %v3718 = vmax.f32 %v3206, %v3384
          %v3719 = vmax.f32 %v3207, %v3387
          %v3720 = vmax.f32 %v3208, %v3390
          %v3721 = vmax.f32 %v3209, %v3393
          %v3722 = vmax.f32 %v3210, %v3396
          %v3723 = vmax.f32 %v3211, %v3399
          %v3724 = vmax.f32 %v3212, %v3402
          %v3725 = vmax.f32 %v3213, %v3405
          %v3726 = vmax.f32 %v3214, %v3408
          %v3727 = vmax.f32 %v3215, %v3411
          %v3728 = vmax.f32 %v3216, %v3414
          %v3729 = vmax.f32 %v3217, %v3417
          %v3730 = vmax.f32 %v3218, %v3420
          %v3731 = vmax.f32 %v3219, %v3423
          %v3732 = vmax.f32 %v3220, %v3426
          %v3733 = vmax.f32 %v3221, %v3429
          %v3734 = vmax.f32 %v3222, %v3432
          %v3735 = vmax.f32 %v3223, %v3435
          %v3736 = vmax.f32 %v3224, %v3438
          %v3737 = vmax.f32 %v3225, %v3441
          %v3738 = vmax.f32 %v3226, %v3444
          %v3739 = vmax.f32 %v3227, %v3447
          %v3740 = vmax.f32 %v3228, %v3450
          %v3741 = vmax.f32 %v3229, %v3453
          %v3742 = vmax.f32 %v3230, %v3456
          %v3743 = vmax.f32 %v3231, %v3459
          %v3744 = vmax.f32 %v3232, %v3462
          %v3745 = vmax.f32 %v3233, %v3465
          %v3746 = vmax.f32 %v3234, %v3468
          %v3747 = vmax.f32 %v3235, %v3471
          %v3748 = vmax.f32 %v3236, %v3474
          %v3749 = vmax.f32 %v3237, %v3477
          %v3750 = vmax.f32 %v3238, %v3480
          %v3751 = vmax.f32 %v3239, %v3483
          %v3752 = vmax.f32 %v3240, %v3486
          %v3753 = vmax.f32 %v3241, %v3489
          %v3754 = vmax.f32 %v3242, %v3492
          %v3755 = vmax.f32 %v3243, %v3495
          %v3756 = vmax.f32 %v3244, %v3498
          %v3757 = vmax.f32 %v3245, %v3501
          %v3758 = vmax.f32 %v3246, %v3504
          %v3759 = vmax.f32 %v3247, %v3507
          %v3760 = vmax.f32 %v3248, %v3510
          %v3761 = vmax.f32 %v3249, %v3513
          %v3762 = vmax.f32 %v3250, %v3516
          %v3763 = vmax.f32 %v3251, %v3519
          %v3764 = vmax.f32 %v3252, %v3522
          %v3765 = vmax.f32 %v3253, %v3525
          %v3766 = vmax.f32 %v3254, %v3528
          %v3767 = vmax.f32 %v3255, %v3531
          %v3768 = vmax.f32 %v3256, %v3534
          %v3769 = vmax.f32 %v3257, %v3537
          %v3770 = vmax.f32 %v3258, %v3540
          %v3771 = vmax.f32 %v3259, %v3543
          %v3772 = vmax.f32 %v3260, %v3546
          %v3773 = vmax.f32 %v3261, %v3549
          %v3774 = vmax.f32 %v3262, %v3552
          %v3775 = vmax.f32 %v3263, %v3555
          %v3776 = vmax.f32 %v3264, %v3558
          %v3777 = vmax.f32 %v3265, %v3561
          %v3778 = vmax.f32 %v3266, %v3564
          %v3779 = vmax.f32 %v3267, %v3567
          %v3780 = vmax.f32 %v3268, %v3570
          %v3781 = vmax.f32 %v3269, %v3573
          %v3782 = vmax.f32 %v3270, %v3576
          %v3783 = vmax.f32 %v3271, %v3579
          %v3784 = vmax.f32 %v3272, %v3582
          %v3785 = vmax.f32 %v3273, %v3585
          %v3786 = vmax.f32 %v3274, %v3588
          %v3787 = vmax.f32 %v3275, %v3591
          %v3788 = vmax.f32 %v3276, %v3594
          %v3789 = vmax.f32 %v3277, %v3597
          %v3790 = vmax.f32 %v3278, %v3600
          %v3791 = vmax.f32 %v3279, %v3603
          %v3792 = vmax.f32 %v3280, %v3606
          %v3793 = vmax.f32 %v3281, %v3609
          %v3794 = vmax.f32 %v3282, %v3612
          %v3795 = vmax.f32 %v3283, %v3615
          %v3796 = vmax.f32 %v3284, %v3618
          %v3797 = vmax.f32 %v3285, %v3621
          %v3798 = vmax.f32 %v3286, %v3624
          %v3799 = vmax.f32 %v3287, %v3627
          %v3800 = vmax.f32 %v3288, %v3630
          %v3801 = vmax.f32 %v3289, %v3633
          %v3802 = vmax.f32 %v3290, %v3636
          %v3803 = vmax.f32 %v3291, %v3639
          %v3804 = vmax.f32 %v3292, %v3642
          %v3805 = vmax.f32 %v3293, %v3645
          %v3806 = vmax.f32 %v3294, %v3648
          %v3807 = vmax.f32 %v3295, %v3651
          %v3808 = vmax.f32 %v3296, %v3654
          %v3809 = vmax.f32 %v3297, %v3657
          %v3810 = vmax.f32 %v3298, %v3660
          %v3811 = vmax.f32 %v3299, %v3663
          %v3812 = vmax.f32 %v3300, %v3666
          %v3813 = vmax.f32 %v3301, %v3669
          %v3814 = vmax.f32 %v3302, %v3672
          %v3815 = vmax.f32 %v3303, %v3675
          %v3816 = vmax.f32 %v3304, %v3678
          %v3817 = vmax.f32 %v3305, %v3681
          %v3818 = vmax.f32 %v3306, %v3684
          %v3819 = vmax.f32 %v3307, %v3687
          %v3820 = vmax.f32 %v3308, %v3690
          %v3821 = vmax.f32 %v3309, %v3693
          %vm3822 = vcmask 7168
          %3823 = vst.msk [vmem:[%s325] sm:$0xff] %vm3822, %v3694
          %3824 = vst.msk [vmem:[%s325 + $0x8] sm:$0xff] %vm3822, %v3695
          %3825 = vst.msk [vmem:[%s325 + $0x10] sm:$0xff] %vm3822, %v3696
          %3826 = vst.msk [vmem:[%s325 + $0x18] sm:$0xff] %vm3822, %v3697
          %3827 = vst.msk [vmem:[%s325 + $0x20] sm:$0xff] %vm3822, %v3698
          %3828 = vst.msk [vmem:[%s325 + $0x28] sm:$0xff] %vm3822, %v3699
          %3829 = vst.msk [vmem:[%s325 + $0x30] sm:$0xff] %vm3822, %v3700
          %3830 = vst.msk [vmem:[%s325 + $0x38] sm:$0xff] %vm3822, %v3701
          %3831 = vst.msk [vmem:[%s325 + $0x40] sm:$0xff] %vm3822, %v3702
          %3832 = vst.msk [vmem:[%s325 + $0x48] sm:$0xff] %vm3822, %v3703
          %3833 = vst.msk [vmem:[%s325 + $0x50] sm:$0xff] %vm3822, %v3704
          %3834 = vst.msk [vmem:[%s325 + $0x58] sm:$0xff] %vm3822, %v3705
          %3835 = vst.msk [vmem:[%s325 + $0x60] sm:$0xff] %vm3822, %v3706
          %3836 = vst.msk [vmem:[%s325 + $0x68] sm:$0xff] %vm3822, %v3707
          %3837 = vst.msk [vmem:[%s325 + $0x70] sm:$0xff] %vm3822, %v3708
          %3838 = vst.msk [vmem:[%s325 + $0x78] sm:$0xff] %vm3822, %v3709
          %3839 = vst.msk [vmem:[%s325 + $0x80] sm:$0xff] %vm3822, %v3710
          %3840 = vst.msk [vmem:[%s325 + $0x88] sm:$0xff] %vm3822, %v3711
          %3841 = vst.msk [vmem:[%s325 + $0x90] sm:$0xff] %vm3822, %v3712
          %3842 = vst.msk [vmem:[%s325 + $0x98] sm:$0xff] %vm3822, %v3713
          %3843 = vst.msk [vmem:[%s325 + $0xa0] sm:$0xff] %vm3822, %v3714
          %3844 = vst.msk [vmem:[%s325 + $0xa8] sm:$0xff] %vm3822, %v3715
          %3845 = vst.msk [vmem:[%s325 + $0xb0] sm:$0xff] %vm3822, %v3716
          %3846 = vst.msk [vmem:[%s325 + $0xb8] sm:$0xff] %vm3822, %v3717
          %3847 = vst.msk [vmem:[%s325 + $0xc0] sm:$0xff] %vm3822, %v3718
          %3848 = vst.msk [vmem:[%s325 + $0xc8] sm:$0xff] %vm3822, %v3719
          %3849 = vst.msk [vmem:[%s325 + $0xd0] sm:$0xff] %vm3822, %v3720
          %3850 = vst.msk [vmem:[%s325 + $0xd8] sm:$0xff] %vm3822, %v3721
          %3851 = vst.msk [vmem:[%s325 + $0xe0] sm:$0xff] %vm3822, %v3722
          %3852 = vst.msk [vmem:[%s325 + $0xe8] sm:$0xff] %vm3822, %v3723
          %3853 = vst.msk [vmem:[%s325 + $0xf0] sm:$0xff] %vm3822, %v3724
          %3854 = vst.msk [vmem:[%s325 + $0xf8] sm:$0xff] %vm3822, %v3725
          %3855 = vst.msk [vmem:[%s325 + $0x100] sm:$0xff] %vm3822, %v3726
          %3856 = vst.msk [vmem:[%s325 + $0x108] sm:$0xff] %vm3822, %v3727
          %3857 = vst.msk [vmem:[%s325 + $0x110] sm:$0xff] %vm3822, %v3728
          %3858 = vst.msk [vmem:[%s325 + $0x118] sm:$0xff] %vm3822, %v3729
          %3859 = vst.msk [vmem:[%s325 + $0x120] sm:$0xff] %vm3822, %v3730
          %3860 = vst.msk [vmem:[%s325 + $0x128] sm:$0xff] %vm3822, %v3731
          %3861 = vst.msk [vmem:[%s325 + $0x130] sm:$0xff] %vm3822, %v3732
          %3862 = vst.msk [vmem:[%s325 + $0x138] sm:$0xff] %vm3822, %v3733
          %3863 = vst.msk [vmem:[%s325 + $0x140] sm:$0xff] %vm3822, %v3734
          %3864 = vst.msk [vmem:[%s325 + $0x148] sm:$0xff] %vm3822, %v3735
          %3865 = vst.msk [vmem:[%s325 + $0x150] sm:$0xff] %vm3822, %v3736
          %3866 = vst.msk [vmem:[%s325 + $0x158] sm:$0xff] %vm3822, %v3737
          %3867 = vst.msk [vmem:[%s325 + $0x160] sm:$0xff] %vm3822, %v3738
          %3868 = vst.msk [vmem:[%s325 + $0x168] sm:$0xff] %vm3822, %v3739
          %3869 = vst.msk [vmem:[%s325 + $0x170] sm:$0xff] %vm3822, %v3740
          %3870 = vst.msk [vmem:[%s325 + $0x178] sm:$0xff] %vm3822, %v3741
          %3871 = vst.msk [vmem:[%s325 + $0x180] sm:$0xff] %vm3822, %v3742
          %3872 = vst.msk [vmem:[%s325 + $0x188] sm:$0xff] %vm3822, %v3743
          %3873 = vst.msk [vmem:[%s325 + $0x190] sm:$0xff] %vm3822, %v3744
          %3874 = vst.msk [vmem:[%s325 + $0x198] sm:$0xff] %vm3822, %v3745
          %3875 = vst.msk [vmem:[%s325 + $0x1a0] sm:$0xff] %vm3822, %v3746
          %3876 = vst.msk [vmem:[%s325 + $0x1a8] sm:$0xff] %vm3822, %v3747
          %3877 = vst.msk [vmem:[%s325 + $0x1b0] sm:$0xff] %vm3822, %v3748
          %3878 = vst.msk [vmem:[%s325 + $0x1b8] sm:$0xff] %vm3822, %v3749
          %3879 = vst.msk [vmem:[%s325 + $0x1c0] sm:$0xff] %vm3822, %v3750
          %3880 = vst.msk [vmem:[%s325 + $0x1c8] sm:$0xff] %vm3822, %v3751
          %3881 = vst.msk [vmem:[%s325 + $0x1d0] sm:$0xff] %vm3822, %v3752
          %3882 = vst.msk [vmem:[%s325 + $0x1d8] sm:$0xff] %vm3822, %v3753
          %3883 = vst.msk [vmem:[%s325 + $0x1e0] sm:$0xff] %vm3822, %v3754
          %3884 = vst.msk [vmem:[%s325 + $0x1e8] sm:$0xff] %vm3822, %v3755
          %3885 = vst.msk [vmem:[%s325 + $0x1f0] sm:$0xff] %vm3822, %v3756
          %3886 = vst.msk [vmem:[%s325 + $0x1f8] sm:$0xff] %vm3822, %v3757
          %3887 = vst.msk [vmem:[%s325 + $0x200] sm:$0xff] %vm3822, %v3758
          %3888 = vst.msk [vmem:[%s325 + $0x208] sm:$0xff] %vm3822, %v3759
          %3889 = vst.msk [vmem:[%s325 + $0x210] sm:$0xff] %vm3822, %v3760
          %3890 = vst.msk [vmem:[%s325 + $0x218] sm:$0xff] %vm3822, %v3761
          %3891 = vst.msk [vmem:[%s325 + $0x220] sm:$0xff] %vm3822, %v3762
          %3892 = vst.msk [vmem:[%s325 + $0x228] sm:$0xff] %vm3822, %v3763
          %3893 = vst.msk [vmem:[%s325 + $0x230] sm:$0xff] %vm3822, %v3764
          %3894 = vst.msk [vmem:[%s325 + $0x238] sm:$0xff] %vm3822, %v3765
          %3895 = vst.msk [vmem:[%s325 + $0x240] sm:$0xff] %vm3822, %v3766
          %3896 = vst.msk [vmem:[%s325 + $0x248] sm:$0xff] %vm3822, %v3767
          %3897 = vst.msk [vmem:[%s325 + $0x250] sm:$0xff] %vm3822, %v3768
          %3898 = vst.msk [vmem:[%s325 + $0x258] sm:$0xff] %vm3822, %v3769
          %3899 = vst.msk [vmem:[%s325 + $0x260] sm:$0xff] %vm3822, %v3770
          %3900 = vst.msk [vmem:[%s325 + $0x268] sm:$0xff] %vm3822, %v3771
          %3901 = vst.msk [vmem:[%s325 + $0x270] sm:$0xff] %vm3822, %v3772
          %3902 = vst.msk [vmem:[%s325 + $0x278] sm:$0xff] %vm3822, %v3773
          %3903 = vst.msk [vmem:[%s325 + $0x280] sm:$0xff] %vm3822, %v3774
          %3904 = vst.msk [vmem:[%s325 + $0x288] sm:$0xff] %vm3822, %v3775
          %3905 = vst.msk [vmem:[%s325 + $0x290] sm:$0xff] %vm3822, %v3776
          %3906 = vst.msk [vmem:[%s325 + $0x298] sm:$0xff] %vm3822, %v3777
          %3907 = vst.msk [vmem:[%s325 + $0x2a0] sm:$0xff] %vm3822, %v3778
          %3908 = vst.msk [vmem:[%s325 + $0x2a8] sm:$0xff] %vm3822, %v3779
          %3909 = vst.msk [vmem:[%s325 + $0x2b0] sm:$0xff] %vm3822, %v3780
          %3910 = vst.msk [vmem:[%s325 + $0x2b8] sm:$0xff] %vm3822, %v3781
          %3911 = vst.msk [vmem:[%s325 + $0x2c0] sm:$0xff] %vm3822, %v3782
          %3912 = vst.msk [vmem:[%s325 + $0x2c8] sm:$0xff] %vm3822, %v3783
          %3913 = vst.msk [vmem:[%s325 + $0x2d0] sm:$0xff] %vm3822, %v3784
          %3914 = vst.msk [vmem:[%s325 + $0x2d8] sm:$0xff] %vm3822, %v3785
          %3915 = vst.msk [vmem:[%s325 + $0x2e0] sm:$0xff] %vm3822, %v3786
          %3916 = vst.msk [vmem:[%s325 + $0x2e8] sm:$0xff] %vm3822, %v3787
          %3917 = vst.msk [vmem:[%s325 + $0x2f0] sm:$0xff] %vm3822, %v3788
          %3918 = vst.msk [vmem:[%s325 + $0x2f8] sm:$0xff] %vm3822, %v3789
          %3919 = vst.msk [vmem:[%s325 + $0x300] sm:$0xff] %vm3822, %v3790
          %3920 = vst.msk [vmem:[%s325 + $0x308] sm:$0xff] %vm3822, %v3791
          %3921 = vst.msk [vmem:[%s325 + $0x310] sm:$0xff] %vm3822, %v3792
          %3922 = vst.msk [vmem:[%s325 + $0x318] sm:$0xff] %vm3822, %v3793
          %3923 = vst.msk [vmem:[%s325 + $0x320] sm:$0xff] %vm3822, %v3794
          %3924 = vst.msk [vmem:[%s325 + $0x328] sm:$0xff] %vm3822, %v3795
          %3925 = vst.msk [vmem:[%s325 + $0x330] sm:$0xff] %vm3822, %v3796
          %3926 = vst.msk [vmem:[%s325 + $0x338] sm:$0xff] %vm3822, %v3797
          %3927 = vst.msk [vmem:[%s325 + $0x340] sm:$0xff] %vm3822, %v3798
          %3928 = vst.msk [vmem:[%s325 + $0x348] sm:$0xff] %vm3822, %v3799
          %3929 = vst.msk [vmem:[%s325 + $0x350] sm:$0xff] %vm3822, %v3800
          %3930 = vst.msk [vmem:[%s325 + $0x358] sm:$0xff] %vm3822, %v3801
          %3931 = vst.msk [vmem:[%s325 + $0x360] sm:$0xff] %vm3822, %v3802
          %3932 = vst.msk [vmem:[%s325 + $0x368] sm:$0xff] %vm3822, %v3803
          %3933 = vst.msk [vmem:[%s325 + $0x370] sm:$0xff] %vm3822, %v3804
          %3934 = vst.msk [vmem:[%s325 + $0x378] sm:$0xff] %vm3822, %v3805
          %3935 = vst.msk [vmem:[%s325 + $0x380] sm:$0xff] %vm3822, %v3806
          %3936 = vst.msk [vmem:[%s325 + $0x388] sm:$0xff] %vm3822, %v3807
          %3937 = vst.msk [vmem:[%s325 + $0x390] sm:$0xff] %vm3822, %v3808
          %3938 = vst.msk [vmem:[%s325 + $0x398] sm:$0xff] %vm3822, %v3809
          %3939 = vst.msk [vmem:[%s325 + $0x3a0] sm:$0xff] %vm3822, %v3810
          %3940 = vst.msk [vmem:[%s325 + $0x3a8] sm:$0xff] %vm3822, %v3811
          %3941 = vst.msk [vmem:[%s325 + $0x3b0] sm:$0xff] %vm3822, %v3812
          %3942 = vst.msk [vmem:[%s325 + $0x3b8] sm:$0xff] %vm3822, %v3813
          %3943 = vst.msk [vmem:[%s325 + $0x3c0] sm:$0xff] %vm3822, %v3814
          %3944 = vst.msk [vmem:[%s325 + $0x3c8] sm:$0xff] %vm3822, %v3815
          %3945 = vst.msk [vmem:[%s325 + $0x3d0] sm:$0xff] %vm3822, %v3816
          %3946 = vst.msk [vmem:[%s325 + $0x3d8] sm:$0xff] %vm3822, %v3817
          %3947 = vst.msk [vmem:[%s325 + $0x3e0] sm:$0xff] %vm3822, %v3818
          %3948 = vst.msk [vmem:[%s325 + $0x3e8] sm:$0xff] %vm3822, %v3819
          %3949 = vst.msk [vmem:[%s325 + $0x3f0] sm:$0xff] %vm3822, %v3820
          %3950 = vst.msk [vmem:[%s325 + $0x3f8] sm:$0xff] %vm3822, %v3821
        $region98: #{tpu_custom_call.1} parent=77 // pred_fallthru
          _
        %p3951 = scmp.lt.s32.totalorder %s22, 1
        %s3952 = scalar_select %p3951, %s22, 1
        %s3953 = smul.addr %s3952, 128
        %s3954 = smul.addr %s3953, 8
        %s3955 = scalar_lea.vmem %s6, %s3954
        // Predicated region
        $region99: #{tpu_custom_call.1} parent=77 // pred_check
          %p3956 = pneg %p181
        $region100: #{tpu_custom_call.1} parent=77 // pred_check_branch
          %3958 = sbr.rel (%p3956) target = $region102
        $region101: #{tpu_custom_call.1} parent=77 // pred_region
          _
        $region102: #{tpu_custom_call.1} parent=77 // pred_fallthru
          _
      $region78: #{tpu_custom_call.1} parent=5 // pred_fallthru
        _
      %p3959 = scmp.le.s32.totalorder 2, %s13
      // Predicated region
      $region103: #{tpu_custom_call.1} parent=5 // pred_check
        %p3960 = pneg %p3959
      $region104: #{tpu_custom_call.1} parent=5 // pred_check_branch
        %3962 = sbr.rel (%p3960) target = $region106
      $region105: #{tpu_custom_call.1} parent=5 // pred_region
        %s3963 = ssub.s32 %s13, 2
        // Predicated region
        $region107: #{tpu_custom_call.1} parent=105 // pred_check
          %p3964 = pneg %p187
        $region108: #{tpu_custom_call.1} parent=105 // pred_check_branch
          %3966 = sbr.rel (%p3964) target = $region110
        $region109: #{tpu_custom_call.1} parent=105 // pred_region
          %p3967 = scmp.lt.s32.totalorder %s24, 1
          %s3968 = scalar_select %p3967, %s24, 1
          %s3969 = smul.addr %s3968, 128
          %s3970 = smul.addr %s3969, 8
          %s3971 = scalar_lea.vmem %s6, %s3970
        $region110: #{tpu_custom_call.1} parent=105 // pred_fallthru
          _
      $region106: #{tpu_custom_call.1} parent=5 // pred_fallthru
        _
    $region6: #{tpu_custom_call.1} parent=1 // loop_footer
      %s17 = sadd.s32 1, %s13
    $region7: #{tpu_custom_call.1} parent=1 // loop_footer_branch
      %12 = sbr.rel target = $region3
    $region8: #{tpu_custom_call.1} parent=1 // loop_exit
      _
    %3972 = vsyncpa [#allocation4], 1
    %s3973 = scalar_lea.sflag [#allocation4], 1
    %3974 = vsyncpa %s3973, 1

</llo_original>
